<compile_context>
chip_gen: v5e
topology: v5e:2x2
jax: 0.10.0
libtpu: 0.0.40
codegen_flags: <defaults>
</compile_context>

<pallas_src>
import math
from functools import partial

import jax
import jax.numpy as jnp
from jax.experimental import pallas as pl
from jax.experimental.pallas import tpu as pltpu

# ---------------- scaled-down FinBERT config ----------------
VOCAB = 100
TYPE_VOCAB = 2
MAX_POS = 64
HIDDEN = 128          # (BERT-base would be 768)
N_LAYERS = 2          # (BERT-base would be 12)
N_HEADS = 2           # (BERT-base would be 12)
HEAD_DIM = HIDDEN // N_HEADS
INTERMEDIATE = 256    # (BERT-base would be 3072)
NUM_LABELS = 3
NL_PAD = 128          # lane-dense classifier width inside the kernel
LN_EPS = 1e-12


# ---------------- in-kernel helpers (traced jnp, f32 math) ----------------
def _layernorm(x, g, b):
    mu = jnp.mean(x, axis=-1, keepdims=True)
    var = jnp.mean(jnp.square(x - mu), axis=-1, keepdims=True)
    return (x - mu) * jax.lax.rsqrt(var + LN_EPS) * g + b


def _gelu(x):
    # TODO(synk): tanh-approx GELU (HF BERT uses exact erf GELU; synthetic weights).
    return 0.5 * x * (1.0 + jnp.tanh(0.7978845608028654 * (x + 0.044715 * x * x * x)))


def _mm(a_f32, w_bf16):
    # activations cast to bf16 at the MXU edge; weights are already stored bf16.
    return jnp.dot(a_f32.astype(jnp.bfloat16), w_bf16,
                   preferred_element_type=jnp.float32)


# ---------------- the fused encoder kernel ----------------
def _finbert_encoder_kernel(
        emb_ref, mask_ref, embg_ref, embb_ref,
        wqkv_ref, bqkv_ref, wo_ref, bo_ref, ln1g_ref, ln1b_ref,
        w1_ref, b1_ref, w2_ref, b2_ref, ln2g_ref, ln2b_ref,
        wc_ref, bc_ref,
        out_ref, x_scr,
        *, bt, seq, n_heads, head_dim):
    H = n_heads * head_dim
    l = pl.program_id(1)
    n_layers = pl.num_programs(1)

    # ---- prologue (layer 0 of this batch tile): embedding LayerNorm ----
    @pl.when(l == 0)
    def _():
        x_scr[...] = _layernorm(emb_ref[...], embg_ref[...], embb_ref[...])

    x = x_scr[...]                                     # (bt*seq, H) f32, VMEM-resident

    # ---- self-attention: fused QKV projection + per-head batched matmuls ----
    qkv = _mm(x, wqkv_ref[0]) + bqkv_ref[0]            # (bt*seq, 3H) f32
    q3 = qkv[:, :H].reshape(bt, seq, H)                # leading-dim split: free
    k3 = qkv[:, H:2 * H].reshape(bt, seq, H)
    v3 = qkv[:, 2 * H:].reshape(bt, seq, H)

    bias3 = ((1.0 - mask_ref[...]) * -1e9)[:, None, :]  # (bt, 1, seq) additive key mask
    scale = 1.0 / math.sqrt(head_dim)

    ctx_parts = []
    for h in range(n_heads):                           # static; each iter batched over bt
        sl = slice(h * head_dim, (h + 1) * head_dim)
        qh = q3[:, :, sl].astype(jnp.bfloat16)
        kh = k3[:, :, sl].astype(jnp.bfloat16)
        vh = v3[:, :, sl].astype(jnp.bfloat16)
        s = jnp.einsum('bqd,bkd->bqk', qh, kh,
                       preferred_element_type=jnp.float32) * scale + bias3
        mx = jnp.max(s, axis=-1, keepdims=True)
        p = jnp.exp(s - mx)
        p = p * pl.reciprocal(jnp.sum(p, axis=-1, keepdims=True), approx=True)
        ctx_parts.append(jnp.einsum('bqk,bkd->bqd', p.astype(jnp.bfloat16), vh,
                                    preferred_element_type=jnp.float32))
    ctx = jnp.concatenate(ctx_parts, axis=-1).reshape(bt * seq, H)   # (bt*seq, H)

    attn_out = _mm(ctx, wo_ref[0]) + bo_ref[0]
    x = _layernorm(attn_out + x, ln1g_ref[0], ln1b_ref[0])

    # ---- feed-forward ----
    h1 = _gelu(_mm(x, w1_ref[0]) + b1_ref[0])
    h2 = _mm(h1, w2_ref[0]) + b2_ref[0]
    x_new = _layernorm(h2 + x, ln2g_ref[0], ln2b_ref[0])

    # carry to next layer; skip the dead writeback on the last layer
    @pl.when(l < n_layers - 1)
    def _():
        x_scr[...] = x_new

    # ---- epilogue (last layer): masked mean pool + lane-dense classifier ----
    @pl.when(l == n_layers - 1)
    def _():
        m = mask_ref[...]                              # (bt, seq)
        x3 = x_new.reshape(bt, seq, H)
        summed = jnp.sum(x3 * m[:, :, None], axis=1)   # (bt, H) masked reduce
        mlen = jnp.maximum(jnp.sum(m, axis=-1, keepdims=True), 1.0)
        pooled = summed * pl.reciprocal(mlen, approx=True)
        out_ref[...] = (jnp.dot(pooled, wc_ref[...],
                                preferred_element_type=jnp.float32) + bc_ref[...])


def finbert_encoder(emb2d, mask_f, params, *, batch_tiles=1):
    """emb2d: (B*S, H) pre-LN embedding sum; mask_f: (B, S) float mask."""
    BtS, H = emb2d.shape
    B, S = mask_f.shape
    L = params["wqkv"].shape[0]
    I = params["w1"].shape[2]
    NL = params["wc"].shape[1]

    assert B % batch_tiles == 0
    bt = B // batch_tiles
    # keep (8,128) block rules: only split the batch when each tile still has
    # >= 8 mask/output rows (use batch_tiles=2 on v7x with B >= 16).
    assert batch_tiles == 1 or bt % 8 == 0, "batch_tiles>1 needs (B/batch_tiles) % 8 == 0"

    # lane-dense classifier: pad (H, NUM_LABELS) -> (H, 128), slice back outside.
    wc_p = jnp.pad(params["wc"], ((0, 0), (0, NL_PAD - NL)))
    bc_p = jnp.pad(params["bc"], ((0, 0), (0, NL_PAD - NL)))

    def full(shape):
        nd = len(shape)
        return pl.BlockSpec(shape, lambda b, l, _nd=nd: (0,) * _nd)

    def stacked(shape):
        nd = len(shape)
        return pl.BlockSpec((1,) + shape, lambda b, l, _nd=nd: (l,) + (0,) * _nd)

    def batched(block_shape):
        nd = len(block_shape)
        return pl.BlockSpec(block_shape, lambda b, l, _nd=nd: (b,) + (0,) * (_nd - 1))

    # ---- advisory cost estimate (bf16 weights accounted) ----
    M = BtS
    matmul_flops = L * (2 * M * H * 3 * H + 2 * M * H * H + 4 * M * H * I
                        + B * N_HEADS * 4 * S * S * HEAD_DIM)
    matmul_flops += 2 * B * S * H + 2 * B * H * NL_PAD
    transcendentals = L * (M * I + B * N_HEADS * S * S)
    stacked_keys = ("wqkv", "bqkv", "wo", "bo", "ln1_g", "ln1_b",
                    "w1", "b1", "w2", "b2", "ln2_g", "ln2_b")
    per_layer_bytes = sum(int(params[k].size // L) * params[k].dtype.itemsize
                          for k in stacked_keys)
    bytes_accessed = (emb2d.size * 4 + mask_f.size * 4 + 2 * H * 4
                      + batch_tiles * L * per_layer_bytes
                      + wc_p.size * 4 + bc_p.size * 4 + B * NL_PAD * 4)

    # ---- explicit VMEM budget: double-buffered weights + resident activations ----
    vmem_need = (2 * per_layer_bytes                    # per-layer weight set, 2 buffers
                 + 2 * (bt * S * H * 4)                 # embedding block, 2 buffers
                 + 2 * (H * NL_PAD * 4 + NL_PAD * 4)    # classifier
                 + bt * S * H * 4                       # activation scratch
                 + bt * S * 4 + bt * NL_PAD * 4)        # mask + output
    vmem_limit = int(min(max(4 << 20, 2 * vmem_need), 48 << 20))

    kernel = partial(_finbert_encoder_kernel, bt=bt, seq=S,
                     n_heads=N_HEADS, head_dim=HEAD_DIM)

    logits_pad = pl.pallas_call(
        kernel,
        out_shape=jax.ShapeDtypeStruct((B, NL_PAD), jnp.float32),
        grid=(batch_tiles, L),
        in_specs=[
            batched((bt * S, H)),                       # pre-LN embeddings
            batched((bt, S)),                           # attention mask
            full((1, H)), full((1, H)),                 # embedding LN gamma/beta
            stacked((H, 3 * H)), stacked((1, 3 * H)),   # fused qkv (bf16 weight)
            stacked((H, H)), stacked((1, H)),           # attn output proj (bf16 weight)
            stacked((1, H)), stacked((1, H)),           # LN1
            stacked((H, I)), stacked((1, I)),           # ffn up (bf16 weight)
            stacked((I, H)), stacked((1, H)),           # ffn down (bf16 weight)
            stacked((1, H)), stacked((1, H)),           # LN2
            full((H, NL_PAD)), full((1, NL_PAD)),       # classifier (lane-padded)
        ],
        out_specs=batched((bt, NL_PAD)),
        scratch_shapes=[pltpu.VMEM((bt * S, H), jnp.float32)],
        compiler_params=pltpu.CompilerParams(
            dimension_semantics=("parallel", "arbitrary"),
            vmem_limit_bytes=vmem_limit),
        cost_estimate=pl.CostEstimate(flops=int(matmul_flops),
                                      transcendentals=int(transcendentals),
                                      bytes_accessed=int(bytes_accessed)),
    )(emb2d, mask_f,
      params["emb_ln_g"], params["emb_ln_b"],
      params["wqkv"], params["bqkv"], params["wo"], params["bo"],
      params["ln1_g"], params["ln1_b"],
      params["w1"], params["b1"], params["w2"], params["b2"],
      params["ln2_g"], params["ln2_b"],
      wc_p, bc_p)

    return logits_pad[:, :NL]


# ---------------- parameter init (deterministic, synthetic, stacked) --------
def init_params(key):
    keys = iter(jax.random.split(key, 16))

    def dense(shape, dtype=jnp.float32):
        return (0.02 * jax.random.normal(next(keys), shape)).astype(dtype)

    L, H, I = N_LAYERS, HIDDEN, INTERMEDIATE
    bf16 = jnp.bfloat16
    return {
        "word_emb": dense((VOCAB, H)),
        "pos_emb": dense((MAX_POS, H)),
        "type_emb": dense((TYPE_VOCAB, H)),
        "emb_ln_g": jnp.ones((1, H), jnp.float32),
        "emb_ln_b": jnp.zeros((1, H), jnp.float32),
        # per-layer weights stacked on a leading layer axis (selected by the
        # layer grid index_map); matmul weights stored bf16, biases/LN in f32.
        "wqkv": dense((L, H, 3 * H), bf16), "bqkv": jnp.zeros((L, 1, 3 * H), jnp.float32),
        "wo": dense((L, H, H), bf16), "bo": jnp.zeros((L, 1, H), jnp.float32),
        "ln1_g": jnp.ones((L, 1, H), jnp.float32),
        "ln1_b": jnp.zeros((L, 1, H), jnp.float32),
        "w1": dense((L, H, I), bf16), "b1": jnp.zeros((L, 1, I), jnp.float32),
        "w2": dense((L, I, H), bf16), "b2": jnp.zeros((L, 1, H), jnp.float32),
        "ln2_g": jnp.ones((L, 1, H), jnp.float32),
        "ln2_b": jnp.zeros((L, 1, H), jnp.float32),
        "wc": dense((H, NUM_LABELS)),
        "bc": jnp.zeros((1, NUM_LABELS), jnp.float32),
    }


# ---------------- forward (mirrors FinBERT.forward) ----------------
def finbert_forward(params, input_ids, attention_mask, *, batch_tiles=1):
    B, S = input_ids.shape
    mask_f = attention_mask.astype(jnp.float32)

    # TODO(synk): token-id embedding gather (jnp table indexing) stays in plain JAX.
    emb = (params["word_emb"][input_ids]
           + params["pos_emb"][:S][None, :, :]
           + params["type_emb"][0][None, None, :])          # token_type_ids = 0
    emb2d = emb.reshape(B * S, HIDDEN).astype(jnp.float32)

    # one fused Pallas call: emb-LN -> N transformer layers -> pool -> fc
    return finbert_encoder(emb2d, mask_f, params, batch_tiles=batch_tiles)


# ---------------- main ----------------
if __name__ == "__main__":
    key = jax.random.PRNGKey(0)
    pkey, ikey = jax.random.split(key)
    params = init_params(pkey)

    B, S = 2, 64        # B*S = 128 rows: full MXU M-tile, 8-sublane aligned
    input_ids = jax.random.randint(ikey, (B, S), 0, VOCAB, dtype=jnp.int32)
    attention_mask = jnp.concatenate(
        [jnp.ones((1, S), jnp.int32),
         jnp.concatenate([jnp.ones((1, 40), jnp.int32),
                          jnp.zeros((1, S - 40), jnp.int32)], axis=1)],
        axis=0)

    logits = jax.jit(finbert_forward)(params, input_ids, attention_mask)
    logits = jax.block_until_ready(logits)
    assert logits.shape == (B, NUM_LABELS)
    assert bool(jnp.all(jnp.isfinite(logits)))
    print("KERNEL_OK")
</pallas_src>

<mosaic_0001>
module attributes {stable_mosaic.version = 11 : i64} {
  func.func @_finbert_encoder_kernel(%arg0: i32, %arg1: i32, %arg2: memref<128x128xf32, #tpu.memory_space<vmem>>, %arg3: memref<2x64xf32, #tpu.memory_space<vmem>>, %arg4: memref<1x128xf32, #tpu.memory_space<vmem>>, %arg5: memref<1x128xf32, #tpu.memory_space<vmem>>, %arg6: memref<1x128x384xbf16, #tpu.memory_space<vmem>>, %arg7: memref<1x1x384xf32, #tpu.memory_space<vmem>>, %arg8: memref<1x128x128xbf16, #tpu.memory_space<vmem>>, %arg9: memref<1x1x128xf32, #tpu.memory_space<vmem>>, %arg10: memref<1x1x128xf32, #tpu.memory_space<vmem>>, %arg11: memref<1x1x128xf32, #tpu.memory_space<vmem>>, %arg12: memref<1x128x256xbf16, #tpu.memory_space<vmem>>, %arg13: memref<1x1x256xf32, #tpu.memory_space<vmem>>, %arg14: memref<1x256x128xbf16, #tpu.memory_space<vmem>>, %arg15: memref<1x1x128xf32, #tpu.memory_space<vmem>>, %arg16: memref<1x1x128xf32, #tpu.memory_space<vmem>>, %arg17: memref<1x1x128xf32, #tpu.memory_space<vmem>>, %arg18: memref<128x128xf32, #tpu.memory_space<vmem>>, %arg19: memref<1x128xf32, #tpu.memory_space<vmem>>, %arg20: memref<2x128xf32, #tpu.memory_space<vmem>>, %arg21: memref<128x128xf32, #tpu.memory_space<vmem>>) attributes {dimension_semantics = [#tpu.dimension_semantics<parallel>, #tpu.dimension_semantics<arbitrary>], iteration_bounds = array<i64: 1, 2>, scalar_prefetch = 0 : i64, scratch_operands = 1 : i64, tpu.core_type = #tpu.core_type<tc>, window_params = [{transform_indices = @transform_0, window_bounds = array<i64: 128, 128>}, {transform_indices = @transform_1, window_bounds = array<i64: 2, 64>}, {pipeline_mode = #tpu.pipeline_mode<synchronous>, transform_indices = @transform_2, window_bounds = array<i64: 1, 128>}, {pipeline_mode = #tpu.pipeline_mode<synchronous>, transform_indices = @transform_3, window_bounds = array<i64: 1, 128>}, {transform_indices = @transform_4, window_bounds = array<i64: 1, 128, 384>}, {transform_indices = @transform_5, window_bounds = array<i64: 1, 1, 384>}, {transform_indices = @transform_6, window_bounds = array<i64: 1, 128, 128>}, {transform_indices = @transform_7, window_bounds = array<i64: 1, 1, 128>}, {transform_indices = @transform_8, window_bounds = array<i64: 1, 1, 128>}, {transform_indices = @transform_9, window_bounds = array<i64: 1, 1, 128>}, {transform_indices = @transform_10, window_bounds = array<i64: 1, 128, 256>}, {transform_indices = @transform_11, window_bounds = array<i64: 1, 1, 256>}, {transform_indices = @transform_12, window_bounds = array<i64: 1, 256, 128>}, {transform_indices = @transform_13, window_bounds = array<i64: 1, 1, 128>}, {transform_indices = @transform_14, window_bounds = array<i64: 1, 1, 128>}, {transform_indices = @transform_15, window_bounds = array<i64: 1, 1, 128>}, {pipeline_mode = #tpu.pipeline_mode<synchronous>, transform_indices = @transform_16, window_bounds = array<i64: 128, 128>}, {pipeline_mode = #tpu.pipeline_mode<synchronous>, transform_indices = @transform_17, window_bounds = array<i64: 1, 128>}, {transform_indices = @transform_18, window_bounds = array<i64: 2, 128>}]} {
    %c0_i32 = arith.constant 0 : i32
    %0 = arith.cmpi eq, %arg1, %c0_i32 : i32
    %1 = arith.extui %0 : i1 to i32
    %c0_i32_0 = arith.constant 0 : i32
    %2 = arith.cmpi ne, %1, %c0_i32_0 : i32
    scf.if %2 {
      %c0_72 = arith.constant 0 : index
      %c0_73 = arith.constant 0 : index
      %169 = vector.load %arg2[%c0_72, %c0_73] : memref<128x128xf32, #tpu.memory_space<vmem>>, vector<128x128xf32>
      %c0_74 = arith.constant 0 : index
      %c0_75 = arith.constant 0 : index
      %170 = vector.load %arg4[%c0_74, %c0_75] : memref<1x128xf32, #tpu.memory_space<vmem>>, vector<1x128xf32>
      %c0_76 = arith.constant 0 : index
      %c0_77 = arith.constant 0 : index
      %171 = vector.load %arg5[%c0_76, %c0_77] : memref<1x128xf32, #tpu.memory_space<vmem>>, vector<1x128xf32>
      %cst_78 = arith.constant dense<0.000000e+00> : vector<128xf32>
      %172 = vector.multi_reduction <add>, %169, %cst_78 [1] : vector<128x128xf32> to vector<128xf32>
      %173 = vector.shape_cast %172 : vector<128xf32> to vector<128x1xf32>
      %cst_79 = arith.constant 1.280000e+02 : f32
      %174 = vector.broadcast %cst_79 : f32 to vector<128x1xf32>
      %175 = arith.divf %173, %174 : vector<128x1xf32>
      %176 = vector.broadcast %175 : vector<128x1xf32> to vector<128x128xf32>
      %177 = arith.subf %169, %176 : vector<128x128xf32>
      %178 = arith.mulf %177, %177 : vector<128x128xf32>
      %cst_80 = arith.constant dense<0.000000e+00> : vector<128xf32>
      %179 = vector.multi_reduction <add>, %178, %cst_80 [1] : vector<128x128xf32> to vector<128xf32>
      %180 = vector.shape_cast %179 : vector<128xf32> to vector<128x1xf32>
      %cst_81 = arith.constant 1.280000e+02 : f32
      %181 = vector.broadcast %cst_81 : f32 to vector<128x1xf32>
      %182 = arith.divf %180, %181 : vector<128x1xf32>
      %183 = vector.broadcast %175 : vector<128x1xf32> to vector<128x128xf32>
      %184 = arith.subf %169, %183 : vector<128x128xf32>
      %cst_82 = arith.constant 9.99999996E-13 : f32
      %185 = vector.broadcast %cst_82 : f32 to vector<128x1xf32>
      %186 = arith.addf %182, %185 : vector<128x1xf32>
      %187 = math.rsqrt %186 : vector<128x1xf32>
      %188 = vector.broadcast %187 : vector<128x1xf32> to vector<128x128xf32>
      %189 = arith.mulf %184, %188 : vector<128x128xf32>
      %190 = vector.broadcast %170 : vector<1x128xf32> to vector<128x128xf32>
      %191 = arith.mulf %189, %190 : vector<128x128xf32>
      %192 = vector.broadcast %171 : vector<1x128xf32> to vector<128x128xf32>
      %193 = arith.addf %191, %192 : vector<128x128xf32>
      %c0_83 = arith.constant 0 : index
      %c0_84 = arith.constant 0 : index
      %194 = vector.load %arg21[%c0_83, %c0_84] : memref<128x128xf32, #tpu.memory_space<vmem>>, vector<128x128xf32>
      tpu.vector_store %arg21[%c0_83, %c0_84], %193 {strides = array<i32>} : memref<128x128xf32, #tpu.memory_space<vmem>>, vector<128x128xf32>,
    } else {
    }
    %c0 = arith.constant 0 : index
    %c0_1 = arith.constant 0 : index
    %3 = vector.load %arg21[%c0, %c0_1] : memref<128x128xf32, #tpu.memory_space<vmem>>, vector<128x128xf32>
    %c0_2 = arith.constant 0 : index
    %c0_3 = arith.constant 0 : index
    %c0_4 = arith.constant 0 : index
    %4 = vector.load %arg6[%c0_2, %c0_3, %c0_4] : memref<1x128x384xbf16, #tpu.memory_space<vmem>>, vector<1x128x384xbf16>
    %5 = vector.shape_cast %4 : vector<1x128x384xbf16> to vector<128x384xbf16>
    %6 = arith.truncf %3 : vector<128x128xf32> to vector<128x128xbf16>
    %cst = arith.constant dense<0.000000e+00> : vector<128x384xf32>
    %7 = tpu.matmul %6, %5, %cst {dimension_numbers = #tpu.dot_dimension_numbers<[1], [0], [0], [1], [0, 0, 1, 1], [], []>} : vector<128x128xbf16>, vector<128x384xbf16>, vector<128x384xf32> -> vector<128x384xf32>
    %c0_5 = arith.constant 0 : index
    %c0_6 = arith.constant 0 : index
    %c0_7 = arith.constant 0 : index
    %8 = vector.load %arg7[%c0_5, %c0_6, %c0_7] : memref<1x1x384xf32, #tpu.memory_space<vmem>>, vector<1x1x384xf32>
    %9 = vector.shape_cast %8 : vector<1x1x384xf32> to vector<1x384xf32>
    %10 = vector.broadcast %9 : vector<1x384xf32> to vector<128x384xf32>
    %11 = arith.addf %7, %10 : vector<128x384xf32>
    %12 = vector.extract_strided_slice %11 {offsets = [0, 0], sizes = [128, 128], strides = [1, 1]} : vector<128x384xf32> to vector<128x128xf32>
    %13 = vector.shape_cast %12 : vector<128x128xf32> to vector<2x64x128xf32>
    %14 = vector.extract_strided_slice %11 {offsets = [0, 128], sizes = [128, 128], strides = [1, 1]} : vector<128x384xf32> to vector<128x128xf32>
    %15 = vector.shape_cast %14 : vector<128x128xf32> to vector<2x64x128xf32>
    %16 = vector.extract_strided_slice %11 {offsets = [0, 256], sizes = [128, 128], strides = [1, 1]} : vector<128x384xf32> to vector<128x128xf32>
    %17 = vector.shape_cast %16 : vector<128x128xf32> to vector<2x64x128xf32>
    %c0_8 = arith.constant 0 : index
    %c0_9 = arith.constant 0 : index
    %18 = vector.load %arg3[%c0_8, %c0_9] : memref<2x64xf32, #tpu.memory_space<vmem>>, vector<2x64xf32>
    %cst_10 = arith.constant 1.000000e+00 : f32
    %19 = vector.broadcast %cst_10 : f32 to vector<2x64xf32>
    %20 = arith.subf %19, %18 : vector<2x64xf32>
    %cst_11 = arith.constant -1.000000e+09 : f32
    %21 = vector.broadcast %cst_11 : f32 to vector<2x64xf32>
    %22 = arith.mulf %20, %21 : vector<2x64xf32>
    %23 = vector.shape_cast %22 : vector<2x64xf32> to vector<2x1x64xf32>
    %24 = vector.extract_strided_slice %13 {offsets = [0, 0, 0], sizes = [2, 64, 64], strides = [1, 1, 1]} : vector<2x64x128xf32> to vector<2x64x64xf32>
    %25 = arith.truncf %24 : vector<2x64x64xf32> to vector<2x64x64xbf16>
    %26 = vector.extract_strided_slice %15 {offsets = [0, 0, 0], sizes = [2, 64, 64], strides = [1, 1, 1]} : vector<2x64x128xf32> to vector<2x64x64xf32>
    %27 = arith.truncf %26 : vector<2x64x64xf32> to vector<2x64x64xbf16>
    %28 = vector.extract_strided_slice %17 {offsets = [0, 0, 0], sizes = [2, 64, 64], strides = [1, 1, 1]} : vector<2x64x128xf32> to vector<2x64x64xf32>
    %29 = arith.truncf %28 : vector<2x64x64xf32> to vector<2x64x64xbf16>
    "tpu.trace_start"() <{level = 10 : i32, message = "bqd,bkd->bqk"}> : () -> ()
    %cst_12 = arith.constant dense<0.000000e+00> : vector<2x64x64xf32>
    %30 = tpu.matmul %25, %27, %cst_12 {dimension_numbers = #tpu.dot_dimension_numbers<[2], [2], [1], [1], [0, 0, 0, 1, 1, 1], [0], [0]>} : vector<2x64x64xbf16>, vector<2x64x64xbf16>, vector<2x64x64xf32> -> vector<2x64x64xf32>
    "tpu.trace_stop"() : () -> ()
    %cst_13 = arith.constant 1.250000e-01 : f32
    %31 = vector.broadcast %cst_13 : f32 to vector<2x64x64xf32>
    %32 = arith.mulf %30, %31 : vector<2x64x64xf32>
    %33 = vector.broadcast %23 : vector<2x1x64xf32> to vector<2x64x64xf32>
    %34 = arith.addf %32, %33 : vector<2x64x64xf32>
    %cst_14 = arith.constant dense<0xFF800000> : vector<2x64xf32>
    %35 = vector.multi_reduction <maximumf>, %34, %cst_14 [2] : vector<2x64x64xf32> to vector<2x64xf32>
    %36 = vector.shape_cast %35 : vector<2x64xf32> to vector<2x64x1xf32>
    %37 = vector.broadcast %36 : vector<2x64x1xf32> to vector<2x64x64xf32>
    %38 = arith.subf %34, %37 : vector<2x64x64xf32>
    %39 = math.exp %38 : vector<2x64x64xf32>
    %cst_15 = arith.constant dense<0.000000e+00> : vector<2x64xf32>
    %40 = vector.multi_reduction <add>, %39, %cst_15 [2] : vector<2x64x64xf32> to vector<2x64xf32>
    %41 = vector.shape_cast %40 : vector<2x64xf32> to vector<2x64x1xf32>
    %42 = tpu.reciprocal %41 {approx = true} : vector<2x64x1xf32> -> vector<2x64x1xf32>
    %43 = vector.broadcast %42 : vector<2x64x1xf32> to vector<2x64x64xf32>
    %44 = arith.mulf %39, %43 : vector<2x64x64xf32>
    %45 = arith.truncf %44 : vector<2x64x64xf32> to vector<2x64x64xbf16>
    "tpu.trace_start"() <{level = 10 : i32, message = "bqk,bkd->bqd"}> : () -> ()
    %cst_16 = arith.constant dense<0.000000e+00> : vector<2x64x64xf32>
    %46 = tpu.matmul %45, %29, %cst_16 {dimension_numbers = #tpu.dot_dimension_numbers<[2], [1], [1], [2], [0, 0, 0, 1, 1, 2], [0], [0]>} : vector<2x64x64xbf16>, vector<2x64x64xbf16>, vector<2x64x64xf32> -> vector<2x64x64xf32>
    "tpu.trace_stop"() : () -> ()
    %47 = vector.extract_strided_slice %13 {offsets = [0, 0, 64], sizes = [2, 64, 64], strides = [1, 1, 1]} : vector<2x64x128xf32> to vector<2x64x64xf32>
    %48 = arith.truncf %47 : vector<2x64x64xf32> to vector<2x64x64xbf16>
    %49 = vector.extract_strided_slice %15 {offsets = [0, 0, 64], sizes = [2, 64, 64], strides = [1, 1, 1]} : vector<2x64x128xf32> to vector<2x64x64xf32>
    %50 = arith.truncf %49 : vector<2x64x64xf32> to vector<2x64x64xbf16>
    %51 = vector.extract_strided_slice %17 {offsets = [0, 0, 64], sizes = [2, 64, 64], strides = [1, 1, 1]} : vector<2x64x128xf32> to vector<2x64x64xf32>
    %52 = arith.truncf %51 : vector<2x64x64xf32> to vector<2x64x64xbf16>
    "tpu.trace_start"() <{level = 10 : i32, message = "bqd,bkd->bqk"}> : () -> ()
    %cst_17 = arith.constant dense<0.000000e+00> : vector<2x64x64xf32>
    %53 = tpu.matmul %48, %50, %cst_17 {dimension_numbers = #tpu.dot_dimension_numbers<[2], [2], [1], [1], [0, 0, 0, 1, 1, 1], [0], [0]>} : vector<2x64x64xbf16>, vector<2x64x64xbf16>, vector<2x64x64xf32> -> vector<2x64x64xf32>
    "tpu.trace_stop"() : () -> ()
    %cst_18 = arith.constant 1.250000e-01 : f32
    %54 = vector.broadcast %cst_18 : f32 to vector<2x64x64xf32>
    %55 = arith.mulf %53, %54 : vector<2x64x64xf32>
    %56 = vector.broadcast %23 : vector<2x1x64xf32> to vector<2x64x64xf32>
    %57 = arith.addf %55, %56 : vector<2x64x64xf32>
    %cst_19 = arith.constant dense<0xFF800000> : vector<2x64xf32>
    %58 = vector.multi_reduction <maximumf>, %57, %cst_19 [2] : vector<2x64x64xf32> to vector<2x64xf32>
    %59 = vector.shape_cast %58 : vector<2x64xf32> to vector<2x64x1xf32>
    %60 = vector.broadcast %59 : vector<2x64x1xf32> to vector<2x64x64xf32>
    %61 = arith.subf %57, %60 : vector<2x64x64xf32>
    %62 = math.exp %61 : vector<2x64x64xf32>
    %cst_20 = arith.constant dense<0.000000e+00> : vector<2x64xf32>
    %63 = vector.multi_reduction <add>, %62, %cst_20 [2] : vector<2x64x64xf32> to vector<2x64xf32>
    %64 = vector.shape_cast %63 : vector<2x64xf32> to vector<2x64x1xf32>
    %65 = tpu.reciprocal %64 {approx = true} : vector<2x64x1xf32> -> vector<2x64x1xf32>
    %66 = vector.broadcast %65 : vector<2x64x1xf32> to vector<2x64x64xf32>
    %67 = arith.mulf %62, %66 : vector<2x64x64xf32>
    %68 = arith.truncf %67 : vector<2x64x64xf32> to vector<2x64x64xbf16>
    "tpu.trace_start"() <{level = 10 : i32, message = "bqk,bkd->bqd"}> : () -> ()
    %cst_21 = arith.constant dense<0.000000e+00> : vector<2x64x64xf32>
    %69 = tpu.matmul %68, %52, %cst_21 {dimension_numbers = #tpu.dot_dimension_numbers<[2], [1], [1], [2], [0, 0, 0, 1, 1, 2], [0], [0]>} : vector<2x64x64xbf16>, vector<2x64x64xbf16>, vector<2x64x64xf32> -> vector<2x64x64xf32>
    "tpu.trace_stop"() : () -> ()
    %70 = tpu.concatenate %46, %69 in 2 : vector<2x64x64xf32>, vector<2x64x64xf32> -> vector<2x64x128xf32>
    %71 = vector.shape_cast %70 : vector<2x64x128xf32> to vector<128x128xf32>
    %c0_22 = arith.constant 0 : index
    %c0_23 = arith.constant 0 : index
    %c0_24 = arith.constant 0 : index
    %72 = vector.load %arg8[%c0_22, %c0_23, %c0_24] : memref<1x128x128xbf16, #tpu.memory_space<vmem>>, vector<1x128x128xbf16>
    %73 = vector.shape_cast %72 : vector<1x128x128xbf16> to vector<128x128xbf16>
    %74 = arith.truncf %71 : vector<128x128xf32> to vector<128x128xbf16>
    %cst_25 = arith.constant dense<0.000000e+00> : vector<128x128xf32>
    %75 = tpu.matmul %74, %73, %cst_25 {dimension_numbers = #tpu.dot_dimension_numbers<[1], [0], [0], [1], [0, 0, 1, 1], [], []>} : vector<128x128xbf16>, vector<128x128xbf16>, vector<128x128xf32> -> vector<128x128xf32>
    %c0_26 = arith.constant 0 : index
    %c0_27 = arith.constant 0 : index
    %c0_28 = arith.constant 0 : index
    %76 = vector.load %arg9[%c0_26, %c0_27, %c0_28] : memref<1x1x128xf32, #tpu.memory_space<vmem>>, vector<1x1x128xf32>
    %77 = vector.shape_cast %76 : vector<1x1x128xf32> to vector<1x128xf32>
    %78 = vector.broadcast %77 : vector<1x128xf32> to vector<128x128xf32>
    %79 = arith.addf %75, %78 : vector<128x128xf32>
    %80 = arith.addf %79, %3 : vector<128x128xf32>
    %c0_29 = arith.constant 0 : index
    %c0_30 = arith.constant 0 : index
    %c0_31 = arith.constant 0 : index
    %81 = vector.load %arg10[%c0_29, %c0_30, %c0_31] : memref<1x1x128xf32, #tpu.memory_space<vmem>>, vector<1x1x128xf32>
    %82 = vector.shape_cast %81 : vector<1x1x128xf32> to vector<1x128xf32>
    %c0_32 = arith.constant 0 : index
    %c0_33 = arith.constant 0 : index
    %c0_34 = arith.constant 0 : index
    %83 = vector.load %arg11[%c0_32, %c0_33, %c0_34] : memref<1x1x128xf32, #tpu.memory_space<vmem>>, vector<1x1x128xf32>
    %84 = vector.shape_cast %83 : vector<1x1x128xf32> to vector<1x128xf32>
    %cst_35 = arith.constant dense<0.000000e+00> : vector<128xf32>
    %85 = vector.multi_reduction <add>, %80, %cst_35 [1] : vector<128x128xf32> to vector<128xf32>
    %86 = vector.shape_cast %85 : vector<128xf32> to vector<128x1xf32>
    %cst_36 = arith.constant 1.280000e+02 : f32
    %87 = vector.broadcast %cst_36 : f32 to vector<128x1xf32>
    %88 = arith.divf %86, %87 : vector<128x1xf32>
    %89 = vector.broadcast %88 : vector<128x1xf32> to vector<128x128xf32>
    %90 = arith.subf %80, %89 : vector<128x128xf32>
    %91 = arith.mulf %90, %90 : vector<128x128xf32>
    %cst_37 = arith.constant dense<0.000000e+00> : vector<128xf32>
    %92 = vector.multi_reduction <add>, %91, %cst_37 [1] : vector<128x128xf32> to vector<128xf32>
    %93 = vector.shape_cast %92 : vector<128xf32> to vector<128x1xf32>
    %cst_38 = arith.constant 1.280000e+02 : f32
    %94 = vector.broadcast %cst_38 : f32 to vector<128x1xf32>
    %95 = arith.divf %93, %94 : vector<128x1xf32>
    %96 = vector.broadcast %88 : vector<128x1xf32> to vector<128x128xf32>
    %97 = arith.subf %80, %96 : vector<128x128xf32>
    %cst_39 = arith.constant 9.99999996E-13 : f32
    %98 = vector.broadcast %cst_39 : f32 to vector<128x1xf32>
    %99 = arith.addf %95, %98 : vector<128x1xf32>
    %100 = math.rsqrt %99 : vector<128x1xf32>
    %101 = vector.broadcast %100 : vector<128x1xf32> to vector<128x128xf32>
    %102 = arith.mulf %97, %101 : vector<128x128xf32>
    %103 = vector.broadcast %82 : vector<1x128xf32> to vector<128x128xf32>
    %104 = arith.mulf %102, %103 : vector<128x128xf32>
    %105 = vector.broadcast %84 : vector<1x128xf32> to vector<128x128xf32>
    %106 = arith.addf %104, %105 : vector<128x128xf32>
    %c0_40 = arith.constant 0 : index
    %c0_41 = arith.constant 0 : index
    %c0_42 = arith.constant 0 : index
    %107 = vector.load %arg12[%c0_40, %c0_41, %c0_42] : memref<1x128x256xbf16, #tpu.memory_space<vmem>>, vector<1x128x256xbf16>
    %108 = vector.shape_cast %107 : vector<1x128x256xbf16> to vector<128x256xbf16>
    %109 = arith.truncf %106 : vector<128x128xf32> to vector<128x128xbf16>
    %cst_43 = arith.constant dense<0.000000e+00> : vector<128x256xf32>
    %110 = tpu.matmul %109, %108, %cst_43 {dimension_numbers = #tpu.dot_dimension_numbers<[1], [0], [0], [1], [0, 0, 1, 1], [], []>} : vector<128x128xbf16>, vector<128x256xbf16>, vector<128x256xf32> -> vector<128x256xf32>
    %c0_44 = arith.constant 0 : index
    %c0_45 = arith.constant 0 : index
    %c0_46 = arith.constant 0 : index
    %111 = vector.load %arg13[%c0_44, %c0_45, %c0_46] : memref<1x1x256xf32, #tpu.memory_space<vmem>>, vector<1x1x256xf32>
    %112 = vector.shape_cast %111 : vector<1x1x256xf32> to vector<1x256xf32>
    %113 = vector.broadcast %112 : vector<1x256xf32> to vector<128x256xf32>
    %114 = arith.addf %110, %113 : vector<128x256xf32>
    %cst_47 = arith.constant 5.000000e-01 : f32
    %115 = vector.broadcast %cst_47 : f32 to vector<128x256xf32>
    %116 = arith.mulf %115, %114 : vector<128x256xf32>
    %cst_48 = arith.constant 4.471500e-02 : f32
    %117 = vector.broadcast %cst_48 : f32 to vector<128x256xf32>
    %118 = arith.mulf %117, %114 : vector<128x256xf32>
    %119 = arith.mulf %118, %114 : vector<128x256xf32>
    %120 = arith.mulf %119, %114 : vector<128x256xf32>
    %121 = arith.addf %114, %120 : vector<128x256xf32>
    %cst_49 = arith.constant 0.797884583 : f32
    %122 = vector.broadcast %cst_49 : f32 to vector<128x256xf32>
    %123 = arith.mulf %122, %121 : vector<128x256xf32>
    %124 = math.tanh %123 : vector<128x256xf32>
    %cst_50 = arith.constant 1.000000e+00 : f32
    %125 = vector.broadcast %cst_50 : f32 to vector<128x256xf32>
    %126 = arith.addf %125, %124 : vector<128x256xf32>
    %127 = arith.mulf %116, %126 : vector<128x256xf32>
    %c0_51 = arith.constant 0 : index
    %c0_52 = arith.constant 0 : index
    %c0_53 = arith.constant 0 : index
    %128 = vector.load %arg14[%c0_51, %c0_52, %c0_53] : memref<1x256x128xbf16, #tpu.memory_space<vmem>>, vector<1x256x128xbf16>
    %129 = vector.shape_cast %128 : vector<1x256x128xbf16> to vector<256x128xbf16>
    %130 = arith.truncf %127 : vector<128x256xf32> to vector<128x256xbf16>
    %cst_54 = arith.constant dense<0.000000e+00> : vector<128x128xf32>
    %131 = tpu.matmul %130, %129, %cst_54 {dimension_numbers = #tpu.dot_dimension_numbers<[1], [0], [0], [1], [0, 0, 1, 1], [], []>} : vector<128x256xbf16>, vector<256x128xbf16>, vector<128x128xf32> -> vector<128x128xf32>
    %c0_55 = arith.constant 0 : index
    %c0_56 = arith.constant 0 : index
    %c0_57 = arith.constant 0 : index
    %132 = vector.load %arg15[%c0_55, %c0_56, %c0_57] : memref<1x1x128xf32, #tpu.memory_space<vmem>>, vector<1x1x128xf32>
    %133 = vector.shape_cast %132 : vector<1x1x128xf32> to vector<1x128xf32>
    %134 = vector.broadcast %133 : vector<1x128xf32> to vector<128x128xf32>
    %135 = arith.addf %131, %134 : vector<128x128xf32>
    %136 = arith.addf %135, %106 : vector<128x128xf32>
    %c0_58 = arith.constant 0 : index
    %c0_59 = arith.constant 0 : index
    %c0_60 = arith.constant 0 : index
    %137 = vector.load %arg16[%c0_58, %c0_59, %c0_60] : memref<1x1x128xf32, #tpu.memory_space<vmem>>, vector<1x1x128xf32>
    %138 = vector.shape_cast %137 : vector<1x1x128xf32> to vector<1x128xf32>
    %c0_61 = arith.constant 0 : index
    %c0_62 = arith.constant 0 : index
    %c0_63 = arith.constant 0 : index
    %139 = vector.load %arg17[%c0_61, %c0_62, %c0_63] : memref<1x1x128xf32, #tpu.memory_space<vmem>>, vector<1x1x128xf32>
    %140 = vector.shape_cast %139 : vector<1x1x128xf32> to vector<1x128xf32>
    %cst_64 = arith.constant dense<0.000000e+00> : vector<128xf32>
    %141 = vector.multi_reduction <add>, %136, %cst_64 [1] : vector<128x128xf32> to vector<128xf32>
    %142 = vector.shape_cast %141 : vector<128xf32> to vector<128x1xf32>
    %cst_65 = arith.constant 1.280000e+02 : f32
    %143 = vector.broadcast %cst_65 : f32 to vector<128x1xf32>
    %144 = arith.divf %142, %143 : vector<128x1xf32>
    %145 = vector.broadcast %144 : vector<128x1xf32> to vector<128x128xf32>
    %146 = arith.subf %136, %145 : vector<128x128xf32>
    %147 = arith.mulf %146, %146 : vector<128x128xf32>
    %cst_66 = arith.constant dense<0.000000e+00> : vector<128xf32>
    %148 = vector.multi_reduction <add>, %147, %cst_66 [1] : vector<128x128xf32> to vector<128xf32>
    %149 = vector.shape_cast %148 : vector<128xf32> to vector<128x1xf32>
    %cst_67 = arith.constant 1.280000e+02 : f32
    %150 = vector.broadcast %cst_67 : f32 to vector<128x1xf32>
    %151 = arith.divf %149, %150 : vector<128x1xf32>
    %152 = vector.broadcast %144 : vector<128x1xf32> to vector<128x128xf32>
    %153 = arith.subf %136, %152 : vector<128x128xf32>
    %cst_68 = arith.constant 9.99999996E-13 : f32
    %154 = vector.broadcast %cst_68 : f32 to vector<128x1xf32>
    %155 = arith.addf %151, %154 : vector<128x1xf32>
    %156 = math.rsqrt %155 : vector<128x1xf32>
    %157 = vector.broadcast %156 : vector<128x1xf32> to vector<128x128xf32>
    %158 = arith.mulf %153, %157 : vector<128x128xf32>
    %159 = vector.broadcast %138 : vector<1x128xf32> to vector<128x128xf32>
    %160 = arith.mulf %158, %159 : vector<128x128xf32>
    %161 = vector.broadcast %140 : vector<1x128xf32> to vector<128x128xf32>
    %162 = arith.addf %160, %161 : vector<128x128xf32>
    %c1_i32 = arith.constant 1 : i32
    %163 = arith.cmpi slt, %arg1, %c1_i32 : i32
    %164 = arith.extui %163 : i1 to i32
    %c0_i32_69 = arith.constant 0 : i32
    %165 = arith.cmpi ne, %164, %c0_i32_69 : i32
    scf.if %165 {
      %c0_72 = arith.constant 0 : index
      %c0_73 = arith.constant 0 : index
      %169 = vector.load %arg21[%c0_72, %c0_73] : memref<128x128xf32, #tpu.memory_space<vmem>>, vector<128x128xf32>
      tpu.vector_store %arg21[%c0_72, %c0_73], %162 {strides = array<i32>} : memref<128x128xf32, #tpu.memory_space<vmem>>, vector<128x128xf32>,
    } else {
    }
    %c1_i32_70 = arith.constant 1 : i32
    %166 = arith.cmpi eq, %arg1, %c1_i32_70 : i32
    %167 = arith.extui %166 : i1 to i32
    %c0_i32_71 = arith.constant 0 : i32
    %168 = arith.cmpi ne, %167, %c0_i32_71 : i32
    scf.if %168 {
      %c0_72 = arith.constant 0 : index
      %c0_73 = arith.constant 0 : index
      %169 = vector.load %arg3[%c0_72, %c0_73] : memref<2x64xf32, #tpu.memory_space<vmem>>, vector<2x64xf32>
      %170 = vector.shape_cast %162 : vector<128x128xf32> to vector<2x64x128xf32>
      %171 = vector.shape_cast %169 : vector<2x64xf32> to vector<2x64x1xf32>
      %172 = vector.broadcast %171 : vector<2x64x1xf32> to vector<2x64x128xf32>
      %173 = arith.mulf %170, %172 : vector<2x64x128xf32>
      %cst_74 = arith.constant dense<0.000000e+00> : vector<2x128xf32>
      %174 = vector.multi_reduction <add>, %173, %cst_74 [1] : vector<2x64x128xf32> to vector<2x128xf32>
      %cst_75 = arith.constant dense<0.000000e+00> : vector<2xf32>
      %175 = vector.multi_reduction <add>, %169, %cst_75 [1] : vector<2x64xf32> to vector<2xf32>
      %176 = vector.shape_cast %175 : vector<2xf32> to vector<2x1xf32>
      %cst_76 = arith.constant 1.000000e+00 : f32
      %177 = vector.broadcast %cst_76 : f32 to vector<2x1xf32>
      %178 = arith.maximumf %176, %177 : vector<2x1xf32>
      %179 = tpu.reciprocal %178 {approx = true} : vector<2x1xf32> -> vector<2x1xf32>
      %180 = vector.broadcast %179 : vector<2x1xf32> to vector<2x128xf32>
      %181 = arith.mulf %174, %180 : vector<2x128xf32>
      %c0_77 = arith.constant 0 : index
      %c0_78 = arith.constant 0 : index
      %182 = vector.load %arg18[%c0_77, %c0_78] : memref<128x128xf32, #tpu.memory_space<vmem>>, vector<128x128xf32>
      %cst_79 = arith.constant dense<0.000000e+00> : vector<2x128xf32>
      %183 = tpu.matmul %181, %182, %cst_79 {dimension_numbers = #tpu.dot_dimension_numbers<[1], [0], [0], [1], [0, 0, 1, 1], [], []>} : vector<2x128xf32>, vector<128x128xf32>, vector<2x128xf32> -> vector<2x128xf32>
      %c0_80 = arith.constant 0 : index
      %c0_81 = arith.constant 0 : index
      %184 = vector.load %arg19[%c0_80, %c0_81] : memref<1x128xf32, #tpu.memory_space<vmem>>, vector<1x128xf32>
      %185 = vector.broadcast %184 : vector<1x128xf32> to vector<2x128xf32>
      %186 = arith.addf %183, %185 : vector<2x128xf32>
      %c0_82 = arith.constant 0 : index
      %c0_83 = arith.constant 0 : index
      %187 = vector.load %arg20[%c0_82, %c0_83] : memref<2x128xf32, #tpu.memory_space<vmem>>, vector<2x128xf32>
      tpu.vector_store %arg20[%c0_82, %c0_83], %186 {strides = array<i32>} : memref<2x128xf32, #tpu.memory_space<vmem>>, vector<2x128xf32>,
    } else {
    }
    return
  }
  func.func @transform_0(%arg0: i32, %arg1: i32) -> (i32, i32) {
    %c0_i32 = arith.constant 0 : i32
    %c0_i32_0 = arith.constant 0 : i32
    return %arg0, %c0_i32 : i32, i32
  }
  func.func @transform_1(%arg0: i32, %arg1: i32) -> (i32, i32) {
    %c0_i32 = arith.constant 0 : i32
    %c0_i32_0 = arith.constant 0 : i32
    return %arg0, %c0_i32 : i32, i32
  }
  func.func @transform_2(%arg0: i32, %arg1: i32) -> (i32, i32) {
    %c0_i32 = arith.constant 0 : i32
    %c0_i32_0 = arith.constant 0 : i32
    %c0_i32_1 = arith.constant 0 : i32
    return %c0_i32, %c0_i32_0 : i32, i32
  }
  func.func @transform_3(%arg0: i32, %arg1: i32) -> (i32, i32) {
    %c0_i32 = arith.constant 0 : i32
    %c0_i32_0 = arith.constant 0 : i32
    %c0_i32_1 = arith.constant 0 : i32
    return %c0_i32, %c0_i32_0 : i32, i32
  }
  func.func @transform_4(%arg0: i32, %arg1: i32) -> (i32, i32, i32) {
    %c0_i32 = arith.constant 0 : i32
    %c0_i32_0 = arith.constant 0 : i32
    %c0_i32_1 = arith.constant 0 : i32
    return %arg1, %c0_i32, %c0_i32_0 : i32, i32, i32
  }
  func.func @transform_5(%arg0: i32, %arg1: i32) -> (i32, i32, i32) {
    %c0_i32 = arith.constant 0 : i32
    %c0_i32_0 = arith.constant 0 : i32
    %c0_i32_1 = arith.constant 0 : i32
    return %arg1, %c0_i32, %c0_i32_0 : i32, i32, i32
  }
  func.func @transform_6(%arg0: i32, %arg1: i32) -> (i32, i32, i32) {
    %c0_i32 = arith.constant 0 : i32
    %c0_i32_0 = arith.constant 0 : i32
    %c0_i32_1 = arith.constant 0 : i32
    return %arg1, %c0_i32, %c0_i32_0 : i32, i32, i32
  }
  func.func @transform_7(%arg0: i32, %arg1: i32) -> (i32, i32, i32) {
    %c0_i32 = arith.constant 0 : i32
    %c0_i32_0 = arith.constant 0 : i32
    %c0_i32_1 = arith.constant 0 : i32
    return %arg1, %c0_i32, %c0_i32_0 : i32, i32, i32
  }
  func.func @transform_8(%arg0: i32, %arg1: i32) -> (i32, i32, i32) {
    %c0_i32 = arith.constant 0 : i32
    %c0_i32_0 = arith.constant 0 : i32
    %c0_i32_1 = arith.constant 0 : i32
    return %arg1, %c0_i32, %c0_i32_0 : i32, i32, i32
  }
  func.func @transform_9(%arg0: i32, %arg1: i32) -> (i32, i32, i32) {
    %c0_i32 = arith.constant 0 : i32
    %c0_i32_0 = arith.constant 0 : i32
    %c0_i32_1 = arith.constant 0 : i32
    return %arg1, %c0_i32, %c0_i32_0 : i32, i32, i32
  }
  func.func @transform_10(%arg0: i32, %arg1: i32) -> (i32, i32, i32) {
    %c0_i32 = arith.constant 0 : i32
    %c0_i32_0 = arith.constant 0 : i32
    %c0_i32_1 = arith.constant 0 : i32
    return %arg1, %c0_i32, %c0_i32_0 : i32, i32, i32
  }
  func.func @transform_11(%arg0: i32, %arg1: i32) -> (i32, i32, i32) {
    %c0_i32 = arith.constant 0 : i32
    %c0_i32_0 = arith.constant 0 : i32
    %c0_i32_1 = arith.constant 0 : i32
    return %arg1, %c0_i32, %c0_i32_0 : i32, i32, i32
  }
  func.func @transform_12(%arg0: i32, %arg1: i32) -> (i32, i32, i32) {
    %c0_i32 = arith.constant 0 : i32
    %c0_i32_0 = arith.constant 0 : i32
    %c0_i32_1 = arith.constant 0 : i32
    return %arg1, %c0_i32, %c0_i32_0 : i32, i32, i32
  }
  func.func @transform_13(%arg0: i32, %arg1: i32) -> (i32, i32, i32) {
    %c0_i32 = arith.constant 0 : i32
    %c0_i32_0 = arith.constant 0 : i32
    %c0_i32_1 = arith.constant 0 : i32
    return %arg1, %c0_i32, %c0_i32_0 : i32, i32, i32
  }
  func.func @transform_14(%arg0: i32, %arg1: i32) -> (i32, i32, i32) {
    %c0_i32 = arith.constant 0 : i32
    %c0_i32_0 = arith.constant 0 : i32
    %c0_i32_1 = arith.constant 0 : i32
    return %arg1, %c0_i32, %c0_i32_0 : i32, i32, i32
  }
  func.func @transform_15(%arg0: i32, %arg1: i32) -> (i32, i32, i32) {
    %c0_i32 = arith.constant 0 : i32
    %c0_i32_0 = arith.constant 0 : i32
    %c0_i32_1 = arith.constant 0 : i32
    return %arg1, %c0_i32, %c0_i32_0 : i32, i32, i32
  }
  func.func @transform_16(%arg0: i32, %arg1: i32) -> (i32, i32) {
    %c0_i32 = arith.constant 0 : i32
    %c0_i32_0 = arith.constant 0 : i32
    %c0_i32_1 = arith.constant 0 : i32
    return %c0_i32, %c0_i32_0 : i32, i32
  }
  func.func @transform_17(%arg0: i32, %arg1: i32) -> (i32, i32) {
    %c0_i32 = arith.constant 0 : i32
    %c0_i32_0 = arith.constant 0 : i32
    %c0_i32_1 = arith.constant 0 : i32
    return %c0_i32, %c0_i32_0 : i32, i32
  }
  func.func @transform_18(%arg0: i32, %arg1: i32) -> (i32, i32) {
    %c0_i32 = arith.constant 0 : i32
    %c0_i32_0 = arith.constant 0 : i32
    return %arg0, %c0_i32 : i32, i32
  }
}

</mosaic_0001>

<llo_original>
// kernel: finbert_forward.1
$region0: #{finbert_forward.1}
  #allocation0 [shape = 'u32[]', space=smem, size = 0x4, offset = 0x4, fixed_abs, tag = 'smem constant byte address 0x4 - core index']
  #allocation1 [shape = 'u32[72,128]{1,0:T(1,128)}', space=vmem, size = 0x9000, scoped, tag = 'internal scratch']
  #allocation2 [shape = 'f32[128,128]{1,0:T(8,128)}', space=vmem, size = 0x10000, scoped, tag = 'scratch operand']
  %s0 = inlined_call_operand.vmem [shape: f32[128,128], index: 0, kind: input, shape index: {}]
  %s1 = inlined_call_operand.vmem [shape: f32[2,64], index: 1, kind: input, shape index: {}]
  %s2 = inlined_call_operand.vmem [shape: f32[1,128], index: 2, kind: input, shape index: {}]
  %s3 = inlined_call_operand.vmem [shape: f32[1,128], index: 3, kind: input, shape index: {}]
  %s4 = inlined_call_operand.vmem [shape: bf16[2,128,384], index: 4, kind: input, shape index: {}]
  %s5 = inlined_call_operand.vmem [shape: f32[2,1,384], index: 5, kind: input, shape index: {}]
  %s6 = inlined_call_operand.vmem [shape: bf16[2,128,128], index: 6, kind: input, shape index: {}]
  %s7 = inlined_call_operand.vmem [shape: f32[2,1,128], index: 7, kind: input, shape index: {}]
  %s8 = inlined_call_operand.vmem [shape: f32[2,1,128], index: 8, kind: input, shape index: {}]
  %s9 = inlined_call_operand.vmem [shape: f32[2,1,128], index: 9, kind: input, shape index: {}]
  %s10 = inlined_call_operand.vmem [shape: bf16[2,128,256], index: 10, kind: input, shape index: {}]
  %s11 = inlined_call_operand.vmem [shape: f32[2,1,256], index: 11, kind: input, shape index: {}]
  %s12 = inlined_call_operand.vmem [shape: bf16[2,256,128], index: 12, kind: input, shape index: {}]
  %s13 = inlined_call_operand.vmem [shape: f32[2,1,128], index: 13, kind: input, shape index: {}]
  %s14 = inlined_call_operand.vmem [shape: f32[2,1,128], index: 14, kind: input, shape index: {}]
  %s15 = inlined_call_operand.vmem [shape: f32[2,1,128], index: 15, kind: input, shape index: {}]
  %s16 = inlined_call_operand.vmem [shape: f32[128,128], index: 16, kind: input, shape index: {}]
  %s17 = inlined_call_operand.vmem [shape: f32[1,128], index: 17, kind: input, shape index: {}]
  %s18 = inlined_call_operand.hbm [shape: f32[2,128], index: 18, kind: output, shape index: {}]
  %s19 = sld [smem:[#allocation0]]
  $region117: #{finbert_forward.1} parent=0
    _
  %s21 = ssub.s32 1, %s19
  %s22 = scalar_select 0, %s21, %s19
  $region1: #{finbert_forward.1} parent=0
    #allocation3 [shape = 'u8[1024]{0}', space=vmem, size = 0x400, scoped, tag = 'output window, operand 0, single buffered']
    #allocation4 [shape = 's32[2]{0}', space=sflag, size = 0x8, scoped, tag = 'scoped memory for finbert_forward.1']
    %23 = vsyncpa [#allocation4], 0
    loop: start=0, step=1, limit=4
    $region2: #{finbert_forward.1} parent=1 // loop_pre_header
      _
    $region3: #{finbert_forward.1} parent=1 // loop_header
      %s25 = sphi 0, %s29
      %p26 = scmp.ge.s32.totalorder %s25, 4
      %s32 = sphi 0, %s44
      %s33 = sphi 0, %s40
      %s34 = sphi 0, %s32
      %s35 = sphi 0, %s33
      %s36 = sphi 0, %s34
      %s37 = sphi 0, %s35
      %s47 = sphi 0, %s49
      %s50 = sphi 0, %s47
      %s51 = sphi 0, %s50
      %s67 = sphi 0, %s51
      %s73 = sphi 0, %s75
      %s76 = sphi 0, %s73
      %s77 = sphi 0, %s76
      %s93 = sphi 0, %s77
      %s97 = sphi 0, %s97
      %s99 = sphi 0, %s97
      %s100 = sphi 0, %s99
      %s114 = sphi 0, %s100
      %s118 = sphi 0, %s118
      %s120 = sphi 0, %s118
      %s121 = sphi 0, %s120
      %s135 = sphi 0, %s121
      %s141 = sphi 0, %s143
      %s144 = sphi 0, %s141
      %s145 = sphi 0, %s144
      %s161 = sphi 0, %s145
      %s167 = sphi 0, %s169
      %s170 = sphi 0, %s167
      %s171 = sphi 0, %s170
      %s187 = sphi 0, %s171
      %s193 = sphi 0, %s195
      %s196 = sphi 0, %s193
      %s197 = sphi 0, %s196
      %s213 = sphi 0, %s197
      %s219 = sphi 0, %s221
      %s222 = sphi 0, %s219
      %s223 = sphi 0, %s222
      %s239 = sphi 0, %s223
      %s245 = sphi 0, %s247
      %s248 = sphi 0, %s245
      %s249 = sphi 0, %s248
      %s265 = sphi 0, %s249
      %s271 = sphi 0, %s273
      %s274 = sphi 0, %s271
      %s275 = sphi 0, %s274
      %s291 = sphi 0, %s275
      %s297 = sphi 0, %s299
      %s300 = sphi 0, %s297
      %s301 = sphi 0, %s300
      %s317 = sphi 0, %s301
      %s323 = sphi 0, %s325
      %s326 = sphi 0, %s323
      %s327 = sphi 0, %s326
      %s343 = sphi 0, %s327
      %s349 = sphi 0, %s351
      %s352 = sphi 0, %s349
      %s353 = sphi 0, %s352
      %s369 = sphi 0, %s353
      %s375 = sphi 0, %s377
      %s378 = sphi 0, %s375
      %s379 = sphi 0, %s378
      %s395 = sphi 0, %s379
      %s401 = sphi 0, %s403
      %s404 = sphi 0, %s401
      %s405 = sphi 0, %s404
      %s421 = sphi 0, %s405
      %s427 = sphi 0, %s429
      %s430 = sphi 0, %s427
      %s431 = sphi 0, %s430
      %s447 = sphi 0, %s431
      %s451 = sphi 0, %s451
      %s453 = sphi 0, %s451
      %s454 = sphi 0, %s453
      %s468 = sphi 0, %s454
      %s472 = sphi 0, %s472
      %s474 = sphi 0, %s472
      %s475 = sphi 0, %s474
      %s489 = sphi 0, %s475
      %s495 = sphi 0, %s497
      %s498 = sphi 0, %s495
      %s499 = sphi 0, %s498
      %s515 = sphi 0, %s499
    $region4: #{finbert_forward.1} parent=1 // loop_header_branch
      %28 = sbr.rel (%p26) target = $region8
    $region5: #{finbert_forward.1} parent=1 // loop_body
      %s30 = ssub.s32 %s25, 1
      %s31 = ssub.s32 %s25, 2
      %s38 = sadd.s32 1, %s33
      %p39 = scmp.ge.s32.totalorder %s38, 2
      %s40 = scalar_select %p39, 0, %s38
      %s41 = sadd.s32 1, %s32
      %s42 = scalar_select %p39, %s41, %s32
      %p43 = scmp.ge.s32.totalorder %s42, 1
      %s44 = scalar_select %p43, 0, %s42
      %s45 = ssub.s32 %s32, %s44
      %p46 = scmp.eq.s32.totalorder %s45, 0
      %s48 = sadd.s32 %s47, 1
      %s49 = scalar_select %p46, %s47, %s48
      %p52 = pneg %p46
      %p53 = scmp.eq.s32.totalorder %s25, 1
      %p54 = por %p52, %p53
      %p55 = scmp.ne.s32.totalorder %s47, %s50
      %p56 = scmp.eq.s32.totalorder %s25, 0
      %p57 = por %p55, %p56
      %p58 = scmp.ne.s32.totalorder %s47, %s50
      %p59 = scmp.eq.s32.totalorder %s30, 1
      %p60 = por %p58, %p59
      %p61 = scmp.ne.s32.totalorder %s50, %s51
      %p62 = scmp.eq.s32.totalorder %s30, 0
      %p63 = por %p61, %p62
      %p64 = scmp.ne.s32.totalorder %s50, %s51
      %p65 = scmp.eq.s32.totalorder %s31, 1
      %p66 = por %p64, %p65
      %p68 = scmp.ne.s32.totalorder %s51, %s67
      %p69 = scmp.eq.s32.totalorder %s31, 0
      %p70 = por %p68, %p69
      %s71 = ssub.s32 %s32, %s44
      %p72 = scmp.eq.s32.totalorder %s71, 0
      %s74 = sadd.s32 %s73, 1
      %s75 = scalar_select %p72, %s73, %s74
      %p78 = pneg %p72
      %p79 = scmp.eq.s32.totalorder %s25, 1
      %p80 = por %p78, %p79
      %p81 = scmp.ne.s32.totalorder %s73, %s76
      %p82 = scmp.eq.s32.totalorder %s25, 0
      %p83 = por %p81, %p82
      %p84 = scmp.ne.s32.totalorder %s73, %s76
      %p85 = scmp.eq.s32.totalorder %s30, 1
      %p86 = por %p84, %p85
      %p87 = scmp.ne.s32.totalorder %s76, %s77
      %p88 = scmp.eq.s32.totalorder %s30, 0
      %p89 = por %p87, %p88
      %p90 = scmp.ne.s32.totalorder %s76, %s77
      %p91 = scmp.eq.s32.totalorder %s31, 1
      %p92 = por %p90, %p91
      %p94 = scmp.ne.s32.totalorder %s77, %s93
      %p95 = scmp.eq.s32.totalorder %s31, 0
      %p96 = por %p94, %p95
      %s98 = sadd.s32 %s97, 1
      %p101 = scmp.eq.s32.totalorder %s25, 1
      %p102 = scmp.ne.s32.totalorder %s97, %s99
      %p103 = scmp.eq.s32.totalorder %s25, 0
      %p104 = por %p102, %p103
      %p105 = scmp.ne.s32.totalorder %s97, %s99
      %p106 = scmp.eq.s32.totalorder %s30, 1
      %p107 = por %p105, %p106
      %p108 = scmp.ne.s32.totalorder %s99, %s100
      %p109 = scmp.eq.s32.totalorder %s30, 0
      %p110 = por %p108, %p109
      %p111 = scmp.ne.s32.totalorder %s99, %s100
      %p112 = scmp.eq.s32.totalorder %s31, 1
      %p113 = por %p111, %p112
      %p115 = scmp.ne.s32.totalorder %s100, %s114
      %p116 = scmp.eq.s32.totalorder %s31, 0
      %p117 = por %p115, %p116
      %s119 = sadd.s32 %s118, 1
      %p122 = scmp.eq.s32.totalorder %s25, 1
      %p123 = scmp.ne.s32.totalorder %s118, %s120
      %p124 = scmp.eq.s32.totalorder %s25, 0
      %p125 = por %p123, %p124
      %p126 = scmp.ne.s32.totalorder %s118, %s120
      %p127 = scmp.eq.s32.totalorder %s30, 1
      %p128 = por %p126, %p127
      %p129 = scmp.ne.s32.totalorder %s120, %s121
      %p130 = scmp.eq.s32.totalorder %s30, 0
      %p131 = por %p129, %p130
      %p132 = scmp.ne.s32.totalorder %s120, %s121
      %p133 = scmp.eq.s32.totalorder %s31, 1
      %p134 = por %p132, %p133
      %p136 = scmp.ne.s32.totalorder %s121, %s135
      %p137 = scmp.eq.s32.totalorder %s31, 0
      %p138 = por %p136, %p137
      %s139 = ssub.s32 %s33, %s40
      %p140 = scmp.eq.s32.totalorder %s139, 0
      %s142 = sadd.s32 %s141, 1
      %s143 = scalar_select %p140, %s141, %s142
      %p146 = pneg %p140
      %p147 = scmp.eq.s32.totalorder %s25, 1
      %p148 = por %p146, %p147
      %p149 = scmp.ne.s32.totalorder %s141, %s144
      %p150 = scmp.eq.s32.totalorder %s25, 0
      %p151 = por %p149, %p150
      %p152 = scmp.ne.s32.totalorder %s141, %s144
      %p153 = scmp.eq.s32.totalorder %s30, 1
      %p154 = por %p152, %p153
      %p155 = scmp.ne.s32.totalorder %s144, %s145
      %p156 = scmp.eq.s32.totalorder %s30, 0
      %p157 = por %p155, %p156
      %p158 = scmp.ne.s32.totalorder %s144, %s145
      %p159 = scmp.eq.s32.totalorder %s31, 1
      %p160 = por %p158, %p159
      %p162 = scmp.ne.s32.totalorder %s145, %s161
      %p163 = scmp.eq.s32.totalorder %s31, 0
      %p164 = por %p162, %p163
      %s165 = ssub.s32 %s33, %s40
      %p166 = scmp.eq.s32.totalorder %s165, 0
      %s168 = sadd.s32 %s167, 1
      %s169 = scalar_select %p166, %s167, %s168
      %p172 = pneg %p166
      %p173 = scmp.eq.s32.totalorder %s25, 1
      %p174 = por %p172, %p173
      %p175 = scmp.ne.s32.totalorder %s167, %s170
      %p176 = scmp.eq.s32.totalorder %s25, 0
      %p177 = por %p175, %p176
      %p178 = scmp.ne.s32.totalorder %s167, %s170
      %p179 = scmp.eq.s32.totalorder %s30, 1
      %p180 = por %p178, %p179
      %p181 = scmp.ne.s32.totalorder %s170, %s171
      %p182 = scmp.eq.s32.totalorder %s30, 0
      %p183 = por %p181, %p182
      %p184 = scmp.ne.s32.totalorder %s170, %s171
      %p185 = scmp.eq.s32.totalorder %s31, 1
      %p186 = por %p184, %p185
      %p188 = scmp.ne.s32.totalorder %s171, %s187
      %p189 = scmp.eq.s32.totalorder %s31, 0
      %p190 = por %p188, %p189
      %s191 = ssub.s32 %s33, %s40
      %p192 = scmp.eq.s32.totalorder %s191, 0
      %s194 = sadd.s32 %s193, 1
      %s195 = scalar_select %p192, %s193, %s194
      %p198 = pneg %p192
      %p199 = scmp.eq.s32.totalorder %s25, 1
      %p200 = por %p198, %p199
      %p201 = scmp.ne.s32.totalorder %s193, %s196
      %p202 = scmp.eq.s32.totalorder %s25, 0
      %p203 = por %p201, %p202
      %p204 = scmp.ne.s32.totalorder %s193, %s196
      %p205 = scmp.eq.s32.totalorder %s30, 1
      %p206 = por %p204, %p205
      %p207 = scmp.ne.s32.totalorder %s196, %s197
      %p208 = scmp.eq.s32.totalorder %s30, 0
      %p209 = por %p207, %p208
      %p210 = scmp.ne.s32.totalorder %s196, %s197
      %p211 = scmp.eq.s32.totalorder %s31, 1
      %p212 = por %p210, %p211
      %p214 = scmp.ne.s32.totalorder %s197, %s213
      %p215 = scmp.eq.s32.totalorder %s31, 0
      %p216 = por %p214, %p215
      %s217 = ssub.s32 %s33, %s40
      %p218 = scmp.eq.s32.totalorder %s217, 0
      %s220 = sadd.s32 %s219, 1
      %s221 = scalar_select %p218, %s219, %s220
      %p224 = pneg %p218
      %p225 = scmp.eq.s32.totalorder %s25, 1
      %p226 = por %p224, %p225
      %p227 = scmp.ne.s32.totalorder %s219, %s222
      %p228 = scmp.eq.s32.totalorder %s25, 0
      %p229 = por %p227, %p228
      %p230 = scmp.ne.s32.totalorder %s219, %s222
      %p231 = scmp.eq.s32.totalorder %s30, 1
      %p232 = por %p230, %p231
      %p233 = scmp.ne.s32.totalorder %s222, %s223
      %p234 = scmp.eq.s32.totalorder %s30, 0
      %p235 = por %p233, %p234
      %p236 = scmp.ne.s32.totalorder %s222, %s223
      %p237 = scmp.eq.s32.totalorder %s31, 1
      %p238 = por %p236, %p237
      %p240 = scmp.ne.s32.totalorder %s223, %s239
      %p241 = scmp.eq.s32.totalorder %s31, 0
      %p242 = por %p240, %p241
      %s243 = ssub.s32 %s33, %s40
      %p244 = scmp.eq.s32.totalorder %s243, 0
      %s246 = sadd.s32 %s245, 1
      %s247 = scalar_select %p244, %s245, %s246
      %p250 = pneg %p244
      %p251 = scmp.eq.s32.totalorder %s25, 1
      %p252 = por %p250, %p251
      %p253 = scmp.ne.s32.totalorder %s245, %s248
      %p254 = scmp.eq.s32.totalorder %s25, 0
      %p255 = por %p253, %p254
      %p256 = scmp.ne.s32.totalorder %s245, %s248
      %p257 = scmp.eq.s32.totalorder %s30, 1
      %p258 = por %p256, %p257
      %p259 = scmp.ne.s32.totalorder %s248, %s249
      %p260 = scmp.eq.s32.totalorder %s30, 0
      %p261 = por %p259, %p260
      %p262 = scmp.ne.s32.totalorder %s248, %s249
      %p263 = scmp.eq.s32.totalorder %s31, 1
      %p264 = por %p262, %p263
      %p266 = scmp.ne.s32.totalorder %s249, %s265
      %p267 = scmp.eq.s32.totalorder %s31, 0
      %p268 = por %p266, %p267
      %s269 = ssub.s32 %s33, %s40
      %p270 = scmp.eq.s32.totalorder %s269, 0
      %s272 = sadd.s32 %s271, 1
      %s273 = scalar_select %p270, %s271, %s272
      %p276 = pneg %p270
      %p277 = scmp.eq.s32.totalorder %s25, 1
      %p278 = por %p276, %p277
      %p279 = scmp.ne.s32.totalorder %s271, %s274
      %p280 = scmp.eq.s32.totalorder %s25, 0
      %p281 = por %p279, %p280
      %p282 = scmp.ne.s32.totalorder %s271, %s274
      %p283 = scmp.eq.s32.totalorder %s30, 1
      %p284 = por %p282, %p283
      %p285 = scmp.ne.s32.totalorder %s274, %s275
      %p286 = scmp.eq.s32.totalorder %s30, 0
      %p287 = por %p285, %p286
      %p288 = scmp.ne.s32.totalorder %s274, %s275
      %p289 = scmp.eq.s32.totalorder %s31, 1
      %p290 = por %p288, %p289
      %p292 = scmp.ne.s32.totalorder %s275, %s291
      %p293 = scmp.eq.s32.totalorder %s31, 0
      %p294 = por %p292, %p293
      %s295 = ssub.s32 %s33, %s40
      %p296 = scmp.eq.s32.totalorder %s295, 0
      %s298 = sadd.s32 %s297, 1
      %s299 = scalar_select %p296, %s297, %s298
      %p302 = pneg %p296
      %p303 = scmp.eq.s32.totalorder %s25, 1
      %p304 = por %p302, %p303
      %p305 = scmp.ne.s32.totalorder %s297, %s300
      %p306 = scmp.eq.s32.totalorder %s25, 0
      %p307 = por %p305, %p306
      %p308 = scmp.ne.s32.totalorder %s297, %s300
      %p309 = scmp.eq.s32.totalorder %s30, 1
      %p310 = por %p308, %p309
      %p311 = scmp.ne.s32.totalorder %s300, %s301
      %p312 = scmp.eq.s32.totalorder %s30, 0
      %p313 = por %p311, %p312
      %p314 = scmp.ne.s32.totalorder %s300, %s301
      %p315 = scmp.eq.s32.totalorder %s31, 1
      %p316 = por %p314, %p315
      %p318 = scmp.ne.s32.totalorder %s301, %s317
      %p319 = scmp.eq.s32.totalorder %s31, 0
      %p320 = por %p318, %p319
      %s321 = ssub.s32 %s33, %s40
      %p322 = scmp.eq.s32.totalorder %s321, 0
      %s324 = sadd.s32 %s323, 1
      %s325 = scalar_select %p322, %s323, %s324
      %p328 = pneg %p322
      %p329 = scmp.eq.s32.totalorder %s25, 1
      %p330 = por %p328, %p329
      %p331 = scmp.ne.s32.totalorder %s323, %s326
      %p332 = scmp.eq.s32.totalorder %s25, 0
      %p333 = por %p331, %p332
      %p334 = scmp.ne.s32.totalorder %s323, %s326
      %p335 = scmp.eq.s32.totalorder %s30, 1
      %p336 = por %p334, %p335
      %p337 = scmp.ne.s32.totalorder %s326, %s327
      %p338 = scmp.eq.s32.totalorder %s30, 0
      %p339 = por %p337, %p338
      %p340 = scmp.ne.s32.totalorder %s326, %s327
      %p341 = scmp.eq.s32.totalorder %s31, 1
      %p342 = por %p340, %p341
      %p344 = scmp.ne.s32.totalorder %s327, %s343
      %p345 = scmp.eq.s32.totalorder %s31, 0
      %p346 = por %p344, %p345
      %s347 = ssub.s32 %s33, %s40
      %p348 = scmp.eq.s32.totalorder %s347, 0
      %s350 = sadd.s32 %s349, 1
      %s351 = scalar_select %p348, %s349, %s350
      %p354 = pneg %p348
      %p355 = scmp.eq.s32.totalorder %s25, 1
      %p356 = por %p354, %p355
      %p357 = scmp.ne.s32.totalorder %s349, %s352
      %p358 = scmp.eq.s32.totalorder %s25, 0
      %p359 = por %p357, %p358
      %p360 = scmp.ne.s32.totalorder %s349, %s352
      %p361 = scmp.eq.s32.totalorder %s30, 1
      %p362 = por %p360, %p361
      %p363 = scmp.ne.s32.totalorder %s352, %s353
      %p364 = scmp.eq.s32.totalorder %s30, 0
      %p365 = por %p363, %p364
      %p366 = scmp.ne.s32.totalorder %s352, %s353
      %p367 = scmp.eq.s32.totalorder %s31, 1
      %p368 = por %p366, %p367
      %p370 = scmp.ne.s32.totalorder %s353, %s369
      %p371 = scmp.eq.s32.totalorder %s31, 0
      %p372 = por %p370, %p371
      %s373 = ssub.s32 %s33, %s40
      %p374 = scmp.eq.s32.totalorder %s373, 0
      %s376 = sadd.s32 %s375, 1
      %s377 = scalar_select %p374, %s375, %s376
      %p380 = pneg %p374
      %p381 = scmp.eq.s32.totalorder %s25, 1
      %p382 = por %p380, %p381
      %p383 = scmp.ne.s32.totalorder %s375, %s378
      %p384 = scmp.eq.s32.totalorder %s25, 0
      %p385 = por %p383, %p384
      %p386 = scmp.ne.s32.totalorder %s375, %s378
      %p387 = scmp.eq.s32.totalorder %s30, 1
      %p388 = por %p386, %p387
      %p389 = scmp.ne.s32.totalorder %s378, %s379
      %p390 = scmp.eq.s32.totalorder %s30, 0
      %p391 = por %p389, %p390
      %p392 = scmp.ne.s32.totalorder %s378, %s379
      %p393 = scmp.eq.s32.totalorder %s31, 1
      %p394 = por %p392, %p393
      %p396 = scmp.ne.s32.totalorder %s379, %s395
      %p397 = scmp.eq.s32.totalorder %s31, 0
      %p398 = por %p396, %p397
      %s399 = ssub.s32 %s33, %s40
      %p400 = scmp.eq.s32.totalorder %s399, 0
      %s402 = sadd.s32 %s401, 1
      %s403 = scalar_select %p400, %s401, %s402
      %p406 = pneg %p400
      %p407 = scmp.eq.s32.totalorder %s25, 1
      %p408 = por %p406, %p407
      %p409 = scmp.ne.s32.totalorder %s401, %s404
      %p410 = scmp.eq.s32.totalorder %s25, 0
      %p411 = por %p409, %p410
      %p412 = scmp.ne.s32.totalorder %s401, %s404
      %p413 = scmp.eq.s32.totalorder %s30, 1
      %p414 = por %p412, %p413
      %p415 = scmp.ne.s32.totalorder %s404, %s405
      %p416 = scmp.eq.s32.totalorder %s30, 0
      %p417 = por %p415, %p416
      %p418 = scmp.ne.s32.totalorder %s404, %s405
      %p419 = scmp.eq.s32.totalorder %s31, 1
      %p420 = por %p418, %p419
      %p422 = scmp.ne.s32.totalorder %s405, %s421
      %p423 = scmp.eq.s32.totalorder %s31, 0
      %p424 = por %p422, %p423
      %s425 = ssub.s32 %s33, %s40
      %p426 = scmp.eq.s32.totalorder %s425, 0
      %s428 = sadd.s32 %s427, 1
      %s429 = scalar_select %p426, %s427, %s428
      %p432 = pneg %p426
      %p433 = scmp.eq.s32.totalorder %s25, 1
      %p434 = por %p432, %p433
      %p435 = scmp.ne.s32.totalorder %s427, %s430
      %p436 = scmp.eq.s32.totalorder %s25, 0
      %p437 = por %p435, %p436
      %p438 = scmp.ne.s32.totalorder %s427, %s430
      %p439 = scmp.eq.s32.totalorder %s30, 1
      %p440 = por %p438, %p439
      %p441 = scmp.ne.s32.totalorder %s430, %s431
      %p442 = scmp.eq.s32.totalorder %s30, 0
      %p443 = por %p441, %p442
      %p444 = scmp.ne.s32.totalorder %s430, %s431
      %p445 = scmp.eq.s32.totalorder %s31, 1
      %p446 = por %p444, %p445
      %p448 = scmp.ne.s32.totalorder %s431, %s447
      %p449 = scmp.eq.s32.totalorder %s31, 0
      %p450 = por %p448, %p449
      %s452 = sadd.s32 %s451, 1
      %p455 = scmp.eq.s32.totalorder %s25, 1
      %p456 = scmp.ne.s32.totalorder %s451, %s453
      %p457 = scmp.eq.s32.totalorder %s25, 0
      %p458 = por %p456, %p457
      %p459 = scmp.ne.s32.totalorder %s451, %s453
      %p460 = scmp.eq.s32.totalorder %s30, 1
      %p461 = por %p459, %p460
      %p462 = scmp.ne.s32.totalorder %s453, %s454
      %p463 = scmp.eq.s32.totalorder %s30, 0
      %p464 = por %p462, %p463
      %p465 = scmp.ne.s32.totalorder %s453, %s454
      %p466 = scmp.eq.s32.totalorder %s31, 1
      %p467 = por %p465, %p466
      %p469 = scmp.ne.s32.totalorder %s454, %s468
      %p470 = scmp.eq.s32.totalorder %s31, 0
      %p471 = por %p469, %p470
      %s473 = sadd.s32 %s472, 1
      %p476 = scmp.eq.s32.totalorder %s25, 1
      %p477 = scmp.ne.s32.totalorder %s472, %s474
      %p478 = scmp.eq.s32.totalorder %s25, 0
      %p479 = por %p477, %p478
      %p480 = scmp.ne.s32.totalorder %s472, %s474
      %p481 = scmp.eq.s32.totalorder %s30, 1
      %p482 = por %p480, %p481
      %p483 = scmp.ne.s32.totalorder %s474, %s475
      %p484 = scmp.eq.s32.totalorder %s30, 0
      %p485 = por %p483, %p484
      %p486 = scmp.ne.s32.totalorder %s474, %s475
      %p487 = scmp.eq.s32.totalorder %s31, 1
      %p488 = por %p486, %p487
      %p490 = scmp.ne.s32.totalorder %s475, %s489
      %p491 = scmp.eq.s32.totalorder %s31, 0
      %p492 = por %p490, %p491
      %s493 = ssub.s32 %s32, %s44
      %p494 = scmp.eq.s32.totalorder %s493, 0
      %s496 = sadd.s32 %s495, 1
      %s497 = scalar_select %p494, %s495, %s496
      %p500 = pneg %p494
      %p501 = scmp.eq.s32.totalorder %s25, 1
      %p502 = por %p500, %p501
      %p503 = scmp.ne.s32.totalorder %s495, %s498
      %p504 = scmp.eq.s32.totalorder %s25, 0
      %p505 = por %p503, %p504
      %p506 = scmp.ne.s32.totalorder %s495, %s498
      %p507 = scmp.eq.s32.totalorder %s30, 1
      %p508 = por %p506, %p507
      %p509 = scmp.ne.s32.totalorder %s498, %s499
      %p510 = scmp.eq.s32.totalorder %s30, 0
      %p511 = por %p509, %p510
      %p512 = scmp.ne.s32.totalorder %s498, %s499
      %p513 = scmp.eq.s32.totalorder %s31, 1
      %p514 = por %p512, %p513
      %p516 = scmp.ne.s32.totalorder %s499, %s515
      %p517 = scmp.eq.s32.totalorder %s31, 0
      %p518 = por %p516, %p517
      %p519 = scmp.le.s32.totalorder 1, %s25
      %p520 = scmp.lt.s32.totalorder %s25, 3
      %p521 = pnand %p519, %p520
      %p522 = pneg %p521
      // Predicated region
      $region9: #{finbert_forward.1} parent=5 // pred_check
        _
      $region10: #{finbert_forward.1} parent=5 // pred_check_branch
        %524 = sbr.rel (%p521) target = $region12
      $region11: #{finbert_forward.1} parent=5 // pred_region
        %s525 = ssub.s32 %s25, 1
        // Predicated region
        $region13: #{finbert_forward.1} parent=11 // pred_check
          %p526 = pneg %p63
        $region14: #{finbert_forward.1} parent=11 // pred_check_branch
          %528 = sbr.rel (%p526) target = $region16
        $region15: #{finbert_forward.1} parent=11 // pred_region
          %s529 = smul.u32 16, %s34
          %p530 = scmp.lt.s32.totalorder %s529, 15
          %s531 = scalar_select %p530, %s529, 15
          %s532 = smul.addr %s531, 8
          %s533 = scalar_lea.vmem %s0, %s532
          %s534 = smul.u32 16, %s34
        $region16: #{finbert_forward.1} parent=11 // pred_fallthru
          _
        // Predicated region
        $region17: #{finbert_forward.1} parent=11 // pred_check
          %p535 = pneg %p89
        $region18: #{finbert_forward.1} parent=11 // pred_check_branch
          %537 = sbr.rel (%p535) target = $region20
        $region19: #{finbert_forward.1} parent=11 // pred_region
          %p538 = scmp.lt.s32.totalorder %s34, 0
          %s539 = scalar_select %p538, %s34, 0
          %s540 = smul.addr %s539, 2
          %s541 = scalar_lea.vmem %s1, %s540
        $region20: #{finbert_forward.1} parent=11 // pred_fallthru
          _
        // Predicated region
        $region21: #{finbert_forward.1} parent=11 // pred_check
          %p542 = pneg %p110
        $region22: #{finbert_forward.1} parent=11 // pred_check_branch
          %544 = sbr.rel (%p542) target = $region24
        $region23: #{finbert_forward.1} parent=11 // pred_region
          _
        $region24: #{finbert_forward.1} parent=11 // pred_fallthru
          _
        // Predicated region
        $region25: #{finbert_forward.1} parent=11 // pred_check
          %p545 = pneg %p131
        $region26: #{finbert_forward.1} parent=11 // pred_check_branch
          %547 = sbr.rel (%p545) target = $region28
        $region27: #{finbert_forward.1} parent=11 // pred_region
          _
        $region28: #{finbert_forward.1} parent=11 // pred_fallthru
          _
        // Predicated region
        $region29: #{finbert_forward.1} parent=11 // pred_check
          %p548 = pneg %p464
        $region30: #{finbert_forward.1} parent=11 // pred_check_branch
          %550 = sbr.rel (%p548) target = $region32
        $region31: #{finbert_forward.1} parent=11 // pred_region
          _
        $region32: #{finbert_forward.1} parent=11 // pred_fallthru
          _
        // Predicated region
        $region33: #{finbert_forward.1} parent=11 // pred_check
          %p551 = pneg %p485
        $region34: #{finbert_forward.1} parent=11 // pred_check_branch
          %553 = sbr.rel (%p551) target = $region36
        $region35: #{finbert_forward.1} parent=11 // pred_region
          _
        $region36: #{finbert_forward.1} parent=11 // pred_fallthru
          _
      $region12: #{finbert_forward.1} parent=5 // pred_fallthru
        _
      %p554 = scmp.lt.s32.totalorder %s25, 2
      // Predicated region
      $region37: #{finbert_forward.1} parent=5 // pred_check
        %p555 = pneg %p554
      $region38: #{finbert_forward.1} parent=5 // pred_check_branch
        %557 = sbr.rel (%p555) target = $region40
      $region39: #{finbert_forward.1} parent=5 // pred_region
        // Predicated region
        $region41: #{finbert_forward.1} parent=39 // pred_check
          %p558 = pneg %p151
        $region42: #{finbert_forward.1} parent=39 // pred_check_branch
          %560 = sbr.rel (%p558) target = $region44
        $region43: #{finbert_forward.1} parent=39 // pred_region
          %p561 = scmp.lt.s32.totalorder %s33, 1
          %s562 = scalar_select %p561, %s33, 1
          %s563 = smul.addr %s562, 48
          %s564 = smul.addr %s563, 4
          %s565 = scalar_lea.vmem %s4, %s564
        $region44: #{finbert_forward.1} parent=39 // pred_fallthru
          _
        // Predicated region
        $region45: #{finbert_forward.1} parent=39 // pred_check
          %p566 = pneg %p177
        $region46: #{finbert_forward.1} parent=39 // pred_check_branch
          %568 = sbr.rel (%p566) target = $region48
        $region47: #{finbert_forward.1} parent=39 // pred_region
          %p569 = scmp.lt.s32.totalorder %s33, 1
          %s570 = scalar_select %p569, %s33, 1
          %s571 = smul.addr %s570, 3
          %s572 = scalar_lea.vmem %s5, %s571
        $region48: #{finbert_forward.1} parent=39 // pred_fallthru
          _
        // Predicated region
        $region49: #{finbert_forward.1} parent=39 // pred_check
          %p573 = pneg %p203
        $region50: #{finbert_forward.1} parent=39 // pred_check_branch
          %575 = sbr.rel (%p573) target = $region52
        $region51: #{finbert_forward.1} parent=39 // pred_region
          %p576 = scmp.lt.s32.totalorder %s33, 1
          %s577 = scalar_select %p576, %s33, 1
          %s578 = smul.addr %s577, 16
          %s579 = smul.addr %s578, 4
          %s580 = scalar_lea.vmem %s6, %s579
        $region52: #{finbert_forward.1} parent=39 // pred_fallthru
          _
        // Predicated region
        $region53: #{finbert_forward.1} parent=39 // pred_check
          %p581 = pneg %p229
        $region54: #{finbert_forward.1} parent=39 // pred_check_branch
          %583 = sbr.rel (%p581) target = $region56
        $region55: #{finbert_forward.1} parent=39 // pred_region
          %p584 = scmp.lt.s32.totalorder %s33, 1
          %s585 = scalar_select %p584, %s33, 1
          %s586 = scalar_lea.vmem %s7, %s585
        $region56: #{finbert_forward.1} parent=39 // pred_fallthru
          _
        // Predicated region
        $region57: #{finbert_forward.1} parent=39 // pred_check
          %p587 = pneg %p255
        $region58: #{finbert_forward.1} parent=39 // pred_check_branch
          %589 = sbr.rel (%p587) target = $region60
        $region59: #{finbert_forward.1} parent=39 // pred_region
          %p590 = scmp.lt.s32.totalorder %s33, 1
          %s591 = scalar_select %p590, %s33, 1
          %s592 = scalar_lea.vmem %s8, %s591
        $region60: #{finbert_forward.1} parent=39 // pred_fallthru
          _
        // Predicated region
        $region61: #{finbert_forward.1} parent=39 // pred_check
          %p593 = pneg %p281
        $region62: #{finbert_forward.1} parent=39 // pred_check_branch
          %595 = sbr.rel (%p593) target = $region64
        $region63: #{finbert_forward.1} parent=39 // pred_region
          %p596 = scmp.lt.s32.totalorder %s33, 1
          %s597 = scalar_select %p596, %s33, 1
          %s598 = scalar_lea.vmem %s9, %s597
        $region64: #{finbert_forward.1} parent=39 // pred_fallthru
          _
        // Predicated region
        $region65: #{finbert_forward.1} parent=39 // pred_check
          %p599 = pneg %p307
        $region66: #{finbert_forward.1} parent=39 // pred_check_branch
          %601 = sbr.rel (%p599) target = $region68
        $region67: #{finbert_forward.1} parent=39 // pred_region
          %p602 = scmp.lt.s32.totalorder %s33, 1
          %s603 = scalar_select %p602, %s33, 1
          %s604 = smul.addr %s603, 32
          %s605 = smul.addr %s604, 4
          %s606 = scalar_lea.vmem %s10, %s605
        $region68: #{finbert_forward.1} parent=39 // pred_fallthru
          _
        // Predicated region
        $region69: #{finbert_forward.1} parent=39 // pred_check
          %p607 = pneg %p333
        $region70: #{finbert_forward.1} parent=39 // pred_check_branch
          %609 = sbr.rel (%p607) target = $region72
        $region71: #{finbert_forward.1} parent=39 // pred_region
          %p610 = scmp.lt.s32.totalorder %s33, 1
          %s611 = scalar_select %p610, %s33, 1
          %s612 = smul.addr %s611, 2
          %s613 = scalar_lea.vmem %s11, %s612
        $region72: #{finbert_forward.1} parent=39 // pred_fallthru
          _
        // Predicated region
        $region73: #{finbert_forward.1} parent=39 // pred_check
          %p614 = pneg %p359
        $region74: #{finbert_forward.1} parent=39 // pred_check_branch
          %616 = sbr.rel (%p614) target = $region76
        $region75: #{finbert_forward.1} parent=39 // pred_region
          %p617 = scmp.lt.s32.totalorder %s33, 1
          %s618 = scalar_select %p617, %s33, 1
          %s619 = smul.addr %s618, 32
          %s620 = smul.addr %s619, 4
          %s621 = scalar_lea.vmem %s12, %s620
        $region76: #{finbert_forward.1} parent=39 // pred_fallthru
          _
        // Predicated region
        $region77: #{finbert_forward.1} parent=39 // pred_check
          %p622 = pneg %p385
        $region78: #{finbert_forward.1} parent=39 // pred_check_branch
          %624 = sbr.rel (%p622) target = $region80
        $region79: #{finbert_forward.1} parent=39 // pred_region
          %p625 = scmp.lt.s32.totalorder %s33, 1
          %s626 = scalar_select %p625, %s33, 1
          %s627 = scalar_lea.vmem %s13, %s626
        $region80: #{finbert_forward.1} parent=39 // pred_fallthru
          _
        // Predicated region
        $region81: #{finbert_forward.1} parent=39 // pred_check
          %p628 = pneg %p411
        $region82: #{finbert_forward.1} parent=39 // pred_check_branch
          %630 = sbr.rel (%p628) target = $region84
        $region83: #{finbert_forward.1} parent=39 // pred_region
          %p631 = scmp.lt.s32.totalorder %s33, 1
          %s632 = scalar_select %p631, %s33, 1
          %s633 = scalar_lea.vmem %s14, %s632
        $region84: #{finbert_forward.1} parent=39 // pred_fallthru
          _
        // Predicated region
        $region85: #{finbert_forward.1} parent=39 // pred_check
          %p634 = pneg %p437
        $region86: #{finbert_forward.1} parent=39 // pred_check_branch
          %636 = sbr.rel (%p634) target = $region88
        $region87: #{finbert_forward.1} parent=39 // pred_region
          %p637 = scmp.lt.s32.totalorder %s33, 1
          %s638 = scalar_select %p637, %s33, 1
          %s639 = scalar_lea.vmem %s15, %s638
        $region88: #{finbert_forward.1} parent=39 // pred_fallthru
          _
      $region40: #{finbert_forward.1} parent=5 // pred_fallthru
        _
      %p640 = scmp.le.s32.totalorder 1, %s25
      %p641 = scmp.lt.s32.totalorder %s25, 3
      %p642 = pnand %p640, %p641
      %p643 = pneg %p642
      // Predicated region
      $region89: #{finbert_forward.1} parent=5 // pred_check
        _
      $region90: #{finbert_forward.1} parent=5 // pred_check_branch
        %645 = sbr.rel (%p642) target = $region92
      $region91: #{finbert_forward.1} parent=5 // pred_region
        %s646 = ssub.s32 %s25, 1
        %s647 = smul.u32 16, %s34
        %p648 = scmp.lt.s32.totalorder %s647, 15
        %s649 = scalar_select %p648, %s647, 15
        %s650 = smul.addr %s649, 8
        %s651 = scalar_lea.vmem %s0, %s650
        %p652 = pneg %p63
        %p653 = pneg %p60
        %p654 = scmp.lt.s32.totalorder %s34, 0
        %s655 = scalar_select %p654, %s34, 0
        %s656 = smul.addr %s655, 2
        %s657 = scalar_lea.vmem %s1, %s656
        %p658 = pneg %p89
        %p659 = pneg %p86
        %p660 = pneg %p110
        %p661 = pneg %p107
        %p662 = pneg %p131
        %p663 = pneg %p128
        %p664 = scmp.lt.s32.totalorder %s35, 1
        %s665 = scalar_select %p664, %s35, 1
        %s666 = smul.addr %s665, 48
        %s667 = smul.addr %s666, 4
        %s668 = scalar_lea.vmem %s4, %s667
        %p669 = pneg %p157
        %p670 = pneg %p154
        %p671 = scmp.lt.s32.totalorder %s35, 1
        %s672 = scalar_select %p671, %s35, 1
        %s673 = smul.addr %s672, 3
        %s674 = scalar_lea.vmem %s5, %s673
        %p675 = pneg %p183
        %p676 = pneg %p180
        %p677 = scmp.lt.s32.totalorder %s35, 1
        %s678 = scalar_select %p677, %s35, 1
        %s679 = smul.addr %s678, 16
        %s680 = smul.addr %s679, 4
        %s681 = scalar_lea.vmem %s6, %s680
        %p682 = pneg %p209
        %p683 = pneg %p206
        %p684 = scmp.lt.s32.totalorder %s35, 1
        %s685 = scalar_select %p684, %s35, 1
        %s686 = scalar_lea.vmem %s7, %s685
        %p687 = pneg %p235
        %p688 = pneg %p232
        %p689 = scmp.lt.s32.totalorder %s35, 1
        %s690 = scalar_select %p689, %s35, 1
        %s691 = scalar_lea.vmem %s8, %s690
        %p692 = pneg %p261
        %p693 = pneg %p258
        %p694 = scmp.lt.s32.totalorder %s35, 1
        %s695 = scalar_select %p694, %s35, 1
        %s696 = scalar_lea.vmem %s9, %s695
        %p697 = pneg %p287
        %p698 = pneg %p284
        %p699 = scmp.lt.s32.totalorder %s35, 1
        %s700 = scalar_select %p699, %s35, 1
        %s701 = smul.addr %s700, 32
        %s702 = smul.addr %s701, 4
        %s703 = scalar_lea.vmem %s10, %s702
        %p704 = pneg %p313
        %p705 = pneg %p310
        %p706 = scmp.lt.s32.totalorder %s35, 1
        %s707 = scalar_select %p706, %s35, 1
        %s708 = smul.addr %s707, 2
        %s709 = scalar_lea.vmem %s11, %s708
        %p710 = pneg %p339
        %p711 = pneg %p336
        %p712 = scmp.lt.s32.totalorder %s35, 1
        %s713 = scalar_select %p712, %s35, 1
        %s714 = smul.addr %s713, 32
        %s715 = smul.addr %s714, 4
        %s716 = scalar_lea.vmem %s12, %s715
        %p717 = pneg %p365
        %p718 = pneg %p362
        %p719 = scmp.lt.s32.totalorder %s35, 1
        %s720 = scalar_select %p719, %s35, 1
        %s721 = scalar_lea.vmem %s13, %s720
        %p722 = pneg %p391
        %p723 = pneg %p388
        %p724 = scmp.lt.s32.totalorder %s35, 1
        %s725 = scalar_select %p724, %s35, 1
        %s726 = scalar_lea.vmem %s14, %s725
        %p727 = pneg %p417
        %p728 = pneg %p414
        %p729 = scmp.lt.s32.totalorder %s35, 1
        %s730 = scalar_select %p729, %s35, 1
        %s731 = scalar_lea.vmem %s15, %s730
        %p732 = pneg %p443
        %p733 = pneg %p440
        %p734 = pneg %p464
        %p735 = pneg %p461
        %p736 = pneg %p485
        %p737 = pneg %p482
        %p738 = pneg %p511
        %p739 = pneg %p508
        %s740 = smul.u32 16, %s34
        %p741 = scmp.lt.s32.totalorder %s740, 15
        %s742 = scalar_select %p741, %s740, 15
        %s743 = smul.addr %s742, 8
        %s744 = scalar_lea.vmem %s0, %s743
        %s745 = smul.u32 16, %s34
        %p746 = scmp.lt.s32.totalorder %s34, 0
        %s747 = scalar_select %p746, %s34, 0
        %s748 = smul.addr %s747, 2
        %s749 = scalar_lea.vmem %s1, %s748
        %p750 = scmp.lt.s32.totalorder %s35, 1
        %s751 = scalar_select %p750, %s35, 1
        %s752 = smul.addr %s751, 48
        %s753 = smul.addr %s752, 4
        %s754 = scalar_lea.vmem %s4, %s753
        %p755 = scmp.lt.s32.totalorder %s35, 1
        %s756 = scalar_select %p755, %s35, 1
        %s757 = smul.addr %s756, 3
        %s758 = scalar_lea.vmem %s5, %s757
        %p759 = scmp.lt.s32.totalorder %s35, 1
        %s760 = scalar_select %p759, %s35, 1
        %s761 = smul.addr %s760, 16
        %s762 = smul.addr %s761, 4
        %s763 = scalar_lea.vmem %s6, %s762
        %p764 = scmp.lt.s32.totalorder %s35, 1
        %s765 = scalar_select %p764, %s35, 1
        %s766 = scalar_lea.vmem %s7, %s765
        %p767 = scmp.lt.s32.totalorder %s35, 1
        %s768 = scalar_select %p767, %s35, 1
        %s769 = scalar_lea.vmem %s8, %s768
        %p770 = scmp.lt.s32.totalorder %s35, 1
        %s771 = scalar_select %p770, %s35, 1
        %s772 = scalar_lea.vmem %s9, %s771
        %p773 = scmp.lt.s32.totalorder %s35, 1
        %s774 = scalar_select %p773, %s35, 1
        %s775 = smul.addr %s774, 32
        %s776 = smul.addr %s775, 4
        %s777 = scalar_lea.vmem %s10, %s776
        %p778 = scmp.lt.s32.totalorder %s35, 1
        %s779 = scalar_select %p778, %s35, 1
        %s780 = smul.addr %s779, 2
        %s781 = scalar_lea.vmem %s11, %s780
        %p782 = scmp.lt.s32.totalorder %s35, 1
        %s783 = scalar_select %p782, %s35, 1
        %s784 = smul.addr %s783, 32
        %s785 = smul.addr %s784, 4
        %s786 = scalar_lea.vmem %s12, %s785
        %p787 = scmp.lt.s32.totalorder %s35, 1
        %s788 = scalar_select %p787, %s35, 1
        %s789 = scalar_lea.vmem %s13, %s788
        %p790 = scmp.lt.s32.totalorder %s35, 1
        %s791 = scalar_select %p790, %s35, 1
        %s792 = scalar_lea.vmem %s14, %s791
        %p793 = scmp.lt.s32.totalorder %s35, 1
        %s794 = scalar_select %p793, %s35, 1
        %s795 = scalar_lea.vmem %s15, %s794
        %p797 = scmp.eq.s32.totalorder %s35, 0
        // Predicated region
        $region93: #{finbert_forward.1} parent=91 // pred_check
          %p798 = pneg %p797
        $region94: #{finbert_forward.1} parent=91 // pred_check_branch
          %800 = sbr.rel (%p798) target = $region96
        $region95: #{finbert_forward.1} parent=91 // pred_region
          %v801 = vld [vmem:[%s744] sm:$0xff]
          %v802 = vld [vmem:[%s744 + $0x8] sm:$0xff]
          %v803 = vld [vmem:[%s744 + $0x10] sm:$0xff]
          %v804 = vld [vmem:[%s744 + $0x18] sm:$0xff]
          %v805 = vld [vmem:[%s744 + $0x20] sm:$0xff]
          %v806 = vld [vmem:[%s744 + $0x28] sm:$0xff]
          %v807 = vld [vmem:[%s744 + $0x30] sm:$0xff]
          %v808 = vld [vmem:[%s744 + $0x38] sm:$0xff]
          %v809 = vld [vmem:[%s744 + $0x40] sm:$0xff]
          %v810 = vld [vmem:[%s744 + $0x48] sm:$0xff]
          %v811 = vld [vmem:[%s744 + $0x50] sm:$0xff]
          %v812 = vld [vmem:[%s744 + $0x58] sm:$0xff]
          %v813 = vld [vmem:[%s744 + $0x60] sm:$0xff]
          %v814 = vld [vmem:[%s744 + $0x68] sm:$0xff]
          %v815 = vld [vmem:[%s744 + $0x70] sm:$0xff]
          %v816 = vld [vmem:[%s744 + $0x78] sm:$0xff]
          %v817 = vld [vmem:[%s2] sm:$0x1]
          %v818 = vld [vmem:[%s3] sm:$0x1]
          %819 = vadd.xlane.f32.xlu0 %v801
          %v820 = vpop.xlane.xlu0 %819
          %821 = vadd.xlane.f32.xlu0 %v802
          %v822 = vpop.xlane.xlu0 %821
          %823 = vadd.xlane.f32.xlu0 %v803
          %v824 = vpop.xlane.xlu0 %823
          %825 = vadd.xlane.f32.xlu0 %v804
          %v826 = vpop.xlane.xlu0 %825
          %827 = vadd.xlane.f32.xlu0 %v805
          %v828 = vpop.xlane.xlu0 %827
          %829 = vadd.xlane.f32.xlu0 %v806
          %v830 = vpop.xlane.xlu0 %829
          %831 = vadd.xlane.f32.xlu0 %v807
          %v832 = vpop.xlane.xlu0 %831
          %833 = vadd.xlane.f32.xlu0 %v808
          %v834 = vpop.xlane.xlu0 %833
          %835 = vadd.xlane.f32.xlu0 %v809
          %v836 = vpop.xlane.xlu0 %835
          %837 = vadd.xlane.f32.xlu0 %v810
          %v838 = vpop.xlane.xlu0 %837
          %839 = vadd.xlane.f32.xlu0 %v811
          %v840 = vpop.xlane.xlu0 %839
          %841 = vadd.xlane.f32.xlu0 %v812
          %v842 = vpop.xlane.xlu0 %841
          %843 = vadd.xlane.f32.xlu0 %v813
          %v844 = vpop.xlane.xlu0 %843
          %845 = vadd.xlane.f32.xlu0 %v814
          %v846 = vpop.xlane.xlu0 %845
          %847 = vadd.xlane.f32.xlu0 %v815
          %v848 = vpop.xlane.xlu0 %847
          %849 = vadd.xlane.f32.xlu0 %v816
          %v850 = vpop.xlane.xlu0 %849
          %v851 = vrcp.pop 128.0
          %v852 = vmul.f32 128.0, %v851
          %v853 = vsub.f32 1.0, %v852
          %v854 = vmul.f32 %v851, %v853
          %v855 = vadd.f32 %v851, %v854
          %vm856 = vweird.f32 %v851
          %v857 = vsel %vm856, %v851, %v855
          %v858 = vmul.f32 %v820, %v857
          %v859 = vmul.f32 %v822, %v857
          %v860 = vmul.f32 %v824, %v857
          %v861 = vmul.f32 %v826, %v857
          %v862 = vmul.f32 %v828, %v857
          %v863 = vmul.f32 %v830, %v857
          %v864 = vmul.f32 %v832, %v857
          %v865 = vmul.f32 %v834, %v857
          %v866 = vmul.f32 %v836, %v857
          %v867 = vmul.f32 %v838, %v857
          %v868 = vmul.f32 %v840, %v857
          %v869 = vmul.f32 %v842, %v857
          %v870 = vmul.f32 %v844, %v857
          %v871 = vmul.f32 %v846, %v857
          %v872 = vmul.f32 %v848, %v857
          %v873 = vmul.f32 %v850, %v857
          %v874 = vsub.f32 %v801, %v858
          %v875 = vsub.f32 %v802, %v859
          %v876 = vsub.f32 %v803, %v860
          %v877 = vsub.f32 %v804, %v861
          %v878 = vsub.f32 %v805, %v862
          %v879 = vsub.f32 %v806, %v863
          %v880 = vsub.f32 %v807, %v864
          %v881 = vsub.f32 %v808, %v865
          %v882 = vsub.f32 %v809, %v866
          %v883 = vsub.f32 %v810, %v867
          %v884 = vsub.f32 %v811, %v868
          %v885 = vsub.f32 %v812, %v869
          %v886 = vsub.f32 %v813, %v870
          %v887 = vsub.f32 %v814, %v871
          %v888 = vsub.f32 %v815, %v872
          %v889 = vsub.f32 %v816, %v873
          %v890 = vmul.f32 %v874, %v874
          %v891 = vmul.f32 %v875, %v875
          %v892 = vmul.f32 %v876, %v876
          %v893 = vmul.f32 %v877, %v877
          %v894 = vmul.f32 %v878, %v878
          %v895 = vmul.f32 %v879, %v879
          %v896 = vmul.f32 %v880, %v880
          %v897 = vmul.f32 %v881, %v881
          %v898 = vmul.f32 %v882, %v882
          %v899 = vmul.f32 %v883, %v883
          %v900 = vmul.f32 %v884, %v884
          %v901 = vmul.f32 %v885, %v885
          %v902 = vmul.f32 %v886, %v886
          %v903 = vmul.f32 %v887, %v887
          %v904 = vmul.f32 %v888, %v888
          %v905 = vmul.f32 %v889, %v889
          %906 = vadd.xlane.f32.xlu0 %v890
          %v907 = vpop.xlane.xlu0 %906
          %908 = vadd.xlane.f32.xlu0 %v891
          %v909 = vpop.xlane.xlu0 %908
          %910 = vadd.xlane.f32.xlu0 %v892
          %v911 = vpop.xlane.xlu0 %910
          %912 = vadd.xlane.f32.xlu0 %v893
          %v913 = vpop.xlane.xlu0 %912
          %914 = vadd.xlane.f32.xlu0 %v894
          %v915 = vpop.xlane.xlu0 %914
          %916 = vadd.xlane.f32.xlu0 %v895
          %v917 = vpop.xlane.xlu0 %916
          %918 = vadd.xlane.f32.xlu0 %v896
          %v919 = vpop.xlane.xlu0 %918
          %920 = vadd.xlane.f32.xlu0 %v897
          %v921 = vpop.xlane.xlu0 %920
          %922 = vadd.xlane.f32.xlu0 %v898
          %v923 = vpop.xlane.xlu0 %922
          %924 = vadd.xlane.f32.xlu0 %v899
          %v925 = vpop.xlane.xlu0 %924
          %926 = vadd.xlane.f32.xlu0 %v900
          %v927 = vpop.xlane.xlu0 %926
          %928 = vadd.xlane.f32.xlu0 %v901
          %v929 = vpop.xlane.xlu0 %928
          %930 = vadd.xlane.f32.xlu0 %v902
          %v931 = vpop.xlane.xlu0 %930
          %932 = vadd.xlane.f32.xlu0 %v903
          %v933 = vpop.xlane.xlu0 %932
          %934 = vadd.xlane.f32.xlu0 %v904
          %v935 = vpop.xlane.xlu0 %934
          %936 = vadd.xlane.f32.xlu0 %v905
          %v937 = vpop.xlane.xlu0 %936
          %v938 = vmul.f32 %v907, %v857
          %v939 = vmul.f32 %v909, %v857
          %v940 = vmul.f32 %v911, %v857
          %v941 = vmul.f32 %v913, %v857
          %v942 = vmul.f32 %v915, %v857
          %v943 = vmul.f32 %v917, %v857
          %v944 = vmul.f32 %v919, %v857
          %v945 = vmul.f32 %v921, %v857
          %v946 = vmul.f32 %v923, %v857
          %v947 = vmul.f32 %v925, %v857
          %v948 = vmul.f32 %v927, %v857
          %v949 = vmul.f32 %v929, %v857
          %v950 = vmul.f32 %v931, %v857
          %v951 = vmul.f32 %v933, %v857
          %v952 = vmul.f32 %v935, %v857
          %v953 = vmul.f32 %v937, %v857
          %v954 = vadd.f32 %v938, 1e-12
          %v955 = vadd.f32 %v939, 1e-12
          %v956 = vadd.f32 %v940, 1e-12
          %v957 = vadd.f32 %v941, 1e-12
          %v958 = vadd.f32 %v942, 1e-12
          %v959 = vadd.f32 %v943, 1e-12
          %v960 = vadd.f32 %v944, 1e-12
          %v961 = vadd.f32 %v945, 1e-12
          %v962 = vadd.f32 %v946, 1e-12
          %v963 = vadd.f32 %v947, 1e-12
          %v964 = vadd.f32 %v948, 1e-12
          %v965 = vadd.f32 %v949, 1e-12
          %v966 = vadd.f32 %v950, 1e-12
          %v967 = vadd.f32 %v951, 1e-12
          %v968 = vadd.f32 %v952, 1e-12
          %v969 = vadd.f32 %v953, 1e-12
          %v970 = vrsqrt.pop %v954
          %v971 = vmul.f32 %v970, %v954
          %v972 = vmul.f32 %v971, %v970
          %v973 = vmul.f32 0.5, %v972
          %v974 = vsub.f32 1.5, %v973
          %v975 = vmul.f32 %v970, %v974
          %vm976 = vweird.f32 %v954
          %vm977 = vweird.f32 %v970
          %vm978 = vmor %vm976, %vm977
          %v979 = vsel %vm978, %v970, %v975
          %v980 = vrsqrt.pop %v955
          %v981 = vmul.f32 %v980, %v955
          %v982 = vmul.f32 %v981, %v980
          %v983 = vmul.f32 0.5, %v982
          %v984 = vsub.f32 1.5, %v983
          %v985 = vmul.f32 %v980, %v984
          %vm986 = vweird.f32 %v955
          %vm987 = vweird.f32 %v980
          %vm988 = vmor %vm986, %vm987
          %v989 = vsel %vm988, %v980, %v985
          %v990 = vrsqrt.pop %v956
          %v991 = vmul.f32 %v990, %v956
          %v992 = vmul.f32 %v991, %v990
          %v993 = vmul.f32 0.5, %v992
          %v994 = vsub.f32 1.5, %v993
          %v995 = vmul.f32 %v990, %v994
          %vm996 = vweird.f32 %v956
          %vm997 = vweird.f32 %v990
          %vm998 = vmor %vm996, %vm997
          %v999 = vsel %vm998, %v990, %v995
          %v1000 = vrsqrt.pop %v957
          %v1001 = vmul.f32 %v1000, %v957
          %v1002 = vmul.f32 %v1001, %v1000
          %v1003 = vmul.f32 0.5, %v1002
          %v1004 = vsub.f32 1.5, %v1003
          %v1005 = vmul.f32 %v1000, %v1004
          %vm1006 = vweird.f32 %v957
          %vm1007 = vweird.f32 %v1000
          %vm1008 = vmor %vm1006, %vm1007
          %v1009 = vsel %vm1008, %v1000, %v1005
          %v1010 = vrsqrt.pop %v958
          %v1011 = vmul.f32 %v1010, %v958
          %v1012 = vmul.f32 %v1011, %v1010
          %v1013 = vmul.f32 0.5, %v1012
          %v1014 = vsub.f32 1.5, %v1013
          %v1015 = vmul.f32 %v1010, %v1014
          %vm1016 = vweird.f32 %v958
          %vm1017 = vweird.f32 %v1010
          %vm1018 = vmor %vm1016, %vm1017
          %v1019 = vsel %vm1018, %v1010, %v1015
          %v1020 = vrsqrt.pop %v959
          %v1021 = vmul.f32 %v1020, %v959
          %v1022 = vmul.f32 %v1021, %v1020
          %v1023 = vmul.f32 0.5, %v1022
          %v1024 = vsub.f32 1.5, %v1023
          %v1025 = vmul.f32 %v1020, %v1024
          %vm1026 = vweird.f32 %v959
          %vm1027 = vweird.f32 %v1020
          %vm1028 = vmor %vm1026, %vm1027
          %v1029 = vsel %vm1028, %v1020, %v1025
          %v1030 = vrsqrt.pop %v960
          %v1031 = vmul.f32 %v1030, %v960
          %v1032 = vmul.f32 %v1031, %v1030
          %v1033 = vmul.f32 0.5, %v1032
          %v1034 = vsub.f32 1.5, %v1033
          %v1035 = vmul.f32 %v1030, %v1034
          %vm1036 = vweird.f32 %v960
          %vm1037 = vweird.f32 %v1030
          %vm1038 = vmor %vm1036, %vm1037
          %v1039 = vsel %vm1038, %v1030, %v1035
          %v1040 = vrsqrt.pop %v961
          %v1041 = vmul.f32 %v1040, %v961
          %v1042 = vmul.f32 %v1041, %v1040
          %v1043 = vmul.f32 0.5, %v1042
          %v1044 = vsub.f32 1.5, %v1043
          %v1045 = vmul.f32 %v1040, %v1044
          %vm1046 = vweird.f32 %v961
          %vm1047 = vweird.f32 %v1040
          %vm1048 = vmor %vm1046, %vm1047
          %v1049 = vsel %vm1048, %v1040, %v1045
          %v1050 = vrsqrt.pop %v962
          %v1051 = vmul.f32 %v1050, %v962
          %v1052 = vmul.f32 %v1051, %v1050
          %v1053 = vmul.f32 0.5, %v1052
          %v1054 = vsub.f32 1.5, %v1053
          %v1055 = vmul.f32 %v1050, %v1054
          %vm1056 = vweird.f32 %v962
          %vm1057 = vweird.f32 %v1050
          %vm1058 = vmor %vm1056, %vm1057
          %v1059 = vsel %vm1058, %v1050, %v1055
          %v1060 = vrsqrt.pop %v963
          %v1061 = vmul.f32 %v1060, %v963
          %v1062 = vmul.f32 %v1061, %v1060
          %v1063 = vmul.f32 0.5, %v1062
          %v1064 = vsub.f32 1.5, %v1063
          %v1065 = vmul.f32 %v1060, %v1064
          %vm1066 = vweird.f32 %v963
          %vm1067 = vweird.f32 %v1060
          %vm1068 = vmor %vm1066, %vm1067
          %v1069 = vsel %vm1068, %v1060, %v1065
          %v1070 = vrsqrt.pop %v964
          %v1071 = vmul.f32 %v1070, %v964
          %v1072 = vmul.f32 %v1071, %v1070
          %v1073 = vmul.f32 0.5, %v1072
          %v1074 = vsub.f32 1.5, %v1073
          %v1075 = vmul.f32 %v1070, %v1074
          %vm1076 = vweird.f32 %v964
          %vm1077 = vweird.f32 %v1070
          %vm1078 = vmor %vm1076, %vm1077
          %v1079 = vsel %vm1078, %v1070, %v1075
          %v1080 = vrsqrt.pop %v965
          %v1081 = vmul.f32 %v1080, %v965
          %v1082 = vmul.f32 %v1081, %v1080
          %v1083 = vmul.f32 0.5, %v1082
          %v1084 = vsub.f32 1.5, %v1083
          %v1085 = vmul.f32 %v1080, %v1084
          %vm1086 = vweird.f32 %v965
          %vm1087 = vweird.f32 %v1080
          %vm1088 = vmor %vm1086, %vm1087
          %v1089 = vsel %vm1088, %v1080, %v1085
          %v1090 = vrsqrt.pop %v966
          %v1091 = vmul.f32 %v1090, %v966
          %v1092 = vmul.f32 %v1091, %v1090
          %v1093 = vmul.f32 0.5, %v1092
          %v1094 = vsub.f32 1.5, %v1093
          %v1095 = vmul.f32 %v1090, %v1094
          %vm1096 = vweird.f32 %v966
          %vm1097 = vweird.f32 %v1090
          %vm1098 = vmor %vm1096, %vm1097
          %v1099 = vsel %vm1098, %v1090, %v1095
          %v1100 = vrsqrt.pop %v967
          %v1101 = vmul.f32 %v1100, %v967
          %v1102 = vmul.f32 %v1101, %v1100
          %v1103 = vmul.f32 0.5, %v1102
          %v1104 = vsub.f32 1.5, %v1103
          %v1105 = vmul.f32 %v1100, %v1104
          %vm1106 = vweird.f32 %v967
          %vm1107 = vweird.f32 %v1100
          %vm1108 = vmor %vm1106, %vm1107
          %v1109 = vsel %vm1108, %v1100, %v1105
          %v1110 = vrsqrt.pop %v968
          %v1111 = vmul.f32 %v1110, %v968
          %v1112 = vmul.f32 %v1111, %v1110
          %v1113 = vmul.f32 0.5, %v1112
          %v1114 = vsub.f32 1.5, %v1113
          %v1115 = vmul.f32 %v1110, %v1114
          %vm1116 = vweird.f32 %v968
          %vm1117 = vweird.f32 %v1110
          %vm1118 = vmor %vm1116, %vm1117
          %v1119 = vsel %vm1118, %v1110, %v1115
          %v1120 = vrsqrt.pop %v969
          %v1121 = vmul.f32 %v1120, %v969
          %v1122 = vmul.f32 %v1121, %v1120
          %v1123 = vmul.f32 0.5, %v1122
          %v1124 = vsub.f32 1.5, %v1123
          %v1125 = vmul.f32 %v1120, %v1124
          %vm1126 = vweird.f32 %v969
          %vm1127 = vweird.f32 %v1120
          %vm1128 = vmor %vm1126, %vm1127
          %v1129 = vsel %vm1128, %v1120, %v1125
          %v1130 = vmul.f32 %v874, %v979
          %v1131 = vmul.f32 %v875, %v989
          %v1132 = vmul.f32 %v876, %v999
          %v1133 = vmul.f32 %v877, %v1009
          %v1134 = vmul.f32 %v878, %v1019
          %v1135 = vmul.f32 %v879, %v1029
          %v1136 = vmul.f32 %v880, %v1039
          %v1137 = vmul.f32 %v881, %v1049
          %v1138 = vmul.f32 %v882, %v1059
          %v1139 = vmul.f32 %v883, %v1069
          %v1140 = vmul.f32 %v884, %v1079
          %v1141 = vmul.f32 %v885, %v1089
          %v1142 = vmul.f32 %v886, %v1099
          %v1143 = vmul.f32 %v887, %v1109
          %v1144 = vmul.f32 %v888, %v1119
          %v1145 = vmul.f32 %v889, %v1129
          %v1147 = vperm.slane %v817, 0
          %v1149 = vmul.f32 %v1130, %v1147
          %v1150 = vmul.f32 %v1131, %v1147
          %v1151 = vmul.f32 %v1132, %v1147
          %v1152 = vmul.f32 %v1133, %v1147
          %v1153 = vmul.f32 %v1134, %v1147
          %v1154 = vmul.f32 %v1135, %v1147
          %v1155 = vmul.f32 %v1136, %v1147
          %v1156 = vmul.f32 %v1137, %v1147
          %v1157 = vmul.f32 %v1138, %v1147
          %v1158 = vmul.f32 %v1139, %v1147
          %v1159 = vmul.f32 %v1140, %v1147
          %v1160 = vmul.f32 %v1141, %v1147
          %v1161 = vmul.f32 %v1142, %v1147
          %v1162 = vmul.f32 %v1143, %v1147
          %v1163 = vmul.f32 %v1144, %v1147
          %v1164 = vmul.f32 %v1145, %v1147
          %v1166 = vperm.slane %v818, 0
          %v1168 = vadd.f32 %v1149, %v1166
          %v1169 = vadd.f32 %v1150, %v1166
          %v1170 = vadd.f32 %v1151, %v1166
          %v1171 = vadd.f32 %v1152, %v1166
          %v1172 = vadd.f32 %v1153, %v1166
          %v1173 = vadd.f32 %v1154, %v1166
          %v1174 = vadd.f32 %v1155, %v1166
          %v1175 = vadd.f32 %v1156, %v1166
          %v1176 = vadd.f32 %v1157, %v1166
          %v1177 = vadd.f32 %v1158, %v1166
          %v1178 = vadd.f32 %v1159, %v1166
          %v1179 = vadd.f32 %v1160, %v1166
          %v1180 = vadd.f32 %v1161, %v1166
          %v1181 = vadd.f32 %v1162, %v1166
          %v1182 = vadd.f32 %v1163, %v1166
          %v1183 = vadd.f32 %v1164, %v1166
          %1184 = vst [vmem:[#allocation2] sm:$0xff] %v1168
          %1185 = vst [vmem:[#allocation2 + $0x8] sm:$0xff] %v1169
          %1186 = vst [vmem:[#allocation2 + $0x10] sm:$0xff] %v1170
          %1187 = vst [vmem:[#allocation2 + $0x18] sm:$0xff] %v1171
          %1188 = vst [vmem:[#allocation2 + $0x20] sm:$0xff] %v1172
          %1189 = vst [vmem:[#allocation2 + $0x28] sm:$0xff] %v1173
          %1190 = vst [vmem:[#allocation2 + $0x30] sm:$0xff] %v1174
          %1191 = vst [vmem:[#allocation2 + $0x38] sm:$0xff] %v1175
          %1192 = vst [vmem:[#allocation2 + $0x40] sm:$0xff] %v1176
          %1193 = vst [vmem:[#allocation2 + $0x48] sm:$0xff] %v1177
          %1194 = vst [vmem:[#allocation2 + $0x50] sm:$0xff] %v1178
          %1195 = vst [vmem:[#allocation2 + $0x58] sm:$0xff] %v1179
          %1196 = vst [vmem:[#allocation2 + $0x60] sm:$0xff] %v1180
          %1197 = vst [vmem:[#allocation2 + $0x68] sm:$0xff] %v1181
          %1198 = vst [vmem:[#allocation2 + $0x70] sm:$0xff] %v1182
          %1199 = vst [vmem:[#allocation2 + $0x78] sm:$0xff] %v1183
        $region96: #{finbert_forward.1} parent=91 // pred_fallthru
          _
        %v1200 = vld [vmem:[#allocation2] sm:$0xff]
        %v1201 = vld [vmem:[#allocation2 + $0x8] sm:$0xff]
        %v1202 = vld [vmem:[#allocation2 + $0x10] sm:$0xff]
        %v1203 = vld [vmem:[#allocation2 + $0x18] sm:$0xff]
        %v1204 = vld [vmem:[#allocation2 + $0x20] sm:$0xff]
        %v1205 = vld [vmem:[#allocation2 + $0x28] sm:$0xff]
        %v1206 = vld [vmem:[#allocation2 + $0x30] sm:$0xff]
        %v1207 = vld [vmem:[#allocation2 + $0x38] sm:$0xff]
        %v1208 = vld [vmem:[#allocation2 + $0x40] sm:$0xff]
        %v1209 = vld [vmem:[#allocation2 + $0x48] sm:$0xff]
        %v1210 = vld [vmem:[#allocation2 + $0x50] sm:$0xff]
        %v1211 = vld [vmem:[#allocation2 + $0x58] sm:$0xff]
        %v1212 = vld [vmem:[#allocation2 + $0x60] sm:$0xff]
        %v1213 = vld [vmem:[#allocation2 + $0x68] sm:$0xff]
        %v1214 = vld [vmem:[#allocation2 + $0x70] sm:$0xff]
        %v1215 = vld [vmem:[#allocation2 + $0x78] sm:$0xff]
        %v1216 = vld [vmem:[%s754] sm:$0xff]
        %v1217 = vld [vmem:[%s754 + $0x8] sm:$0xf]
        %v1218 = vld [vmem:[%s754 + $0xc] sm:$0xff]
        %v1219 = vld [vmem:[%s754 + $0x14] sm:$0xf]
        %v1220 = vld [vmem:[%s754 + $0x18] sm:$0xff]
        %v1221 = vld [vmem:[%s754 + $0x20] sm:$0xf]
        %v1222 = vld [vmem:[%s754 + $0x24] sm:$0xff]
        %v1223 = vld [vmem:[%s754 + $0x2c] sm:$0xf]
        %v1224 = vld [vmem:[%s754 + $0x30] sm:$0xff]
        %v1225 = vld [vmem:[%s754 + $0x38] sm:$0xf]
        %v1226 = vld [vmem:[%s754 + $0x3c] sm:$0xff]
        %v1227 = vld [vmem:[%s754 + $0x44] sm:$0xf]
        %v1228 = vld [vmem:[%s754 + $0x48] sm:$0xff]
        %v1229 = vld [vmem:[%s754 + $0x50] sm:$0xf]
        %v1230 = vld [vmem:[%s754 + $0x54] sm:$0xff]
        %v1231 = vld [vmem:[%s754 + $0x5c] sm:$0xf]
        %v1232 = vld [vmem:[%s754 + $0x60] sm:$0xff]
        %v1233 = vld [vmem:[%s754 + $0x68] sm:$0xf]
        %v1234 = vld [vmem:[%s754 + $0x6c] sm:$0xff]
        %v1235 = vld [vmem:[%s754 + $0x74] sm:$0xf]
        %v1236 = vld [vmem:[%s754 + $0x78] sm:$0xff]
        %v1237 = vld [vmem:[%s754 + $0x80] sm:$0xf]
        %v1238 = vld [vmem:[%s754 + $0x84] sm:$0xff]
        %v1239 = vld [vmem:[%s754 + $0x8c] sm:$0xf]
        %v1240 = vld [vmem:[%s754 + $0x90] sm:$0xff]
        %v1241 = vld [vmem:[%s754 + $0x98] sm:$0xf]
        %v1242 = vld [vmem:[%s754 + $0x9c] sm:$0xff]
        %v1243 = vld [vmem:[%s754 + $0xa4] sm:$0xf]
        %v1244 = vld [vmem:[%s754 + $0xa8] sm:$0xff]
        %v1245 = vld [vmem:[%s754 + $0xb0] sm:$0xf]
        %v1246 = vld [vmem:[%s754 + $0xb4] sm:$0xff]
        %v1247 = vld [vmem:[%s754 + $0xbc] sm:$0xf]
        %v1248 = vpack.c.bf16 %v1201, %v1200
        %v1249 = vpack.c.bf16 %v1203, %v1202
        %v1250 = vpack.c.bf16 %v1205, %v1204
        %v1251 = vpack.c.bf16 %v1207, %v1206
        %v1252 = vpack.c.bf16 %v1209, %v1208
        %v1253 = vpack.c.bf16 %v1211, %v1210
        %v1254 = vpack.c.bf16 %v1213, %v1212
        %v1255 = vpack.c.bf16 %v1215, %v1214
        %v1256 = vld [vmem:[%s758] sm:$0x7]
        %v1258 = vperm.slane %v1256, 0
        %v1259 = vperm.slane %v1256, 1
        %v1260 = vperm.slane %v1256, 2
        %v1296 = vunpack.c.l.b16 %v1216
        %v1297 = vunpack.c.h.b16 %v1216
        %v1298 = vunpack.c.l.b16 %v1217
        %v1299 = vunpack.c.l.b16 %v1218
        %v1300 = vunpack.c.h.b16 %v1218
        %v1301 = vunpack.c.l.b16 %v1219
        %v1302 = vunpack.c.l.b16 %v1220
        %v1303 = vunpack.c.h.b16 %v1220
        %v1304 = vunpack.c.l.b16 %v1221
        %v1305 = vunpack.c.l.b16 %v1222
        %v1306 = vunpack.c.h.b16 %v1222
        %v1307 = vunpack.c.l.b16 %v1223
        %v1308 = vunpack.c.l.b16 %v1224
        %v1309 = vunpack.c.h.b16 %v1224
        %v1310 = vunpack.c.l.b16 %v1225
        %v1311 = vunpack.c.l.b16 %v1226
        %v1312 = vunpack.c.h.b16 %v1226
        %v1313 = vunpack.c.l.b16 %v1227
        %v1314 = vunpack.c.l.b16 %v1228
        %v1315 = vunpack.c.h.b16 %v1228
        %v1316 = vunpack.c.l.b16 %v1229
        %v1317 = vunpack.c.l.b16 %v1230
        %v1318 = vunpack.c.h.b16 %v1230
        %v1319 = vunpack.c.l.b16 %v1231
        %v1320 = vunpack.c.l.b16 %v1232
        %v1321 = vunpack.c.h.b16 %v1232
        %v1322 = vunpack.c.l.b16 %v1233
        %v1323 = vunpack.c.l.b16 %v1234
        %v1324 = vunpack.c.h.b16 %v1234
        %v1325 = vunpack.c.l.b16 %v1235
        %v1326 = vunpack.c.l.b16 %v1236
        %v1327 = vunpack.c.h.b16 %v1236
        %v1328 = vunpack.c.l.b16 %v1237
        %v1329 = vunpack.c.l.b16 %v1238
        %v1330 = vunpack.c.h.b16 %v1238
        %v1331 = vunpack.c.l.b16 %v1239
        %v1332 = vunpack.c.l.b16 %v1240
        %v1333 = vunpack.c.h.b16 %v1240
        %v1334 = vunpack.c.l.b16 %v1241
        %v1335 = vunpack.c.l.b16 %v1242
        %v1336 = vunpack.c.h.b16 %v1242
        %v1337 = vunpack.c.l.b16 %v1243
        %v1338 = vunpack.c.l.b16 %v1244
        %v1339 = vunpack.c.h.b16 %v1244
        %v1340 = vunpack.c.l.b16 %v1245
        %v1341 = vunpack.c.l.b16 %v1246
        %v1342 = vunpack.c.h.b16 %v1246
        %v1343 = vunpack.c.l.b16 %v1247
        %v1344 = vpack.c.b16 %v1299, %v1296
        %v1345 = vpack.c.b16 %v1300, %v1297
        %v1346 = vpack.c.b16 %v1301, %v1298
        %v1347 = vpack.c.b16 %v1305, %v1302
        %v1348 = vpack.c.b16 %v1306, %v1303
        %v1349 = vpack.c.b16 %v1307, %v1304
        %v1350 = vpack.c.b16 %v1311, %v1308
        %v1351 = vpack.c.b16 %v1312, %v1309
        %v1352 = vpack.c.b16 %v1313, %v1310
        %v1353 = vpack.c.b16 %v1317, %v1314
        %v1354 = vpack.c.b16 %v1318, %v1315
        %v1355 = vpack.c.b16 %v1319, %v1316
        %v1356 = vpack.c.b16 %v1323, %v1320
        %v1357 = vpack.c.b16 %v1324, %v1321
        %v1358 = vpack.c.b16 %v1325, %v1322
        %v1359 = vpack.c.b16 %v1329, %v1326
        %v1360 = vpack.c.b16 %v1330, %v1327
        %v1361 = vpack.c.b16 %v1331, %v1328
        %v1362 = vpack.c.b16 %v1335, %v1332
        %v1363 = vpack.c.b16 %v1336, %v1333
        %v1364 = vpack.c.b16 %v1337, %v1334
        %v1365 = vpack.c.b16 %v1341, %v1338
        %v1366 = vpack.c.b16 %v1342, %v1339
        %v1367 = vpack.c.b16 %v1343, %v1340
        %1392 = vmatpush.bf16.msra.mxu0 %v1365
        %1393 = vmatpush.bf16.msra.mxu0 %v1362
        %1394 = vmatpush.bf16.msra.mxu0 %v1359
        %1395 = vmatpush.bf16.msra.mxu0 %v1356
        %1396 = vmatpush.bf16.msra.mxu0 %v1353
        %1397 = vmatpush.bf16.msra.mxu0 %v1350
        %1398 = vmatpush.bf16.msra.mxu0 %v1347
        %1399 = vmatpush.bf16.msra.mxu0 %v1344
        %1400 = vmatmul.bf16.gmra.mxu0 %v1248
        %v1401 = vpop.f32.mrf.mxu0
        %v1402 = vadd.f32 %v1258, %v1401
        %v1403 = vpop.f32.mrf.mxu0
        %v1404 = vadd.f32 %v1258, %v1403
        %1405 = vmatmul.bf16.gmra.mxu0 %v1249
        %v1406 = vpop.f32.mrf.mxu0
        %v1407 = vadd.f32 %v1258, %v1406
        %v1408 = vpop.f32.mrf.mxu0
        %v1409 = vadd.f32 %v1258, %v1408
        %1410 = vmatmul.bf16.gmra.mxu0 %v1250
        %v1411 = vpop.f32.mrf.mxu0
        %v1412 = vadd.f32 %v1258, %v1411
        %v1413 = vpop.f32.mrf.mxu0
        %v1414 = vadd.f32 %v1258, %v1413
        %1415 = vmatmul.bf16.gmra.mxu0 %v1251
        %v1416 = vpop.f32.mrf.mxu0
        %v1417 = vadd.f32 %v1258, %v1416
        %v1418 = vpop.f32.mrf.mxu0
        %v1419 = vadd.f32 %v1258, %v1418
        %1420 = vmatmul.bf16.gmra.mxu0 %v1252
        %v1421 = vpop.f32.mrf.mxu0
        %v1422 = vadd.f32 %v1258, %v1421
        %v1423 = vpop.f32.mrf.mxu0
        %v1424 = vadd.f32 %v1258, %v1423
        %1425 = vmatmul.bf16.gmra.mxu0 %v1253
        %v1426 = vpop.f32.mrf.mxu0
        %v1427 = vadd.f32 %v1258, %v1426
        %v1428 = vpop.f32.mrf.mxu0
        %v1429 = vadd.f32 %v1258, %v1428
        %1430 = vmatmul.bf16.gmra.mxu0 %v1254
        %v1431 = vpop.f32.mrf.mxu0
        %v1432 = vadd.f32 %v1258, %v1431
        %v1433 = vpop.f32.mrf.mxu0
        %v1434 = vadd.f32 %v1258, %v1433
        %1435 = vmatmul.bf16.gmra.mxu0 %v1255
        %v1436 = vpop.f32.mrf.mxu0
        %v1437 = vadd.f32 %v1258, %v1436
        %v1438 = vpop.f32.mrf.mxu0
        %v1439 = vadd.f32 %v1258, %v1438
        %1440 = vdwg.mxu0
        %1441 = vmatpush.bf16.msra.mxu0 %v1366
        %1442 = vmatpush.bf16.msra.mxu0 %v1363
        %1443 = vmatpush.bf16.msra.mxu0 %v1360
        %1444 = vmatpush.bf16.msra.mxu0 %v1357
        %1445 = vmatpush.bf16.msra.mxu0 %v1354
        %1446 = vmatpush.bf16.msra.mxu0 %v1351
        %1447 = vmatpush.bf16.msra.mxu0 %v1348
        %1448 = vmatpush.bf16.msra.mxu0 %v1345
        %1449 = vmatmul.bf16.gmra.mxu0 %v1248
        %v1450 = vpop.f32.mrf.mxu0
        %v1451 = vadd.f32 %v1259, %v1450
        %v1452 = vpop.f32.mrf.mxu0
        %v1453 = vadd.f32 %v1259, %v1452
        %1454 = vmatmul.bf16.gmra.mxu0 %v1249
        %v1455 = vpop.f32.mrf.mxu0
        %v1456 = vadd.f32 %v1259, %v1455
        %v1457 = vpop.f32.mrf.mxu0
        %v1458 = vadd.f32 %v1259, %v1457
        %1459 = vmatmul.bf16.gmra.mxu0 %v1250
        %v1460 = vpop.f32.mrf.mxu0
        %v1461 = vadd.f32 %v1259, %v1460
        %v1462 = vpop.f32.mrf.mxu0
        %v1463 = vadd.f32 %v1259, %v1462
        %1464 = vmatmul.bf16.gmra.mxu0 %v1251
        %v1465 = vpop.f32.mrf.mxu0
        %v1466 = vadd.f32 %v1259, %v1465
        %v1467 = vpop.f32.mrf.mxu0
        %v1468 = vadd.f32 %v1259, %v1467
        %1469 = vmatmul.bf16.gmra.mxu0 %v1252
        %v1470 = vpop.f32.mrf.mxu0
        %v1471 = vadd.f32 %v1259, %v1470
        %v1472 = vpop.f32.mrf.mxu0
        %v1473 = vadd.f32 %v1259, %v1472
        %1474 = vmatmul.bf16.gmra.mxu0 %v1253
        %v1475 = vpop.f32.mrf.mxu0
        %v1476 = vadd.f32 %v1259, %v1475
        %v1477 = vpop.f32.mrf.mxu0
        %v1478 = vadd.f32 %v1259, %v1477
        %1479 = vmatmul.bf16.gmra.mxu0 %v1254
        %v1480 = vpop.f32.mrf.mxu0
        %v1481 = vadd.f32 %v1259, %v1480
        %v1482 = vpop.f32.mrf.mxu0
        %v1483 = vadd.f32 %v1259, %v1482
        %1484 = vmatmul.bf16.gmra.mxu0 %v1255
        %v1485 = vpop.f32.mrf.mxu0
        %v1486 = vadd.f32 %v1259, %v1485
        %v1487 = vpop.f32.mrf.mxu0
        %v1488 = vadd.f32 %v1259, %v1487
        %1489 = vdwg.mxu0
        %1490 = vmatpush.bf16.msra.mxu0 %v1367
        %1491 = vmatpush.bf16.msra.mxu0 %v1364
        %1492 = vmatpush.bf16.msra.mxu0 %v1361
        %1493 = vmatpush.bf16.msra.mxu0 %v1358
        %1494 = vmatpush.bf16.msra.mxu0 %v1355
        %1495 = vmatpush.bf16.msra.mxu0 %v1352
        %1496 = vmatpush.bf16.msra.mxu0 %v1349
        %1497 = vmatpush.bf16.msra.mxu0 %v1346
        %1498 = vmatmul.bf16.gmra.mxu0 %v1248
        %v1499 = vpop.f32.mrf.mxu0
        %v1500 = vadd.f32 %v1260, %v1499
        %v1501 = vpop.f32.mrf.mxu0
        %v1502 = vadd.f32 %v1260, %v1501
        %1503 = vmatmul.bf16.gmra.mxu0 %v1249
        %v1504 = vpop.f32.mrf.mxu0
        %v1505 = vadd.f32 %v1260, %v1504
        %v1506 = vpop.f32.mrf.mxu0
        %v1507 = vadd.f32 %v1260, %v1506
        %1508 = vmatmul.bf16.gmra.mxu0 %v1250
        %v1509 = vpop.f32.mrf.mxu0
        %v1510 = vadd.f32 %v1260, %v1509
        %v1511 = vpop.f32.mrf.mxu0
        %v1512 = vadd.f32 %v1260, %v1511
        %1513 = vmatmul.bf16.gmra.mxu0 %v1251
        %v1514 = vpop.f32.mrf.mxu0
        %v1515 = vadd.f32 %v1260, %v1514
        %v1516 = vpop.f32.mrf.mxu0
        %v1517 = vadd.f32 %v1260, %v1516
        %1518 = vmatmul.bf16.gmra.mxu0 %v1252
        %v1519 = vpop.f32.mrf.mxu0
        %v1520 = vadd.f32 %v1260, %v1519
        %v1521 = vpop.f32.mrf.mxu0
        %v1522 = vadd.f32 %v1260, %v1521
        %1523 = vmatmul.bf16.gmra.mxu0 %v1253
        %v1524 = vpop.f32.mrf.mxu0
        %v1525 = vadd.f32 %v1260, %v1524
        %v1526 = vpop.f32.mrf.mxu0
        %v1527 = vadd.f32 %v1260, %v1526
        %1528 = vmatmul.bf16.gmra.mxu0 %v1254
        %v1529 = vpop.f32.mrf.mxu0
        %v1530 = vadd.f32 %v1260, %v1529
        %v1531 = vpop.f32.mrf.mxu0
        %v1532 = vadd.f32 %v1260, %v1531
        %1533 = vmatmul.bf16.gmra.mxu0 %v1255
        %v1534 = vpop.f32.mrf.mxu0
        %v1535 = vadd.f32 %v1260, %v1534
        %v1536 = vpop.f32.mrf.mxu0
        %v1537 = vadd.f32 %v1260, %v1536
        %1538 = vdwg.mxu0
        %v1539 = vld [vmem:[%s749] sm:$0x3]
        %v1540 = vsub.f32 1.0, %v1539
        %v1541 = vmul.f32 %v1540, -1e+09
        %v1543 = vrot.slane %v1541, 1
        %v1544 = vpack.c.bf16 %v1402, %v1402
        %v1545 = vpack.c.bf16 %v1404, %v1404
        %v1546 = vpack.c.bf16 %v1407, %v1407
        %v1547 = vpack.c.bf16 %v1409, %v1409
        %v1548 = vpack.c.bf16 %v1412, %v1412
        %v1549 = vpack.c.bf16 %v1414, %v1414
        %v1550 = vpack.c.bf16 %v1417, %v1417
        %v1551 = vpack.c.bf16 %v1419, %v1419
        %v1552 = vpack.c.bf16 %v1422, %v1422
        %v1553 = vpack.c.bf16 %v1424, %v1424
        %v1554 = vpack.c.bf16 %v1427, %v1427
        %v1555 = vpack.c.bf16 %v1429, %v1429
        %v1556 = vpack.c.bf16 %v1432, %v1432
        %v1557 = vpack.c.bf16 %v1434, %v1434
        %v1558 = vpack.c.bf16 %v1437, %v1437
        %v1559 = vpack.c.bf16 %v1439, %v1439
        %v1560 = vpack.c.bf16 %v1451, %v1451
        %v1561 = vpack.c.bf16 %v1453, %v1453
        %v1562 = vpack.c.bf16 %v1456, %v1456
        %v1563 = vpack.c.bf16 %v1458, %v1458
        %v1564 = vpack.c.bf16 %v1461, %v1461
        %v1565 = vpack.c.bf16 %v1463, %v1463
        %v1566 = vpack.c.bf16 %v1466, %v1466
        %v1567 = vpack.c.bf16 %v1468, %v1468
        %v1568 = vpack.c.bf16 %v1471, %v1471
        %v1569 = vpack.c.bf16 %v1473, %v1473
        %v1570 = vpack.c.bf16 %v1476, %v1476
        %v1571 = vpack.c.bf16 %v1478, %v1478
        %v1572 = vpack.c.bf16 %v1481, %v1481
        %v1573 = vpack.c.bf16 %v1483, %v1483
        %v1574 = vpack.c.bf16 %v1486, %v1486
        %v1575 = vpack.c.bf16 %v1488, %v1488
        %v1576 = vpack.c.bf16 %v1500, %v1500
        %v1577 = vpack.c.bf16 %v1502, %v1502
        %v1578 = vpack.c.bf16 %v1505, %v1505
        %v1579 = vpack.c.bf16 %v1507, %v1507
        %v1580 = vpack.c.bf16 %v1510, %v1510
        %v1581 = vpack.c.bf16 %v1512, %v1512
        %v1582 = vpack.c.bf16 %v1515, %v1515
        %v1583 = vpack.c.bf16 %v1517, %v1517
        %v1584 = vpack.c.bf16 %v1520, %v1520
        %v1585 = vpack.c.bf16 %v1522, %v1522
        %v1586 = vpack.c.bf16 %v1525, %v1525
        %v1587 = vpack.c.bf16 %v1527, %v1527
        %v1588 = vpack.c.bf16 %v1530, %v1530
        %v1589 = vpack.c.bf16 %v1532, %v1532
        %v1590 = vpack.c.bf16 %v1535, %v1535
        %v1591 = vpack.c.bf16 %v1537, %v1537
        %v1600 = vunpack.c.l.b16 %v1544
        %v1601 = vunpack.c.l.b16 %v1545
        %v1602 = vunpack.c.l.b16 %v1546
        %v1603 = vunpack.c.l.b16 %v1547
        %v1604 = vunpack.c.l.b16 %v1548
        %v1605 = vunpack.c.l.b16 %v1549
        %v1606 = vunpack.c.l.b16 %v1550
        %v1607 = vunpack.c.l.b16 %v1551
        %v1608 = vpack.c.b16 %v1601, %v1600
        %v1609 = vpack.c.b16 %v1603, %v1602
        %v1610 = vpack.c.b16 %v1605, %v1604
        %v1611 = vpack.c.b16 %v1607, %v1606
        %v1620 = vunpack.c.l.b16 %v1560
        %v1621 = vunpack.c.l.b16 %v1561
        %v1622 = vunpack.c.l.b16 %v1562
        %v1623 = vunpack.c.l.b16 %v1563
        %v1624 = vunpack.c.l.b16 %v1564
        %v1625 = vunpack.c.l.b16 %v1565
        %v1626 = vunpack.c.l.b16 %v1566
        %v1627 = vunpack.c.l.b16 %v1567
        %v1628 = vpack.c.b16 %v1621, %v1620
        %v1629 = vpack.c.b16 %v1623, %v1622
        %v1630 = vpack.c.b16 %v1625, %v1624
        %v1631 = vpack.c.b16 %v1627, %v1626
        %vm1632 = vcmask 523264
        %v1634 = vsel %vm1632, %v1608, 0
        %v1637 = vsel %vm1632, %v1609, 0
        %v1640 = vsel %vm1632, %v1610, 0
        %v1643 = vsel %vm1632, %v1611, 0
        %v1646 = vsel %vm1632, %v1628, 0
        %v1649 = vsel %vm1632, %v1629, 0
        %v1652 = vsel %vm1632, %v1630, 0
        %v1655 = vsel %vm1632, %v1631, 0
        %1657 = vmatpush.bf16.xpose.msra.mxu0 0
        %1658 = vmatpush.bf16.xpose.msra.mxu0 0
        %1659 = vmatpush.bf16.xpose.msra.mxu0 0
        %1660 = vmatpush.bf16.xpose.msra.mxu0 0
        %1661 = vmatpush.bf16.xpose.msra.mxu0 %v1655
        %1662 = vmatpush.bf16.xpose.msra.mxu0 %v1652
        %1663 = vmatpush.bf16.xpose.msra.mxu0 %v1649
        %1664 = vmatpush.bf16.xpose.msra.mxu0 %v1646
        %1665 = vmatmul.bf16.gmra.mxu0 %v1634
        %v1666 = vpop.f32.mrf.mxu0
        %v1667 = vadd.f32 0.0, %v1666
        %v1668 = vpop.f32.mrf.mxu0
        %v1669 = vadd.f32 0.0, %v1668
        %1670 = vmatmul.bf16.gmra.mxu0 %v1637
        %v1671 = vpop.f32.mrf.mxu0
        %v1672 = vadd.f32 0.0, %v1671
        %v1673 = vpop.f32.mrf.mxu0
        %v1674 = vadd.f32 0.0, %v1673
        %1675 = vmatmul.bf16.gmra.mxu0 %v1640
        %v1676 = vpop.f32.mrf.mxu0
        %v1677 = vadd.f32 0.0, %v1676
        %v1678 = vpop.f32.mrf.mxu0
        %v1679 = vadd.f32 0.0, %v1678
        %1680 = vmatmul.bf16.gmra.mxu0 %v1643
        %v1681 = vpop.f32.mrf.mxu0
        %v1682 = vadd.f32 0.0, %v1681
        %v1683 = vpop.f32.mrf.mxu0
        %v1684 = vadd.f32 0.0, %v1683
        %1685 = vdwg.mxu0
        %v1694 = vunpack.c.l.b16 %v1552
        %v1695 = vunpack.c.l.b16 %v1553
        %v1696 = vunpack.c.l.b16 %v1554
        %v1697 = vunpack.c.l.b16 %v1555
        %v1698 = vunpack.c.l.b16 %v1556
        %v1699 = vunpack.c.l.b16 %v1557
        %v1700 = vunpack.c.l.b16 %v1558
        %v1701 = vunpack.c.l.b16 %v1559
        %v1702 = vpack.c.b16 %v1695, %v1694
        %v1703 = vpack.c.b16 %v1697, %v1696
        %v1704 = vpack.c.b16 %v1699, %v1698
        %v1705 = vpack.c.b16 %v1701, %v1700
        %v1714 = vunpack.c.l.b16 %v1568
        %v1715 = vunpack.c.l.b16 %v1569
        %v1716 = vunpack.c.l.b16 %v1570
        %v1717 = vunpack.c.l.b16 %v1571
        %v1718 = vunpack.c.l.b16 %v1572
        %v1719 = vunpack.c.l.b16 %v1573
        %v1720 = vunpack.c.l.b16 %v1574
        %v1721 = vunpack.c.l.b16 %v1575
        %v1722 = vpack.c.b16 %v1715, %v1714
        %v1723 = vpack.c.b16 %v1717, %v1716
        %v1724 = vpack.c.b16 %v1719, %v1718
        %v1725 = vpack.c.b16 %v1721, %v1720
        %v1727 = vsel %vm1632, %v1702, 0
        %v1730 = vsel %vm1632, %v1703, 0
        %v1733 = vsel %vm1632, %v1704, 0
        %v1736 = vsel %vm1632, %v1705, 0
        %v1739 = vsel %vm1632, %v1722, 0
        %v1742 = vsel %vm1632, %v1723, 0
        %v1745 = vsel %vm1632, %v1724, 0
        %v1748 = vsel %vm1632, %v1725, 0
        %1750 = vmatpush.bf16.xpose.msra.mxu0 0
        %1751 = vmatpush.bf16.xpose.msra.mxu0 0
        %1752 = vmatpush.bf16.xpose.msra.mxu0 0
        %1753 = vmatpush.bf16.xpose.msra.mxu0 0
        %1754 = vmatpush.bf16.xpose.msra.mxu0 %v1748
        %1755 = vmatpush.bf16.xpose.msra.mxu0 %v1745
        %1756 = vmatpush.bf16.xpose.msra.mxu0 %v1742
        %1757 = vmatpush.bf16.xpose.msra.mxu0 %v1739
        %1758 = vmatmul.bf16.gmra.mxu0 %v1727
        %v1759 = vpop.f32.mrf.mxu0
        %v1760 = vadd.f32 0.0, %v1759
        %v1761 = vpop.f32.mrf.mxu0
        %v1762 = vadd.f32 0.0, %v1761
        %1763 = vmatmul.bf16.gmra.mxu0 %v1730
        %v1764 = vpop.f32.mrf.mxu0
        %v1765 = vadd.f32 0.0, %v1764
        %v1766 = vpop.f32.mrf.mxu0
        %v1767 = vadd.f32 0.0, %v1766
        %1768 = vmatmul.bf16.gmra.mxu0 %v1733
        %v1769 = vpop.f32.mrf.mxu0
        %v1770 = vadd.f32 0.0, %v1769
        %v1771 = vpop.f32.mrf.mxu0
        %v1772 = vadd.f32 0.0, %v1771
        %1773 = vmatmul.bf16.gmra.mxu0 %v1736
        %v1774 = vpop.f32.mrf.mxu0
        %v1775 = vadd.f32 0.0, %v1774
        %v1776 = vpop.f32.mrf.mxu0
        %v1777 = vadd.f32 0.0, %v1776
        %1778 = vdwg.mxu0
        %v1779 = vmul.f32 %v1667, 0.125
        %v1780 = vmul.f32 %v1669, 0.125
        %v1781 = vmul.f32 %v1672, 0.125
        %v1782 = vmul.f32 %v1674, 0.125
        %v1783 = vmul.f32 %v1677, 0.125
        %v1784 = vmul.f32 %v1679, 0.125
        %v1785 = vmul.f32 %v1682, 0.125
        %v1786 = vmul.f32 %v1684, 0.125
        %v1787 = vmul.f32 %v1760, 0.125
        %v1788 = vmul.f32 %v1762, 0.125
        %v1789 = vmul.f32 %v1765, 0.125
        %v1790 = vmul.f32 %v1767, 0.125
        %v1791 = vmul.f32 %v1770, 0.125
        %v1792 = vmul.f32 %v1772, 0.125
        %v1793 = vmul.f32 %v1775, 0.125
        %v1794 = vmul.f32 %v1777, 0.125
        %v1795 = vperm.slane %v1541, 0
        %v1796 = vperm.slane %v1543, 0
        %v1799 = vadd.f32 %v1779, %v1795
        %v1800 = vadd.f32 %v1780, %v1795
        %v1801 = vadd.f32 %v1781, %v1795
        %v1802 = vadd.f32 %v1782, %v1795
        %v1803 = vadd.f32 %v1783, %v1795
        %v1804 = vadd.f32 %v1784, %v1795
        %v1805 = vadd.f32 %v1785, %v1795
        %v1806 = vadd.f32 %v1786, %v1795
        %v1807 = vadd.f32 %v1787, %v1796
        %v1808 = vadd.f32 %v1788, %v1796
        %v1809 = vadd.f32 %v1789, %v1796
        %v1810 = vadd.f32 %v1790, %v1796
        %v1811 = vadd.f32 %v1791, %v1796
        %v1812 = vadd.f32 %v1792, %v1796
        %v1813 = vadd.f32 %v1793, %v1796
        %v1814 = vadd.f32 %v1794, %v1796
        %v1815 = vsel %vm1632, %v1799, -inf
        %1816 = vmax.xlane.f32.xlu0 %v1815
        %v1817 = vpop.xlane.xlu0 %1816
        %v1818 = vsel %vm1632, %v1800, -inf
        %1819 = vmax.xlane.f32.xlu0 %v1818
        %v1820 = vpop.xlane.xlu0 %1819
        %v1821 = vsel %vm1632, %v1801, -inf
        %1822 = vmax.xlane.f32.xlu0 %v1821
        %v1823 = vpop.xlane.xlu0 %1822
        %v1824 = vsel %vm1632, %v1802, -inf
        %1825 = vmax.xlane.f32.xlu0 %v1824
        %v1826 = vpop.xlane.xlu0 %1825
        %v1827 = vsel %vm1632, %v1803, -inf
        %1828 = vmax.xlane.f32.xlu0 %v1827
        %v1829 = vpop.xlane.xlu0 %1828
        %v1830 = vsel %vm1632, %v1804, -inf
        %1831 = vmax.xlane.f32.xlu0 %v1830
        %v1832 = vpop.xlane.xlu0 %1831
        %v1833 = vsel %vm1632, %v1805, -inf
        %1834 = vmax.xlane.f32.xlu0 %v1833
        %v1835 = vpop.xlane.xlu0 %1834
        %v1836 = vsel %vm1632, %v1806, -inf
        %1837 = vmax.xlane.f32.xlu0 %v1836
        %v1838 = vpop.xlane.xlu0 %1837
        %v1839 = vsel %vm1632, %v1807, -inf
        %1840 = vmax.xlane.f32.xlu0 %v1839
        %v1841 = vpop.xlane.xlu0 %1840
        %v1842 = vsel %vm1632, %v1808, -inf
        %1843 = vmax.xlane.f32.xlu0 %v1842
        %v1844 = vpop.xlane.xlu0 %1843
        %v1845 = vsel %vm1632, %v1809, -inf
        %1846 = vmax.xlane.f32.xlu0 %v1845
        %v1847 = vpop.xlane.xlu0 %1846
        %v1848 = vsel %vm1632, %v1810, -inf
        %1849 = vmax.xlane.f32.xlu0 %v1848
        %v1850 = vpop.xlane.xlu0 %1849
        %v1851 = vsel %vm1632, %v1811, -inf
        %1852 = vmax.xlane.f32.xlu0 %v1851
        %v1853 = vpop.xlane.xlu0 %1852
        %v1854 = vsel %vm1632, %v1812, -inf
        %1855 = vmax.xlane.f32.xlu0 %v1854
        %v1856 = vpop.xlane.xlu0 %1855
        %v1857 = vsel %vm1632, %v1813, -inf
        %1858 = vmax.xlane.f32.xlu0 %v1857
        %v1859 = vpop.xlane.xlu0 %1858
        %v1860 = vsel %vm1632, %v1814, -inf
        %1861 = vmax.xlane.f32.xlu0 %v1860
        %v1862 = vpop.xlane.xlu0 %1861
        %v1863 = vsub.f32 %v1799, %v1817
        %v1864 = vsub.f32 %v1800, %v1820
        %v1865 = vsub.f32 %v1801, %v1823
        %v1866 = vsub.f32 %v1802, %v1826
        %v1867 = vsub.f32 %v1803, %v1829
        %v1868 = vsub.f32 %v1804, %v1832
        %v1869 = vsub.f32 %v1805, %v1835
        %v1870 = vsub.f32 %v1806, %v1838
        %v1871 = vsub.f32 %v1807, %v1841
        %v1872 = vsub.f32 %v1808, %v1844
        %v1873 = vsub.f32 %v1809, %v1847
        %v1874 = vsub.f32 %v1810, %v1850
        %v1875 = vsub.f32 %v1811, %v1853
        %v1876 = vsub.f32 %v1812, %v1856
        %v1877 = vsub.f32 %v1813, %v1859
        %v1878 = vsub.f32 %v1814, %v1862
        %v1879 = vmul.f32 %v1863, 1.442695
        %v1880 = vpow.pop %v1879
        %v1881 = vmul.f32 %v1864, 1.442695
        %v1882 = vpow.pop %v1881
        %v1883 = vmul.f32 %v1865, 1.442695
        %v1884 = vpow.pop %v1883
        %v1885 = vmul.f32 %v1866, 1.442695
        %v1886 = vpow.pop %v1885
        %v1887 = vmul.f32 %v1867, 1.442695
        %v1888 = vpow.pop %v1887
        %v1889 = vmul.f32 %v1868, 1.442695
        %v1890 = vpow.pop %v1889
        %v1891 = vmul.f32 %v1869, 1.442695
        %v1892 = vpow.pop %v1891
        %v1893 = vmul.f32 %v1870, 1.442695
        %v1894 = vpow.pop %v1893
        %v1895 = vmul.f32 %v1871, 1.442695
        %v1896 = vpow.pop %v1895
        %v1897 = vmul.f32 %v1872, 1.442695
        %v1898 = vpow.pop %v1897
        %v1899 = vmul.f32 %v1873, 1.442695
        %v1900 = vpow.pop %v1899
        %v1901 = vmul.f32 %v1874, 1.442695
        %v1902 = vpow.pop %v1901
        %v1903 = vmul.f32 %v1875, 1.442695
        %v1904 = vpow.pop %v1903
        %v1905 = vmul.f32 %v1876, 1.442695
        %v1906 = vpow.pop %v1905
        %v1907 = vmul.f32 %v1877, 1.442695
        %v1908 = vpow.pop %v1907
        %v1909 = vmul.f32 %v1878, 1.442695
        %v1910 = vpow.pop %v1909
        %v1911 = vsel %vm1632, %v1880, 0.0
        %1912 = vadd.xlane.f32.xlu0 %v1911
        %v1913 = vpop.xlane.xlu0 %1912
        %v1914 = vsel %vm1632, %v1882, 0.0
        %1915 = vadd.xlane.f32.xlu0 %v1914
        %v1916 = vpop.xlane.xlu0 %1915
        %v1917 = vsel %vm1632, %v1884, 0.0
        %1918 = vadd.xlane.f32.xlu0 %v1917
        %v1919 = vpop.xlane.xlu0 %1918
        %v1920 = vsel %vm1632, %v1886, 0.0
        %1921 = vadd.xlane.f32.xlu0 %v1920
        %v1922 = vpop.xlane.xlu0 %1921
        %v1923 = vsel %vm1632, %v1888, 0.0
        %1924 = vadd.xlane.f32.xlu0 %v1923
        %v1925 = vpop.xlane.xlu0 %1924
        %v1926 = vsel %vm1632, %v1890, 0.0
        %1927 = vadd.xlane.f32.xlu0 %v1926
        %v1928 = vpop.xlane.xlu0 %1927
        %v1929 = vsel %vm1632, %v1892, 0.0
        %1930 = vadd.xlane.f32.xlu0 %v1929
        %v1931 = vpop.xlane.xlu0 %1930
        %v1932 = vsel %vm1632, %v1894, 0.0
        %1933 = vadd.xlane.f32.xlu0 %v1932
        %v1934 = vpop.xlane.xlu0 %1933
        %v1935 = vsel %vm1632, %v1896, 0.0
        %1936 = vadd.xlane.f32.xlu0 %v1935
        %v1937 = vpop.xlane.xlu0 %1936
        %v1938 = vsel %vm1632, %v1898, 0.0
        %1939 = vadd.xlane.f32.xlu0 %v1938
        %v1940 = vpop.xlane.xlu0 %1939
        %v1941 = vsel %vm1632, %v1900, 0.0
        %1942 = vadd.xlane.f32.xlu0 %v1941
        %v1943 = vpop.xlane.xlu0 %1942
        %v1944 = vsel %vm1632, %v1902, 0.0
        %1945 = vadd.xlane.f32.xlu0 %v1944
        %v1946 = vpop.xlane.xlu0 %1945
        %v1947 = vsel %vm1632, %v1904, 0.0
        %1948 = vadd.xlane.f32.xlu0 %v1947
        %v1949 = vpop.xlane.xlu0 %1948
        %v1950 = vsel %vm1632, %v1906, 0.0
        %1951 = vadd.xlane.f32.xlu0 %v1950
        %v1952 = vpop.xlane.xlu0 %1951
        %v1953 = vsel %vm1632, %v1908, 0.0
        %1954 = vadd.xlane.f32.xlu0 %v1953
        %v1955 = vpop.xlane.xlu0 %1954
        %v1956 = vsel %vm1632, %v1910, 0.0
        %1957 = vadd.xlane.f32.xlu0 %v1956
        %v1958 = vpop.xlane.xlu0 %1957
        %v1959 = vrcp.pop %v1913
        %v1960 = vrcp.pop %v1916
        %v1961 = vrcp.pop %v1919
        %v1962 = vrcp.pop %v1922
        %v1963 = vrcp.pop %v1925
        %v1964 = vrcp.pop %v1928
        %v1965 = vrcp.pop %v1931
        %v1966 = vrcp.pop %v1934
        %v1967 = vrcp.pop %v1937
        %v1968 = vrcp.pop %v1940
        %v1969 = vrcp.pop %v1943
        %v1970 = vrcp.pop %v1946
        %v1971 = vrcp.pop %v1949
        %v1972 = vrcp.pop %v1952
        %v1973 = vrcp.pop %v1955
        %v1974 = vrcp.pop %v1958
        %v1975 = vmul.f32 %v1880, %v1959
        %v1976 = vmul.f32 %v1882, %v1960
        %v1977 = vmul.f32 %v1884, %v1961
        %v1978 = vmul.f32 %v1886, %v1962
        %v1979 = vmul.f32 %v1888, %v1963
        %v1980 = vmul.f32 %v1890, %v1964
        %v1981 = vmul.f32 %v1892, %v1965
        %v1982 = vmul.f32 %v1894, %v1966
        %v1983 = vmul.f32 %v1896, %v1967
        %v1984 = vmul.f32 %v1898, %v1968
        %v1985 = vmul.f32 %v1900, %v1969
        %v1986 = vmul.f32 %v1902, %v1970
        %v1987 = vmul.f32 %v1904, %v1971
        %v1988 = vmul.f32 %v1906, %v1972
        %v1989 = vmul.f32 %v1908, %v1973
        %v1990 = vmul.f32 %v1910, %v1974
        %v1991 = vpack.c.bf16 %v1975, %v1975
        %v1992 = vpack.c.bf16 %v1976, %v1976
        %v1993 = vpack.c.bf16 %v1977, %v1977
        %v1994 = vpack.c.bf16 %v1978, %v1978
        %v1995 = vpack.c.bf16 %v1979, %v1979
        %v1996 = vpack.c.bf16 %v1980, %v1980
        %v1997 = vpack.c.bf16 %v1981, %v1981
        %v1998 = vpack.c.bf16 %v1982, %v1982
        %v1999 = vpack.c.bf16 %v1983, %v1983
        %v2000 = vpack.c.bf16 %v1984, %v1984
        %v2001 = vpack.c.bf16 %v1985, %v1985
        %v2002 = vpack.c.bf16 %v1986, %v1986
        %v2003 = vpack.c.bf16 %v1987, %v1987
        %v2004 = vpack.c.bf16 %v1988, %v1988
        %v2005 = vpack.c.bf16 %v1989, %v1989
        %v2006 = vpack.c.bf16 %v1990, %v1990
        %v2015 = vunpack.c.l.b16 %v1991
        %v2016 = vunpack.c.l.b16 %v1992
        %v2017 = vunpack.c.l.b16 %v1993
        %v2018 = vunpack.c.l.b16 %v1994
        %v2019 = vunpack.c.l.b16 %v1995
        %v2020 = vunpack.c.l.b16 %v1996
        %v2021 = vunpack.c.l.b16 %v1997
        %v2022 = vunpack.c.l.b16 %v1998
        %v2023 = vpack.c.b16 %v2016, %v2015
        %v2024 = vpack.c.b16 %v2018, %v2017
        %v2025 = vpack.c.b16 %v2020, %v2019
        %v2026 = vpack.c.b16 %v2022, %v2021
        %v2035 = vunpack.c.l.b16 %v1576
        %v2036 = vunpack.c.l.b16 %v1577
        %v2037 = vunpack.c.l.b16 %v1578
        %v2038 = vunpack.c.l.b16 %v1579
        %v2039 = vunpack.c.l.b16 %v1580
        %v2040 = vunpack.c.l.b16 %v1581
        %v2041 = vunpack.c.l.b16 %v1582
        %v2042 = vunpack.c.l.b16 %v1583
        %v2043 = vpack.c.b16 %v2036, %v2035
        %v2044 = vpack.c.b16 %v2038, %v2037
        %v2045 = vpack.c.b16 %v2040, %v2039
        %v2046 = vpack.c.b16 %v2042, %v2041
        %v2052 = vsel %vm1632, %v2023, 0
        %v2055 = vsel %vm1632, %v2024, 0
        %v2058 = vsel %vm1632, %v2025, 0
        %v2061 = vsel %vm1632, %v2026, 0
        %2063 = vmatpush.bf16.msra.mxu0 0
        %2064 = vmatpush.bf16.msra.mxu0 0
        %2065 = vmatpush.bf16.msra.mxu0 0
        %2066 = vmatpush.bf16.msra.mxu0 0
        %2067 = vmatpush.bf16.msra.mxu0 %v2046
        %2068 = vmatpush.bf16.msra.mxu0 %v2045
        %2069 = vmatpush.bf16.msra.mxu0 %v2044
        %2070 = vmatpush.bf16.msra.mxu0 %v2043
        %2071 = vmatmul.bf16.gmra.mxu0 %v2052
        %v2072 = vpop.f32.mrf.mxu0
        %v2073 = vadd.f32 0.0, %v2072
        %v2074 = vpop.f32.mrf.mxu0
        %v2075 = vadd.f32 0.0, %v2074
        %2076 = vmatmul.bf16.gmra.mxu0 %v2055
        %v2077 = vpop.f32.mrf.mxu0
        %v2078 = vadd.f32 0.0, %v2077
        %v2079 = vpop.f32.mrf.mxu0
        %v2080 = vadd.f32 0.0, %v2079
        %2081 = vmatmul.bf16.gmra.mxu0 %v2058
        %v2082 = vpop.f32.mrf.mxu0
        %v2083 = vadd.f32 0.0, %v2082
        %v2084 = vpop.f32.mrf.mxu0
        %v2085 = vadd.f32 0.0, %v2084
        %2086 = vmatmul.bf16.gmra.mxu0 %v2061
        %v2087 = vpop.f32.mrf.mxu0
        %v2088 = vadd.f32 0.0, %v2087
        %v2089 = vpop.f32.mrf.mxu0
        %v2090 = vadd.f32 0.0, %v2089
        %2091 = vdwg.mxu0
        %v2100 = vunpack.c.l.b16 %v1999
        %v2101 = vunpack.c.l.b16 %v2000
        %v2102 = vunpack.c.l.b16 %v2001
        %v2103 = vunpack.c.l.b16 %v2002
        %v2104 = vunpack.c.l.b16 %v2003
        %v2105 = vunpack.c.l.b16 %v2004
        %v2106 = vunpack.c.l.b16 %v2005
        %v2107 = vunpack.c.l.b16 %v2006
        %v2108 = vpack.c.b16 %v2101, %v2100
        %v2109 = vpack.c.b16 %v2103, %v2102
        %v2110 = vpack.c.b16 %v2105, %v2104
        %v2111 = vpack.c.b16 %v2107, %v2106
        %v2120 = vunpack.c.l.b16 %v1584
        %v2121 = vunpack.c.l.b16 %v1585
        %v2122 = vunpack.c.l.b16 %v1586
        %v2123 = vunpack.c.l.b16 %v1587
        %v2124 = vunpack.c.l.b16 %v1588
        %v2125 = vunpack.c.l.b16 %v1589
        %v2126 = vunpack.c.l.b16 %v1590
        %v2127 = vunpack.c.l.b16 %v1591
        %v2128 = vpack.c.b16 %v2121, %v2120
        %v2129 = vpack.c.b16 %v2123, %v2122
        %v2130 = vpack.c.b16 %v2125, %v2124
        %v2131 = vpack.c.b16 %v2127, %v2126
        %v2137 = vsel %vm1632, %v2108, 0
        %v2140 = vsel %vm1632, %v2109, 0
        %v2143 = vsel %vm1632, %v2110, 0
        %v2146 = vsel %vm1632, %v2111, 0
        %2148 = vmatpush.bf16.msra.mxu0 0
        %2149 = vmatpush.bf16.msra.mxu0 0
        %2150 = vmatpush.bf16.msra.mxu0 0
        %2151 = vmatpush.bf16.msra.mxu0 0
        %2152 = vmatpush.bf16.msra.mxu0 %v2131
        %2153 = vmatpush.bf16.msra.mxu0 %v2130
        %2154 = vmatpush.bf16.msra.mxu0 %v2129
        %2155 = vmatpush.bf16.msra.mxu0 %v2128
        %2156 = vmatmul.bf16.gmra.mxu0 %v2137
        %v2157 = vpop.f32.mrf.mxu0
        %v2158 = vadd.f32 0.0, %v2157
        %v2159 = vpop.f32.mrf.mxu0
        %v2160 = vadd.f32 0.0, %v2159
        %2161 = vmatmul.bf16.gmra.mxu0 %v2140
        %v2162 = vpop.f32.mrf.mxu0
        %v2163 = vadd.f32 0.0, %v2162
        %v2164 = vpop.f32.mrf.mxu0
        %v2165 = vadd.f32 0.0, %v2164
        %2166 = vmatmul.bf16.gmra.mxu0 %v2143
        %v2167 = vpop.f32.mrf.mxu0
        %v2168 = vadd.f32 0.0, %v2167
        %v2169 = vpop.f32.mrf.mxu0
        %v2170 = vadd.f32 0.0, %v2169
        %2171 = vmatmul.bf16.gmra.mxu0 %v2146
        %v2172 = vpop.f32.mrf.mxu0
        %v2173 = vadd.f32 0.0, %v2172
        %v2174 = vpop.f32.mrf.mxu0
        %v2175 = vadd.f32 0.0, %v2174
        %2176 = vdwg.mxu0
        %2177 = vrot.lane.b32.xlu0 %v1608, 64
        %v2178 = vpop.permute.xlu0 %2177
        %2179 = vrot.lane.b32.xlu0 %v1609, 64
        %v2180 = vpop.permute.xlu0 %2179
        %2181 = vrot.lane.b32.xlu0 %v1610, 64
        %v2182 = vpop.permute.xlu0 %2181
        %2183 = vrot.lane.b32.xlu0 %v1611, 64
        %v2184 = vpop.permute.xlu0 %2183
        %2185 = vrot.lane.b32.xlu0 %v1628, 64
        %v2186 = vpop.permute.xlu0 %2185
        %2187 = vrot.lane.b32.xlu0 %v1629, 64
        %v2188 = vpop.permute.xlu0 %2187
        %2189 = vrot.lane.b32.xlu0 %v1630, 64
        %v2190 = vpop.permute.xlu0 %2189
        %2191 = vrot.lane.b32.xlu0 %v1631, 64
        %v2192 = vpop.permute.xlu0 %2191
        %v2194 = vsel %vm1632, %v2178, 0
        %v2197 = vsel %vm1632, %v2180, 0
        %v2200 = vsel %vm1632, %v2182, 0
        %v2203 = vsel %vm1632, %v2184, 0
        %v2206 = vsel %vm1632, %v2186, 0
        %v2209 = vsel %vm1632, %v2188, 0
        %v2212 = vsel %vm1632, %v2190, 0
        %v2215 = vsel %vm1632, %v2192, 0
        %2217 = vmatpush.bf16.xpose.msra.mxu0 0
        %2218 = vmatpush.bf16.xpose.msra.mxu0 0
        %2219 = vmatpush.bf16.xpose.msra.mxu0 0
        %2220 = vmatpush.bf16.xpose.msra.mxu0 0
        %2221 = vmatpush.bf16.xpose.msra.mxu0 %v2215
        %2222 = vmatpush.bf16.xpose.msra.mxu0 %v2212
        %2223 = vmatpush.bf16.xpose.msra.mxu0 %v2209
        %2224 = vmatpush.bf16.xpose.msra.mxu0 %v2206
        %2225 = vmatmul.bf16.gmra.mxu0 %v2194
        %v2226 = vpop.f32.mrf.mxu0
        %v2227 = vadd.f32 0.0, %v2226
        %v2228 = vpop.f32.mrf.mxu0
        %v2229 = vadd.f32 0.0, %v2228
        %2230 = vmatmul.bf16.gmra.mxu0 %v2197
        %v2231 = vpop.f32.mrf.mxu0
        %v2232 = vadd.f32 0.0, %v2231
        %v2233 = vpop.f32.mrf.mxu0
        %v2234 = vadd.f32 0.0, %v2233
        %2235 = vmatmul.bf16.gmra.mxu0 %v2200
        %v2236 = vpop.f32.mrf.mxu0
        %v2237 = vadd.f32 0.0, %v2236
        %v2238 = vpop.f32.mrf.mxu0
        %v2239 = vadd.f32 0.0, %v2238
        %2240 = vmatmul.bf16.gmra.mxu0 %v2203
        %v2241 = vpop.f32.mrf.mxu0
        %v2242 = vadd.f32 0.0, %v2241
        %v2243 = vpop.f32.mrf.mxu0
        %v2244 = vadd.f32 0.0, %v2243
        %2245 = vdwg.mxu0
        %2246 = vrot.lane.b32.xlu0 %v1702, 64
        %v2247 = vpop.permute.xlu0 %2246
        %2248 = vrot.lane.b32.xlu0 %v1703, 64
        %v2249 = vpop.permute.xlu0 %2248
        %2250 = vrot.lane.b32.xlu0 %v1704, 64
        %v2251 = vpop.permute.xlu0 %2250
        %2252 = vrot.lane.b32.xlu0 %v1705, 64
        %v2253 = vpop.permute.xlu0 %2252
        %2254 = vrot.lane.b32.xlu0 %v1722, 64
        %v2255 = vpop.permute.xlu0 %2254
        %2256 = vrot.lane.b32.xlu0 %v1723, 64
        %v2257 = vpop.permute.xlu0 %2256
        %2258 = vrot.lane.b32.xlu0 %v1724, 64
        %v2259 = vpop.permute.xlu0 %2258
        %2260 = vrot.lane.b32.xlu0 %v1725, 64
        %v2261 = vpop.permute.xlu0 %2260
        %v2263 = vsel %vm1632, %v2247, 0
        %v2266 = vsel %vm1632, %v2249, 0
        %v2269 = vsel %vm1632, %v2251, 0
        %v2272 = vsel %vm1632, %v2253, 0
        %v2275 = vsel %vm1632, %v2255, 0
        %v2278 = vsel %vm1632, %v2257, 0
        %v2281 = vsel %vm1632, %v2259, 0
        %v2284 = vsel %vm1632, %v2261, 0
        %2286 = vmatpush.bf16.xpose.msra.mxu0 0
        %2287 = vmatpush.bf16.xpose.msra.mxu0 0
        %2288 = vmatpush.bf16.xpose.msra.mxu0 0
        %2289 = vmatpush.bf16.xpose.msra.mxu0 0
        %2290 = vmatpush.bf16.xpose.msra.mxu0 %v2284
        %2291 = vmatpush.bf16.xpose.msra.mxu0 %v2281
        %2292 = vmatpush.bf16.xpose.msra.mxu0 %v2278
        %2293 = vmatpush.bf16.xpose.msra.mxu0 %v2275
        %2294 = vmatmul.bf16.gmra.mxu0 %v2263
        %v2295 = vpop.f32.mrf.mxu0
        %v2296 = vadd.f32 0.0, %v2295
        %v2297 = vpop.f32.mrf.mxu0
        %v2298 = vadd.f32 0.0, %v2297
        %2299 = vmatmul.bf16.gmra.mxu0 %v2266
        %v2300 = vpop.f32.mrf.mxu0
        %v2301 = vadd.f32 0.0, %v2300
        %v2302 = vpop.f32.mrf.mxu0
        %v2303 = vadd.f32 0.0, %v2302
        %2304 = vmatmul.bf16.gmra.mxu0 %v2269
        %v2305 = vpop.f32.mrf.mxu0
        %v2306 = vadd.f32 0.0, %v2305
        %v2307 = vpop.f32.mrf.mxu0
        %v2308 = vadd.f32 0.0, %v2307
        %2309 = vmatmul.bf16.gmra.mxu0 %v2272
        %v2310 = vpop.f32.mrf.mxu0
        %v2311 = vadd.f32 0.0, %v2310
        %v2312 = vpop.f32.mrf.mxu0
        %v2313 = vadd.f32 0.0, %v2312
        %2314 = vdwg.mxu0
        %v2315 = vmul.f32 %v2227, 0.125
        %v2316 = vmul.f32 %v2229, 0.125
        %v2317 = vmul.f32 %v2232, 0.125
        %v2318 = vmul.f32 %v2234, 0.125
        %v2319 = vmul.f32 %v2237, 0.125
        %v2320 = vmul.f32 %v2239, 0.125
        %v2321 = vmul.f32 %v2242, 0.125
        %v2322 = vmul.f32 %v2244, 0.125
        %v2323 = vmul.f32 %v2296, 0.125
        %v2324 = vmul.f32 %v2298, 0.125
        %v2325 = vmul.f32 %v2301, 0.125
        %v2326 = vmul.f32 %v2303, 0.125
        %v2327 = vmul.f32 %v2306, 0.125
        %v2328 = vmul.f32 %v2308, 0.125
        %v2329 = vmul.f32 %v2311, 0.125
        %v2330 = vmul.f32 %v2313, 0.125
        %v2331 = vadd.f32 %v2315, %v1795
        %v2332 = vadd.f32 %v2316, %v1795
        %v2333 = vadd.f32 %v2317, %v1795
        %v2334 = vadd.f32 %v2318, %v1795
        %v2335 = vadd.f32 %v2319, %v1795
        %v2336 = vadd.f32 %v2320, %v1795
        %v2337 = vadd.f32 %v2321, %v1795
        %v2338 = vadd.f32 %v2322, %v1795
        %v2339 = vadd.f32 %v2323, %v1796
        %v2340 = vadd.f32 %v2324, %v1796
        %v2341 = vadd.f32 %v2325, %v1796
        %v2342 = vadd.f32 %v2326, %v1796
        %v2343 = vadd.f32 %v2327, %v1796
        %v2344 = vadd.f32 %v2328, %v1796
        %v2345 = vadd.f32 %v2329, %v1796
        %v2346 = vadd.f32 %v2330, %v1796
        %v2347 = vsel %vm1632, %v2331, -inf
        %2348 = vmax.xlane.f32.xlu0 %v2347
        %v2349 = vpop.xlane.xlu0 %2348
        %v2350 = vsel %vm1632, %v2332, -inf
        %2351 = vmax.xlane.f32.xlu0 %v2350
        %v2352 = vpop.xlane.xlu0 %2351
        %v2353 = vsel %vm1632, %v2333, -inf
        %2354 = vmax.xlane.f32.xlu0 %v2353
        %v2355 = vpop.xlane.xlu0 %2354
        %v2356 = vsel %vm1632, %v2334, -inf
        %2357 = vmax.xlane.f32.xlu0 %v2356
        %v2358 = vpop.xlane.xlu0 %2357
        %v2359 = vsel %vm1632, %v2335, -inf
        %2360 = vmax.xlane.f32.xlu0 %v2359
        %v2361 = vpop.xlane.xlu0 %2360
        %v2362 = vsel %vm1632, %v2336, -inf
        %2363 = vmax.xlane.f32.xlu0 %v2362
        %v2364 = vpop.xlane.xlu0 %2363
        %v2365 = vsel %vm1632, %v2337, -inf
        %2366 = vmax.xlane.f32.xlu0 %v2365
        %v2367 = vpop.xlane.xlu0 %2366
        %v2368 = vsel %vm1632, %v2338, -inf
        %2369 = vmax.xlane.f32.xlu0 %v2368
        %v2370 = vpop.xlane.xlu0 %2369
        %v2371 = vsel %vm1632, %v2339, -inf
        %2372 = vmax.xlane.f32.xlu0 %v2371
        %v2373 = vpop.xlane.xlu0 %2372
        %v2374 = vsel %vm1632, %v2340, -inf
        %2375 = vmax.xlane.f32.xlu0 %v2374
        %v2376 = vpop.xlane.xlu0 %2375
        %v2377 = vsel %vm1632, %v2341, -inf
        %2378 = vmax.xlane.f32.xlu0 %v2377
        %v2379 = vpop.xlane.xlu0 %2378
        %v2380 = vsel %vm1632, %v2342, -inf
        %2381 = vmax.xlane.f32.xlu0 %v2380
        %v2382 = vpop.xlane.xlu0 %2381
        %v2383 = vsel %vm1632, %v2343, -inf
        %2384 = vmax.xlane.f32.xlu0 %v2383
        %v2385 = vpop.xlane.xlu0 %2384
        %v2386 = vsel %vm1632, %v2344, -inf
        %2387 = vmax.xlane.f32.xlu0 %v2386
        %v2388 = vpop.xlane.xlu0 %2387
        %v2389 = vsel %vm1632, %v2345, -inf
        %2390 = vmax.xlane.f32.xlu0 %v2389
        %v2391 = vpop.xlane.xlu0 %2390
        %v2392 = vsel %vm1632, %v2346, -inf
        %2393 = vmax.xlane.f32.xlu0 %v2392
        %v2394 = vpop.xlane.xlu0 %2393
        %v2395 = vsub.f32 %v2331, %v2349
        %v2396 = vsub.f32 %v2332, %v2352
        %v2397 = vsub.f32 %v2333, %v2355
        %v2398 = vsub.f32 %v2334, %v2358
        %v2399 = vsub.f32 %v2335, %v2361
        %v2400 = vsub.f32 %v2336, %v2364
        %v2401 = vsub.f32 %v2337, %v2367
        %v2402 = vsub.f32 %v2338, %v2370
        %v2403 = vsub.f32 %v2339, %v2373
        %v2404 = vsub.f32 %v2340, %v2376
        %v2405 = vsub.f32 %v2341, %v2379
        %v2406 = vsub.f32 %v2342, %v2382
        %v2407 = vsub.f32 %v2343, %v2385
        %v2408 = vsub.f32 %v2344, %v2388
        %v2409 = vsub.f32 %v2345, %v2391
        %v2410 = vsub.f32 %v2346, %v2394
        %v2411 = vmul.f32 %v2395, 1.442695
        %v2412 = vpow.pop %v2411
        %v2413 = vmul.f32 %v2396, 1.442695
        %v2414 = vpow.pop %v2413
        %v2415 = vmul.f32 %v2397, 1.442695
        %v2416 = vpow.pop %v2415
        %v2417 = vmul.f32 %v2398, 1.442695
        %v2418 = vpow.pop %v2417
        %v2419 = vmul.f32 %v2399, 1.442695
        %v2420 = vpow.pop %v2419
        %v2421 = vmul.f32 %v2400, 1.442695
        %v2422 = vpow.pop %v2421
        %v2423 = vmul.f32 %v2401, 1.442695
        %v2424 = vpow.pop %v2423
        %v2425 = vmul.f32 %v2402, 1.442695
        %v2426 = vpow.pop %v2425
        %v2427 = vmul.f32 %v2403, 1.442695
        %v2428 = vpow.pop %v2427
        %v2429 = vmul.f32 %v2404, 1.442695
        %v2430 = vpow.pop %v2429
        %v2431 = vmul.f32 %v2405, 1.442695
        %v2432 = vpow.pop %v2431
        %v2433 = vmul.f32 %v2406, 1.442695
        %v2434 = vpow.pop %v2433
        %v2435 = vmul.f32 %v2407, 1.442695
        %v2436 = vpow.pop %v2435
        %v2437 = vmul.f32 %v2408, 1.442695
        %v2438 = vpow.pop %v2437
        %v2439 = vmul.f32 %v2409, 1.442695
        %v2440 = vpow.pop %v2439
        %v2441 = vmul.f32 %v2410, 1.442695
        %v2442 = vpow.pop %v2441
        %v2443 = vsel %vm1632, %v2412, 0.0
        %2444 = vadd.xlane.f32.xlu0 %v2443
        %v2445 = vpop.xlane.xlu0 %2444
        %v2446 = vsel %vm1632, %v2414, 0.0
        %2447 = vadd.xlane.f32.xlu0 %v2446
        %v2448 = vpop.xlane.xlu0 %2447
        %v2449 = vsel %vm1632, %v2416, 0.0
        %2450 = vadd.xlane.f32.xlu0 %v2449
        %v2451 = vpop.xlane.xlu0 %2450
        %v2452 = vsel %vm1632, %v2418, 0.0
        %2453 = vadd.xlane.f32.xlu0 %v2452
        %v2454 = vpop.xlane.xlu0 %2453
        %v2455 = vsel %vm1632, %v2420, 0.0
        %2456 = vadd.xlane.f32.xlu0 %v2455
        %v2457 = vpop.xlane.xlu0 %2456
        %v2458 = vsel %vm1632, %v2422, 0.0
        %2459 = vadd.xlane.f32.xlu0 %v2458
        %v2460 = vpop.xlane.xlu0 %2459
        %v2461 = vsel %vm1632, %v2424, 0.0
        %2462 = vadd.xlane.f32.xlu0 %v2461
        %v2463 = vpop.xlane.xlu0 %2462
        %v2464 = vsel %vm1632, %v2426, 0.0
        %2465 = vadd.xlane.f32.xlu0 %v2464
        %v2466 = vpop.xlane.xlu0 %2465
        %v2467 = vsel %vm1632, %v2428, 0.0
        %2468 = vadd.xlane.f32.xlu0 %v2467
        %v2469 = vpop.xlane.xlu0 %2468
        %v2470 = vsel %vm1632, %v2430, 0.0
        %2471 = vadd.xlane.f32.xlu0 %v2470
        %v2472 = vpop.xlane.xlu0 %2471
        %v2473 = vsel %vm1632, %v2432, 0.0
        %2474 = vadd.xlane.f32.xlu0 %v2473
        %v2475 = vpop.xlane.xlu0 %2474
        %v2476 = vsel %vm1632, %v2434, 0.0
        %2477 = vadd.xlane.f32.xlu0 %v2476
        %v2478 = vpop.xlane.xlu0 %2477
        %v2479 = vsel %vm1632, %v2436, 0.0
        %2480 = vadd.xlane.f32.xlu0 %v2479
        %v2481 = vpop.xlane.xlu0 %2480
        %v2482 = vsel %vm1632, %v2438, 0.0
        %2483 = vadd.xlane.f32.xlu0 %v2482
        %v2484 = vpop.xlane.xlu0 %2483
        %v2485 = vsel %vm1632, %v2440, 0.0
        %2486 = vadd.xlane.f32.xlu0 %v2485
        %v2487 = vpop.xlane.xlu0 %2486
        %v2488 = vsel %vm1632, %v2442, 0.0
        %2489 = vadd.xlane.f32.xlu0 %v2488
        %v2490 = vpop.xlane.xlu0 %2489
        %v2491 = vrcp.pop %v2445
        %v2492 = vrcp.pop %v2448
        %v2493 = vrcp.pop %v2451
        %v2494 = vrcp.pop %v2454
        %v2495 = vrcp.pop %v2457
        %v2496 = vrcp.pop %v2460
        %v2497 = vrcp.pop %v2463
        %v2498 = vrcp.pop %v2466
        %v2499 = vrcp.pop %v2469
        %v2500 = vrcp.pop %v2472
        %v2501 = vrcp.pop %v2475
        %v2502 = vrcp.pop %v2478
        %v2503 = vrcp.pop %v2481
        %v2504 = vrcp.pop %v2484
        %v2505 = vrcp.pop %v2487
        %v2506 = vrcp.pop %v2490
        %v2507 = vmul.f32 %v2412, %v2491
        %v2508 = vmul.f32 %v2414, %v2492
        %v2509 = vmul.f32 %v2416, %v2493
        %v2510 = vmul.f32 %v2418, %v2494
        %v2511 = vmul.f32 %v2420, %v2495
        %v2512 = vmul.f32 %v2422, %v2496
        %v2513 = vmul.f32 %v2424, %v2497
        %v2514 = vmul.f32 %v2426, %v2498
        %v2515 = vmul.f32 %v2428, %v2499
        %v2516 = vmul.f32 %v2430, %v2500
        %v2517 = vmul.f32 %v2432, %v2501
        %v2518 = vmul.f32 %v2434, %v2502
        %v2519 = vmul.f32 %v2436, %v2503
        %v2520 = vmul.f32 %v2438, %v2504
        %v2521 = vmul.f32 %v2440, %v2505
        %v2522 = vmul.f32 %v2442, %v2506
        %v2523 = vpack.c.bf16 %v2507, %v2507
        %v2524 = vpack.c.bf16 %v2508, %v2508
        %v2525 = vpack.c.bf16 %v2509, %v2509
        %v2526 = vpack.c.bf16 %v2510, %v2510
        %v2527 = vpack.c.bf16 %v2511, %v2511
        %v2528 = vpack.c.bf16 %v2512, %v2512
        %v2529 = vpack.c.bf16 %v2513, %v2513
        %v2530 = vpack.c.bf16 %v2514, %v2514
        %v2531 = vpack.c.bf16 %v2515, %v2515
        %v2532 = vpack.c.bf16 %v2516, %v2516
        %v2533 = vpack.c.bf16 %v2517, %v2517
        %v2534 = vpack.c.bf16 %v2518, %v2518
        %v2535 = vpack.c.bf16 %v2519, %v2519
        %v2536 = vpack.c.bf16 %v2520, %v2520
        %v2537 = vpack.c.bf16 %v2521, %v2521
        %v2538 = vpack.c.bf16 %v2522, %v2522
        %v2547 = vunpack.c.l.b16 %v2523
        %v2548 = vunpack.c.l.b16 %v2524
        %v2549 = vunpack.c.l.b16 %v2525
        %v2550 = vunpack.c.l.b16 %v2526
        %v2551 = vunpack.c.l.b16 %v2527
        %v2552 = vunpack.c.l.b16 %v2528
        %v2553 = vunpack.c.l.b16 %v2529
        %v2554 = vunpack.c.l.b16 %v2530
        %v2555 = vpack.c.b16 %v2548, %v2547
        %v2556 = vpack.c.b16 %v2550, %v2549
        %v2557 = vpack.c.b16 %v2552, %v2551
        %v2558 = vpack.c.b16 %v2554, %v2553
        %2559 = vrot.lane.b32.xlu0 %v2043, 64
        %v2560 = vpop.permute.xlu0 %2559
        %2561 = vrot.lane.b32.xlu0 %v2044, 64
        %v2562 = vpop.permute.xlu0 %2561
        %2563 = vrot.lane.b32.xlu0 %v2045, 64
        %v2564 = vpop.permute.xlu0 %2563
        %2565 = vrot.lane.b32.xlu0 %v2046, 64
        %v2566 = vpop.permute.xlu0 %2565
        %v2572 = vsel %vm1632, %v2555, 0
        %v2575 = vsel %vm1632, %v2556, 0
        %v2578 = vsel %vm1632, %v2557, 0
        %v2581 = vsel %vm1632, %v2558, 0
        %2583 = vmatpush.bf16.msra.mxu0 0
        %2584 = vmatpush.bf16.msra.mxu0 0
        %2585 = vmatpush.bf16.msra.mxu0 0
        %2586 = vmatpush.bf16.msra.mxu0 0
        %2587 = vmatpush.bf16.msra.mxu0 %v2566
        %2588 = vmatpush.bf16.msra.mxu0 %v2564
        %2589 = vmatpush.bf16.msra.mxu0 %v2562
        %2590 = vmatpush.bf16.msra.mxu0 %v2560
        %2591 = vmatmul.bf16.gmra.mxu0 %v2572
        %v2592 = vpop.f32.mrf.mxu0
        %v2593 = vadd.f32 0.0, %v2592
        %v2594 = vpop.f32.mrf.mxu0
        %v2595 = vadd.f32 0.0, %v2594
        %2596 = vmatmul.bf16.gmra.mxu0 %v2575
        %v2597 = vpop.f32.mrf.mxu0
        %v2598 = vadd.f32 0.0, %v2597
        %v2599 = vpop.f32.mrf.mxu0
        %v2600 = vadd.f32 0.0, %v2599
        %2601 = vmatmul.bf16.gmra.mxu0 %v2578
        %v2602 = vpop.f32.mrf.mxu0
        %v2603 = vadd.f32 0.0, %v2602
        %v2604 = vpop.f32.mrf.mxu0
        %v2605 = vadd.f32 0.0, %v2604
        %2606 = vmatmul.bf16.gmra.mxu0 %v2581
        %v2607 = vpop.f32.mrf.mxu0
        %v2608 = vadd.f32 0.0, %v2607
        %v2609 = vpop.f32.mrf.mxu0
        %v2610 = vadd.f32 0.0, %v2609
        %2611 = vdwg.mxu0
        %v2620 = vunpack.c.l.b16 %v2531
        %v2621 = vunpack.c.l.b16 %v2532
        %v2622 = vunpack.c.l.b16 %v2533
        %v2623 = vunpack.c.l.b16 %v2534
        %v2624 = vunpack.c.l.b16 %v2535
        %v2625 = vunpack.c.l.b16 %v2536
        %v2626 = vunpack.c.l.b16 %v2537
        %v2627 = vunpack.c.l.b16 %v2538
        %v2628 = vpack.c.b16 %v2621, %v2620
        %v2629 = vpack.c.b16 %v2623, %v2622
        %v2630 = vpack.c.b16 %v2625, %v2624
        %v2631 = vpack.c.b16 %v2627, %v2626
        %2632 = vrot.lane.b32.xlu0 %v2128, 64
        %v2633 = vpop.permute.xlu0 %2632
        %2634 = vrot.lane.b32.xlu0 %v2129, 64
        %v2635 = vpop.permute.xlu0 %2634
        %2636 = vrot.lane.b32.xlu0 %v2130, 64
        %v2637 = vpop.permute.xlu0 %2636
        %2638 = vrot.lane.b32.xlu0 %v2131, 64
        %v2639 = vpop.permute.xlu0 %2638
        %v2645 = vsel %vm1632, %v2628, 0
        %v2648 = vsel %vm1632, %v2629, 0
        %v2651 = vsel %vm1632, %v2630, 0
        %v2654 = vsel %vm1632, %v2631, 0
        %2656 = vmatpush.bf16.msra.mxu0 0
        %2657 = vmatpush.bf16.msra.mxu0 0
        %2658 = vmatpush.bf16.msra.mxu0 0
        %2659 = vmatpush.bf16.msra.mxu0 0
        %2660 = vmatpush.bf16.msra.mxu0 %v2639
        %2661 = vmatpush.bf16.msra.mxu0 %v2637
        %2662 = vmatpush.bf16.msra.mxu0 %v2635
        %2663 = vmatpush.bf16.msra.mxu0 %v2633
        %2664 = vmatmul.bf16.gmra.mxu0 %v2645
        %v2665 = vpop.f32.mrf.mxu0
        %v2666 = vadd.f32 0.0, %v2665
        %v2667 = vpop.f32.mrf.mxu0
        %v2668 = vadd.f32 0.0, %v2667
        %2669 = vmatmul.bf16.gmra.mxu0 %v2648
        %v2670 = vpop.f32.mrf.mxu0
        %v2671 = vadd.f32 0.0, %v2670
        %v2672 = vpop.f32.mrf.mxu0
        %v2673 = vadd.f32 0.0, %v2672
        %2674 = vmatmul.bf16.gmra.mxu0 %v2651
        %v2675 = vpop.f32.mrf.mxu0
        %v2676 = vadd.f32 0.0, %v2675
        %v2677 = vpop.f32.mrf.mxu0
        %v2678 = vadd.f32 0.0, %v2677
        %2679 = vmatmul.bf16.gmra.mxu0 %v2654
        %v2680 = vpop.f32.mrf.mxu0
        %v2681 = vadd.f32 0.0, %v2680
        %v2682 = vpop.f32.mrf.mxu0
        %v2683 = vadd.f32 0.0, %v2682
        %2684 = vdwg.mxu0
        %2701 = vrot.lane.b32.xlu0 %v2593, 64
        %v2702 = vpop.permute.xlu0 %2701
        %2703 = vrot.lane.b32.xlu0 %v2595, 64
        %v2704 = vpop.permute.xlu0 %2703
        %2705 = vrot.lane.b32.xlu0 %v2598, 64
        %v2706 = vpop.permute.xlu0 %2705
        %2707 = vrot.lane.b32.xlu0 %v2600, 64
        %v2708 = vpop.permute.xlu0 %2707
        %2709 = vrot.lane.b32.xlu0 %v2603, 64
        %v2710 = vpop.permute.xlu0 %2709
        %2711 = vrot.lane.b32.xlu0 %v2605, 64
        %v2712 = vpop.permute.xlu0 %2711
        %2713 = vrot.lane.b32.xlu0 %v2608, 64
        %v2714 = vpop.permute.xlu0 %2713
        %2715 = vrot.lane.b32.xlu0 %v2610, 64
        %v2716 = vpop.permute.xlu0 %2715
        %2717 = vrot.lane.b32.xlu0 %v2666, 64
        %v2718 = vpop.permute.xlu0 %2717
        %2719 = vrot.lane.b32.xlu0 %v2668, 64
        %v2720 = vpop.permute.xlu0 %2719
        %2721 = vrot.lane.b32.xlu0 %v2671, 64
        %v2722 = vpop.permute.xlu0 %2721
        %2723 = vrot.lane.b32.xlu0 %v2673, 64
        %v2724 = vpop.permute.xlu0 %2723
        %2725 = vrot.lane.b32.xlu0 %v2676, 64
        %v2726 = vpop.permute.xlu0 %2725
        %2727 = vrot.lane.b32.xlu0 %v2678, 64
        %v2728 = vpop.permute.xlu0 %2727
        %2729 = vrot.lane.b32.xlu0 %v2681, 64
        %v2730 = vpop.permute.xlu0 %2729
        %2731 = vrot.lane.b32.xlu0 %v2683, 64
        %v2732 = vpop.permute.xlu0 %2731
        %v2749 = vsel %vm1632, %v2073, %v2702
        %v2750 = vsel %vm1632, %v2075, %v2704
        %v2751 = vsel %vm1632, %v2078, %v2706
        %v2752 = vsel %vm1632, %v2080, %v2708
        %v2753 = vsel %vm1632, %v2083, %v2710
        %v2754 = vsel %vm1632, %v2085, %v2712
        %v2755 = vsel %vm1632, %v2088, %v2714
        %v2756 = vsel %vm1632, %v2090, %v2716
        %v2757 = vsel %vm1632, %v2158, %v2718
        %v2758 = vsel %vm1632, %v2160, %v2720
        %v2759 = vsel %vm1632, %v2163, %v2722
        %v2760 = vsel %vm1632, %v2165, %v2724
        %v2761 = vsel %vm1632, %v2168, %v2726
        %v2762 = vsel %vm1632, %v2170, %v2728
        %v2763 = vsel %vm1632, %v2173, %v2730
        %v2764 = vsel %vm1632, %v2175, %v2732
        %v2765 = vld [vmem:[%s763] sm:$0xf]
        %v2766 = vld [vmem:[%s763 + $0x4] sm:$0xf]
        %v2767 = vld [vmem:[%s763 + $0x8] sm:$0xf]
        %v2768 = vld [vmem:[%s763 + $0xc] sm:$0xf]
        %v2769 = vld [vmem:[%s763 + $0x10] sm:$0xf]
        %v2770 = vld [vmem:[%s763 + $0x14] sm:$0xf]
        %v2771 = vld [vmem:[%s763 + $0x18] sm:$0xf]
        %v2772 = vld [vmem:[%s763 + $0x1c] sm:$0xf]
        %v2773 = vld [vmem:[%s763 + $0x20] sm:$0xf]
        %v2774 = vld [vmem:[%s763 + $0x24] sm:$0xf]
        %v2775 = vld [vmem:[%s763 + $0x28] sm:$0xf]
        %v2776 = vld [vmem:[%s763 + $0x2c] sm:$0xf]
        %v2777 = vld [vmem:[%s763 + $0x30] sm:$0xf]
        %v2778 = vld [vmem:[%s763 + $0x34] sm:$0xf]
        %v2779 = vld [vmem:[%s763 + $0x38] sm:$0xf]
        %v2780 = vld [vmem:[%s763 + $0x3c] sm:$0xf]
        %v2781 = vpack.c.bf16 %v2750, %v2749
        %v2782 = vpack.c.bf16 %v2752, %v2751
        %v2783 = vpack.c.bf16 %v2754, %v2753
        %v2784 = vpack.c.bf16 %v2756, %v2755
        %v2785 = vpack.c.bf16 %v2758, %v2757
        %v2786 = vpack.c.bf16 %v2760, %v2759
        %v2787 = vpack.c.bf16 %v2762, %v2761
        %v2788 = vpack.c.bf16 %v2764, %v2763
        %v2789 = vld [vmem:[%s766] sm:$0x1]
        %v2791 = vperm.slane %v2789, 0
        %v2809 = vunpack.c.l.b16 %v2765
        %v2810 = vunpack.c.l.b16 %v2766
        %v2811 = vunpack.c.l.b16 %v2767
        %v2812 = vunpack.c.l.b16 %v2768
        %v2813 = vunpack.c.l.b16 %v2769
        %v2814 = vunpack.c.l.b16 %v2770
        %v2815 = vunpack.c.l.b16 %v2771
        %v2816 = vunpack.c.l.b16 %v2772
        %v2817 = vunpack.c.l.b16 %v2773
        %v2818 = vunpack.c.l.b16 %v2774
        %v2819 = vunpack.c.l.b16 %v2775
        %v2820 = vunpack.c.l.b16 %v2776
        %v2821 = vunpack.c.l.b16 %v2777
        %v2822 = vunpack.c.l.b16 %v2778
        %v2823 = vunpack.c.l.b16 %v2779
        %v2824 = vunpack.c.l.b16 %v2780
        %v2825 = vpack.c.b16 %v2810, %v2809
        %v2826 = vpack.c.b16 %v2812, %v2811
        %v2827 = vpack.c.b16 %v2814, %v2813
        %v2828 = vpack.c.b16 %v2816, %v2815
        %v2829 = vpack.c.b16 %v2818, %v2817
        %v2830 = vpack.c.b16 %v2820, %v2819
        %v2831 = vpack.c.b16 %v2822, %v2821
        %v2832 = vpack.c.b16 %v2824, %v2823
        %2841 = vmatpush.bf16.msra.mxu0 %v2832
        %2842 = vmatpush.bf16.msra.mxu0 %v2831
        %2843 = vmatpush.bf16.msra.mxu0 %v2830
        %2844 = vmatpush.bf16.msra.mxu0 %v2829
        %2845 = vmatpush.bf16.msra.mxu0 %v2828
        %2846 = vmatpush.bf16.msra.mxu0 %v2827
        %2847 = vmatpush.bf16.msra.mxu0 %v2826
        %2848 = vmatpush.bf16.msra.mxu0 %v2825
        %2849 = vmatmul.bf16.gmra.mxu0 %v2781
        %v2850 = vpop.f32.mrf.mxu0
        %v2851 = vadd.f32 %v2791, %v2850
        %v2852 = vpop.f32.mrf.mxu0
        %v2853 = vadd.f32 %v2791, %v2852
        %2854 = vmatmul.bf16.gmra.mxu0 %v2782
        %v2855 = vpop.f32.mrf.mxu0
        %v2856 = vadd.f32 %v2791, %v2855
        %v2857 = vpop.f32.mrf.mxu0
        %v2858 = vadd.f32 %v2791, %v2857
        %2859 = vmatmul.bf16.gmra.mxu0 %v2783
        %v2860 = vpop.f32.mrf.mxu0
        %v2861 = vadd.f32 %v2791, %v2860
        %v2862 = vpop.f32.mrf.mxu0
        %v2863 = vadd.f32 %v2791, %v2862
        %2864 = vmatmul.bf16.gmra.mxu0 %v2784
        %v2865 = vpop.f32.mrf.mxu0
        %v2866 = vadd.f32 %v2791, %v2865
        %v2867 = vpop.f32.mrf.mxu0
        %v2868 = vadd.f32 %v2791, %v2867
        %2869 = vmatmul.bf16.gmra.mxu0 %v2785
        %v2870 = vpop.f32.mrf.mxu0
        %v2871 = vadd.f32 %v2791, %v2870
        %v2872 = vpop.f32.mrf.mxu0
        %v2873 = vadd.f32 %v2791, %v2872
        %2874 = vmatmul.bf16.gmra.mxu0 %v2786
        %v2875 = vpop.f32.mrf.mxu0
        %v2876 = vadd.f32 %v2791, %v2875
        %v2877 = vpop.f32.mrf.mxu0
        %v2878 = vadd.f32 %v2791, %v2877
        %2879 = vmatmul.bf16.gmra.mxu0 %v2787
        %v2880 = vpop.f32.mrf.mxu0
        %v2881 = vadd.f32 %v2791, %v2880
        %v2882 = vpop.f32.mrf.mxu0
        %v2883 = vadd.f32 %v2791, %v2882
        %2884 = vmatmul.bf16.gmra.mxu0 %v2788
        %v2885 = vpop.f32.mrf.mxu0
        %v2886 = vadd.f32 %v2791, %v2885
        %v2887 = vpop.f32.mrf.mxu0
        %v2888 = vadd.f32 %v2791, %v2887
        %2889 = vdwg.mxu0
        %v2890 = vadd.f32 %v2851, %v1200
        %v2891 = vadd.f32 %v2853, %v1201
        %v2892 = vadd.f32 %v2856, %v1202
        %v2893 = vadd.f32 %v2858, %v1203
        %v2894 = vadd.f32 %v2861, %v1204
        %v2895 = vadd.f32 %v2863, %v1205
        %v2896 = vadd.f32 %v2866, %v1206
        %v2897 = vadd.f32 %v2868, %v1207
        %v2898 = vadd.f32 %v2871, %v1208
        %v2899 = vadd.f32 %v2873, %v1209
        %v2900 = vadd.f32 %v2876, %v1210
        %v2901 = vadd.f32 %v2878, %v1211
        %v2902 = vadd.f32 %v2881, %v1212
        %v2903 = vadd.f32 %v2883, %v1213
        %v2904 = vadd.f32 %v2886, %v1214
        %v2905 = vadd.f32 %v2888, %v1215
        %v2906 = vld [vmem:[%s769] sm:$0x1]
        %v2907 = vld [vmem:[%s772] sm:$0x1]
        %2908 = vadd.xlane.f32.xlu0 %v2890
        %v2909 = vpop.xlane.xlu0 %2908
        %2910 = vadd.xlane.f32.xlu0 %v2891
        %v2911 = vpop.xlane.xlu0 %2910
        %2912 = vadd.xlane.f32.xlu0 %v2892
        %v2913 = vpop.xlane.xlu0 %2912
        %2914 = vadd.xlane.f32.xlu0 %v2893
        %v2915 = vpop.xlane.xlu0 %2914
        %2916 = vadd.xlane.f32.xlu0 %v2894
        %v2917 = vpop.xlane.xlu0 %2916
        %2918 = vadd.xlane.f32.xlu0 %v2895
        %v2919 = vpop.xlane.xlu0 %2918
        %2920 = vadd.xlane.f32.xlu0 %v2896
        %v2921 = vpop.xlane.xlu0 %2920
        %2922 = vadd.xlane.f32.xlu0 %v2897
        %v2923 = vpop.xlane.xlu0 %2922
        %2924 = vadd.xlane.f32.xlu0 %v2898
        %v2925 = vpop.xlane.xlu0 %2924
        %2926 = vadd.xlane.f32.xlu0 %v2899
        %v2927 = vpop.xlane.xlu0 %2926
        %2928 = vadd.xlane.f32.xlu0 %v2900
        %v2929 = vpop.xlane.xlu0 %2928
        %2930 = vadd.xlane.f32.xlu0 %v2901
        %v2931 = vpop.xlane.xlu0 %2930
        %2932 = vadd.xlane.f32.xlu0 %v2902
        %v2933 = vpop.xlane.xlu0 %2932
        %2934 = vadd.xlane.f32.xlu0 %v2903
        %v2935 = vpop.xlane.xlu0 %2934
        %2936 = vadd.xlane.f32.xlu0 %v2904
        %v2937 = vpop.xlane.xlu0 %2936
        %2938 = vadd.xlane.f32.xlu0 %v2905
        %v2939 = vpop.xlane.xlu0 %2938
        %v2940 = vrcp.pop 128.0
        %v2941 = vmul.f32 128.0, %v2940
        %v2942 = vsub.f32 1.0, %v2941
        %v2943 = vmul.f32 %v2940, %v2942
        %v2944 = vadd.f32 %v2940, %v2943
        %vm2945 = vweird.f32 %v2940
        %v2946 = vsel %vm2945, %v2940, %v2944
        %v2947 = vmul.f32 %v2909, %v2946
        %v2948 = vmul.f32 %v2911, %v2946
        %v2949 = vmul.f32 %v2913, %v2946
        %v2950 = vmul.f32 %v2915, %v2946
        %v2951 = vmul.f32 %v2917, %v2946
        %v2952 = vmul.f32 %v2919, %v2946
        %v2953 = vmul.f32 %v2921, %v2946
        %v2954 = vmul.f32 %v2923, %v2946
        %v2955 = vmul.f32 %v2925, %v2946
        %v2956 = vmul.f32 %v2927, %v2946
        %v2957 = vmul.f32 %v2929, %v2946
        %v2958 = vmul.f32 %v2931, %v2946
        %v2959 = vmul.f32 %v2933, %v2946
        %v2960 = vmul.f32 %v2935, %v2946
        %v2961 = vmul.f32 %v2937, %v2946
        %v2962 = vmul.f32 %v2939, %v2946
        %v2963 = vsub.f32 %v2890, %v2947
        %v2964 = vsub.f32 %v2891, %v2948
        %v2965 = vsub.f32 %v2892, %v2949
        %v2966 = vsub.f32 %v2893, %v2950
        %v2967 = vsub.f32 %v2894, %v2951
        %v2968 = vsub.f32 %v2895, %v2952
        %v2969 = vsub.f32 %v2896, %v2953
        %v2970 = vsub.f32 %v2897, %v2954
        %v2971 = vsub.f32 %v2898, %v2955
        %v2972 = vsub.f32 %v2899, %v2956
        %v2973 = vsub.f32 %v2900, %v2957
        %v2974 = vsub.f32 %v2901, %v2958
        %v2975 = vsub.f32 %v2902, %v2959
        %v2976 = vsub.f32 %v2903, %v2960
        %v2977 = vsub.f32 %v2904, %v2961
        %v2978 = vsub.f32 %v2905, %v2962
        %v2979 = vmul.f32 %v2963, %v2963
        %v2980 = vmul.f32 %v2964, %v2964
        %v2981 = vmul.f32 %v2965, %v2965
        %v2982 = vmul.f32 %v2966, %v2966
        %v2983 = vmul.f32 %v2967, %v2967
        %v2984 = vmul.f32 %v2968, %v2968
        %v2985 = vmul.f32 %v2969, %v2969
        %v2986 = vmul.f32 %v2970, %v2970
        %v2987 = vmul.f32 %v2971, %v2971
        %v2988 = vmul.f32 %v2972, %v2972
        %v2989 = vmul.f32 %v2973, %v2973
        %v2990 = vmul.f32 %v2974, %v2974
        %v2991 = vmul.f32 %v2975, %v2975
        %v2992 = vmul.f32 %v2976, %v2976
        %v2993 = vmul.f32 %v2977, %v2977
        %v2994 = vmul.f32 %v2978, %v2978
        %2995 = vadd.xlane.f32.xlu0 %v2979
        %v2996 = vpop.xlane.xlu0 %2995
        %2997 = vadd.xlane.f32.xlu0 %v2980
        %v2998 = vpop.xlane.xlu0 %2997
        %2999 = vadd.xlane.f32.xlu0 %v2981
        %v3000 = vpop.xlane.xlu0 %2999
        %3001 = vadd.xlane.f32.xlu0 %v2982
        %v3002 = vpop.xlane.xlu0 %3001
        %3003 = vadd.xlane.f32.xlu0 %v2983
        %v3004 = vpop.xlane.xlu0 %3003
        %3005 = vadd.xlane.f32.xlu0 %v2984
        %v3006 = vpop.xlane.xlu0 %3005
        %3007 = vadd.xlane.f32.xlu0 %v2985
        %v3008 = vpop.xlane.xlu0 %3007
        %3009 = vadd.xlane.f32.xlu0 %v2986
        %v3010 = vpop.xlane.xlu0 %3009
        %3011 = vadd.xlane.f32.xlu0 %v2987
        %v3012 = vpop.xlane.xlu0 %3011
        %3013 = vadd.xlane.f32.xlu0 %v2988
        %v3014 = vpop.xlane.xlu0 %3013
        %3015 = vadd.xlane.f32.xlu0 %v2989
        %v3016 = vpop.xlane.xlu0 %3015
        %3017 = vadd.xlane.f32.xlu0 %v2990
        %v3018 = vpop.xlane.xlu0 %3017
        %3019 = vadd.xlane.f32.xlu0 %v2991
        %v3020 = vpop.xlane.xlu0 %3019
        %3021 = vadd.xlane.f32.xlu0 %v2992
        %v3022 = vpop.xlane.xlu0 %3021
        %3023 = vadd.xlane.f32.xlu0 %v2993
        %v3024 = vpop.xlane.xlu0 %3023
        %3025 = vadd.xlane.f32.xlu0 %v2994
        %v3026 = vpop.xlane.xlu0 %3025
        %v3027 = vmul.f32 %v2996, %v2946
        %v3028 = vmul.f32 %v2998, %v2946
        %v3029 = vmul.f32 %v3000, %v2946
        %v3030 = vmul.f32 %v3002, %v2946
        %v3031 = vmul.f32 %v3004, %v2946
        %v3032 = vmul.f32 %v3006, %v2946
        %v3033 = vmul.f32 %v3008, %v2946
        %v3034 = vmul.f32 %v3010, %v2946
        %v3035 = vmul.f32 %v3012, %v2946
        %v3036 = vmul.f32 %v3014, %v2946
        %v3037 = vmul.f32 %v3016, %v2946
        %v3038 = vmul.f32 %v3018, %v2946
        %v3039 = vmul.f32 %v3020, %v2946
        %v3040 = vmul.f32 %v3022, %v2946
        %v3041 = vmul.f32 %v3024, %v2946
        %v3042 = vmul.f32 %v3026, %v2946
        %v3043 = vadd.f32 %v3027, 1e-12
        %v3044 = vadd.f32 %v3028, 1e-12
        %v3045 = vadd.f32 %v3029, 1e-12
        %v3046 = vadd.f32 %v3030, 1e-12
        %v3047 = vadd.f32 %v3031, 1e-12
        %v3048 = vadd.f32 %v3032, 1e-12
        %v3049 = vadd.f32 %v3033, 1e-12
        %v3050 = vadd.f32 %v3034, 1e-12
        %v3051 = vadd.f32 %v3035, 1e-12
        %v3052 = vadd.f32 %v3036, 1e-12
        %v3053 = vadd.f32 %v3037, 1e-12
        %v3054 = vadd.f32 %v3038, 1e-12
        %v3055 = vadd.f32 %v3039, 1e-12
        %v3056 = vadd.f32 %v3040, 1e-12
        %v3057 = vadd.f32 %v3041, 1e-12
        %v3058 = vadd.f32 %v3042, 1e-12
        %v3059 = vrsqrt.pop %v3043
        %v3060 = vmul.f32 %v3059, %v3043
        %v3061 = vmul.f32 %v3060, %v3059
        %v3062 = vmul.f32 0.5, %v3061
        %v3063 = vsub.f32 1.5, %v3062
        %v3064 = vmul.f32 %v3059, %v3063
        %vm3065 = vweird.f32 %v3043
        %vm3066 = vweird.f32 %v3059
        %vm3067 = vmor %vm3065, %vm3066
        %v3068 = vsel %vm3067, %v3059, %v3064
        %v3069 = vrsqrt.pop %v3044
        %v3070 = vmul.f32 %v3069, %v3044
        %v3071 = vmul.f32 %v3070, %v3069
        %v3072 = vmul.f32 0.5, %v3071
        %v3073 = vsub.f32 1.5, %v3072
        %v3074 = vmul.f32 %v3069, %v3073
        %vm3075 = vweird.f32 %v3044
        %vm3076 = vweird.f32 %v3069
        %vm3077 = vmor %vm3075, %vm3076
        %v3078 = vsel %vm3077, %v3069, %v3074
        %v3079 = vrsqrt.pop %v3045
        %v3080 = vmul.f32 %v3079, %v3045
        %v3081 = vmul.f32 %v3080, %v3079
        %v3082 = vmul.f32 0.5, %v3081
        %v3083 = vsub.f32 1.5, %v3082
        %v3084 = vmul.f32 %v3079, %v3083
        %vm3085 = vweird.f32 %v3045
        %vm3086 = vweird.f32 %v3079
        %vm3087 = vmor %vm3085, %vm3086
        %v3088 = vsel %vm3087, %v3079, %v3084
        %v3089 = vrsqrt.pop %v3046
        %v3090 = vmul.f32 %v3089, %v3046
        %v3091 = vmul.f32 %v3090, %v3089
        %v3092 = vmul.f32 0.5, %v3091
        %v3093 = vsub.f32 1.5, %v3092
        %v3094 = vmul.f32 %v3089, %v3093
        %vm3095 = vweird.f32 %v3046
        %vm3096 = vweird.f32 %v3089
        %vm3097 = vmor %vm3095, %vm3096
        %v3098 = vsel %vm3097, %v3089, %v3094
        %v3099 = vrsqrt.pop %v3047
        %v3100 = vmul.f32 %v3099, %v3047
        %v3101 = vmul.f32 %v3100, %v3099
        %v3102 = vmul.f32 0.5, %v3101
        %v3103 = vsub.f32 1.5, %v3102
        %v3104 = vmul.f32 %v3099, %v3103
        %vm3105 = vweird.f32 %v3047
        %vm3106 = vweird.f32 %v3099
        %vm3107 = vmor %vm3105, %vm3106
        %v3108 = vsel %vm3107, %v3099, %v3104
        %v3109 = vrsqrt.pop %v3048
        %v3110 = vmul.f32 %v3109, %v3048
        %v3111 = vmul.f32 %v3110, %v3109
        %v3112 = vmul.f32 0.5, %v3111
        %v3113 = vsub.f32 1.5, %v3112
        %v3114 = vmul.f32 %v3109, %v3113
        %vm3115 = vweird.f32 %v3048
        %vm3116 = vweird.f32 %v3109
        %vm3117 = vmor %vm3115, %vm3116
        %v3118 = vsel %vm3117, %v3109, %v3114
        %v3119 = vrsqrt.pop %v3049
        %v3120 = vmul.f32 %v3119, %v3049
        %v3121 = vmul.f32 %v3120, %v3119
        %v3122 = vmul.f32 0.5, %v3121
        %v3123 = vsub.f32 1.5, %v3122
        %v3124 = vmul.f32 %v3119, %v3123
        %vm3125 = vweird.f32 %v3049
        %vm3126 = vweird.f32 %v3119
        %vm3127 = vmor %vm3125, %vm3126
        %v3128 = vsel %vm3127, %v3119, %v3124
        %v3129 = vrsqrt.pop %v3050
        %v3130 = vmul.f32 %v3129, %v3050
        %v3131 = vmul.f32 %v3130, %v3129
        %v3132 = vmul.f32 0.5, %v3131
        %v3133 = vsub.f32 1.5, %v3132
        %v3134 = vmul.f32 %v3129, %v3133
        %vm3135 = vweird.f32 %v3050
        %vm3136 = vweird.f32 %v3129
        %vm3137 = vmor %vm3135, %vm3136
        %v3138 = vsel %vm3137, %v3129, %v3134
        %v3139 = vrsqrt.pop %v3051
        %v3140 = vmul.f32 %v3139, %v3051
        %v3141 = vmul.f32 %v3140, %v3139
        %v3142 = vmul.f32 0.5, %v3141
        %v3143 = vsub.f32 1.5, %v3142
        %v3144 = vmul.f32 %v3139, %v3143
        %vm3145 = vweird.f32 %v3051
        %vm3146 = vweird.f32 %v3139
        %vm3147 = vmor %vm3145, %vm3146
        %v3148 = vsel %vm3147, %v3139, %v3144
        %v3149 = vrsqrt.pop %v3052
        %v3150 = vmul.f32 %v3149, %v3052
        %v3151 = vmul.f32 %v3150, %v3149
        %v3152 = vmul.f32 0.5, %v3151
        %v3153 = vsub.f32 1.5, %v3152
        %v3154 = vmul.f32 %v3149, %v3153
        %vm3155 = vweird.f32 %v3052
        %vm3156 = vweird.f32 %v3149
        %vm3157 = vmor %vm3155, %vm3156
        %v3158 = vsel %vm3157, %v3149, %v3154
        %v3159 = vrsqrt.pop %v3053
        %v3160 = vmul.f32 %v3159, %v3053
        %v3161 = vmul.f32 %v3160, %v3159
        %v3162 = vmul.f32 0.5, %v3161
        %v3163 = vsub.f32 1.5, %v3162
        %v3164 = vmul.f32 %v3159, %v3163
        %vm3165 = vweird.f32 %v3053
        %vm3166 = vweird.f32 %v3159
        %vm3167 = vmor %vm3165, %vm3166
        %v3168 = vsel %vm3167, %v3159, %v3164
        %v3169 = vrsqrt.pop %v3054
        %v3170 = vmul.f32 %v3169, %v3054
        %v3171 = vmul.f32 %v3170, %v3169
        %v3172 = vmul.f32 0.5, %v3171
        %v3173 = vsub.f32 1.5, %v3172
        %v3174 = vmul.f32 %v3169, %v3173
        %vm3175 = vweird.f32 %v3054
        %vm3176 = vweird.f32 %v3169
        %vm3177 = vmor %vm3175, %vm3176
        %v3178 = vsel %vm3177, %v3169, %v3174
        %v3179 = vrsqrt.pop %v3055
        %v3180 = vmul.f32 %v3179, %v3055
        %v3181 = vmul.f32 %v3180, %v3179
        %v3182 = vmul.f32 0.5, %v3181
        %v3183 = vsub.f32 1.5, %v3182
        %v3184 = vmul.f32 %v3179, %v3183
        %vm3185 = vweird.f32 %v3055
        %vm3186 = vweird.f32 %v3179
        %vm3187 = vmor %vm3185, %vm3186
        %v3188 = vsel %vm3187, %v3179, %v3184
        %v3189 = vrsqrt.pop %v3056
        %v3190 = vmul.f32 %v3189, %v3056
        %v3191 = vmul.f32 %v3190, %v3189
        %v3192 = vmul.f32 0.5, %v3191
        %v3193 = vsub.f32 1.5, %v3192
        %v3194 = vmul.f32 %v3189, %v3193
        %vm3195 = vweird.f32 %v3056
        %vm3196 = vweird.f32 %v3189
        %vm3197 = vmor %vm3195, %vm3196
        %v3198 = vsel %vm3197, %v3189, %v3194
        %v3199 = vrsqrt.pop %v3057
        %v3200 = vmul.f32 %v3199, %v3057
        %v3201 = vmul.f32 %v3200, %v3199
        %v3202 = vmul.f32 0.5, %v3201
        %v3203 = vsub.f32 1.5, %v3202
        %v3204 = vmul.f32 %v3199, %v3203
        %vm3205 = vweird.f32 %v3057
        %vm3206 = vweird.f32 %v3199
        %vm3207 = vmor %vm3205, %vm3206
        %v3208 = vsel %vm3207, %v3199, %v3204
        %v3209 = vrsqrt.pop %v3058
        %v3210 = vmul.f32 %v3209, %v3058
        %v3211 = vmul.f32 %v3210, %v3209
        %v3212 = vmul.f32 0.5, %v3211
        %v3213 = vsub.f32 1.5, %v3212
        %v3214 = vmul.f32 %v3209, %v3213
        %vm3215 = vweird.f32 %v3058
        %vm3216 = vweird.f32 %v3209
        %vm3217 = vmor %vm3215, %vm3216
        %v3218 = vsel %vm3217, %v3209, %v3214
        %v3219 = vmul.f32 %v2963, %v3068
        %v3220 = vmul.f32 %v2964, %v3078
        %v3221 = vmul.f32 %v2965, %v3088
        %v3222 = vmul.f32 %v2966, %v3098
        %v3223 = vmul.f32 %v2967, %v3108
        %v3224 = vmul.f32 %v2968, %v3118
        %v3225 = vmul.f32 %v2969, %v3128
        %v3226 = vmul.f32 %v2970, %v3138
        %v3227 = vmul.f32 %v2971, %v3148
        %v3228 = vmul.f32 %v2972, %v3158
        %v3229 = vmul.f32 %v2973, %v3168
        %v3230 = vmul.f32 %v2974, %v3178
        %v3231 = vmul.f32 %v2975, %v3188
        %v3232 = vmul.f32 %v2976, %v3198
        %v3233 = vmul.f32 %v2977, %v3208
        %v3234 = vmul.f32 %v2978, %v3218
        %v3236 = vperm.slane %v2906, 0
        %v3238 = vmul.f32 %v3219, %v3236
        %v3239 = vmul.f32 %v3220, %v3236
        %v3240 = vmul.f32 %v3221, %v3236
        %v3241 = vmul.f32 %v3222, %v3236
        %v3242 = vmul.f32 %v3223, %v3236
        %v3243 = vmul.f32 %v3224, %v3236
        %v3244 = vmul.f32 %v3225, %v3236
        %v3245 = vmul.f32 %v3226, %v3236
        %v3246 = vmul.f32 %v3227, %v3236
        %v3247 = vmul.f32 %v3228, %v3236
        %v3248 = vmul.f32 %v3229, %v3236
        %v3249 = vmul.f32 %v3230, %v3236
        %v3250 = vmul.f32 %v3231, %v3236
        %v3251 = vmul.f32 %v3232, %v3236
        %v3252 = vmul.f32 %v3233, %v3236
        %v3253 = vmul.f32 %v3234, %v3236
        %v3255 = vperm.slane %v2907, 0
        %v3257 = vadd.f32 %v3238, %v3255
        %v3258 = vadd.f32 %v3239, %v3255
        %v3259 = vadd.f32 %v3240, %v3255
        %v3260 = vadd.f32 %v3241, %v3255
        %v3261 = vadd.f32 %v3242, %v3255
        %v3262 = vadd.f32 %v3243, %v3255
        %v3263 = vadd.f32 %v3244, %v3255
        %v3264 = vadd.f32 %v3245, %v3255
        %v3265 = vadd.f32 %v3246, %v3255
        %v3266 = vadd.f32 %v3247, %v3255
        %v3267 = vadd.f32 %v3248, %v3255
        %v3268 = vadd.f32 %v3249, %v3255
        %v3269 = vadd.f32 %v3250, %v3255
        %v3270 = vadd.f32 %v3251, %v3255
        %v3271 = vadd.f32 %v3252, %v3255
        %v3272 = vadd.f32 %v3253, %v3255
        %v3273 = vld [vmem:[%s777] sm:$0xff]
        %v3274 = vld [vmem:[%s777 + $0x8] sm:$0xff]
        %v3275 = vld [vmem:[%s777 + $0x10] sm:$0xff]
        %v3276 = vld [vmem:[%s777 + $0x18] sm:$0xff]
        %v3277 = vld [vmem:[%s777 + $0x20] sm:$0xff]
        %v3278 = vld [vmem:[%s777 + $0x28] sm:$0xff]
        %v3279 = vld [vmem:[%s777 + $0x30] sm:$0xff]
        %v3280 = vld [vmem:[%s777 + $0x38] sm:$0xff]
        %v3281 = vld [vmem:[%s777 + $0x40] sm:$0xff]
        %v3282 = vld [vmem:[%s777 + $0x48] sm:$0xff]
        %v3283 = vld [vmem:[%s777 + $0x50] sm:$0xff]
        %v3284 = vld [vmem:[%s777 + $0x58] sm:$0xff]
        %v3285 = vld [vmem:[%s777 + $0x60] sm:$0xff]
        %v3286 = vld [vmem:[%s777 + $0x68] sm:$0xff]
        %v3287 = vld [vmem:[%s777 + $0x70] sm:$0xff]
        %v3288 = vld [vmem:[%s777 + $0x78] sm:$0xff]
        %v3289 = vpack.c.bf16 %v3258, %v3257
        %v3290 = vpack.c.bf16 %v3260, %v3259
        %v3291 = vpack.c.bf16 %v3262, %v3261
        %v3292 = vpack.c.bf16 %v3264, %v3263
        %v3293 = vpack.c.bf16 %v3266, %v3265
        %v3294 = vpack.c.bf16 %v3268, %v3267
        %v3295 = vpack.c.bf16 %v3270, %v3269
        %v3296 = vpack.c.bf16 %v3272, %v3271
        %v3297 = vld [vmem:[%s781] sm:$0x3]
        %v3299 = vperm.slane %v3297, 0
        %v3300 = vperm.slane %v3297, 1
        %v3319 = vunpack.c.l.b16 %v3273
        %v3320 = vunpack.c.h.b16 %v3273
        %v3321 = vunpack.c.l.b16 %v3274
        %v3322 = vunpack.c.h.b16 %v3274
        %v3323 = vunpack.c.l.b16 %v3275
        %v3324 = vunpack.c.h.b16 %v3275
        %v3325 = vunpack.c.l.b16 %v3276
        %v3326 = vunpack.c.h.b16 %v3276
        %v3327 = vunpack.c.l.b16 %v3277
        %v3328 = vunpack.c.h.b16 %v3277
        %v3329 = vunpack.c.l.b16 %v3278
        %v3330 = vunpack.c.h.b16 %v3278
        %v3331 = vunpack.c.l.b16 %v3279
        %v3332 = vunpack.c.h.b16 %v3279
        %v3333 = vunpack.c.l.b16 %v3280
        %v3334 = vunpack.c.h.b16 %v3280
        %v3335 = vunpack.c.l.b16 %v3281
        %v3336 = vunpack.c.h.b16 %v3281
        %v3337 = vunpack.c.l.b16 %v3282
        %v3338 = vunpack.c.h.b16 %v3282
        %v3339 = vunpack.c.l.b16 %v3283
        %v3340 = vunpack.c.h.b16 %v3283
        %v3341 = vunpack.c.l.b16 %v3284
        %v3342 = vunpack.c.h.b16 %v3284
        %v3343 = vunpack.c.l.b16 %v3285
        %v3344 = vunpack.c.h.b16 %v3285
        %v3345 = vunpack.c.l.b16 %v3286
        %v3346 = vunpack.c.h.b16 %v3286
        %v3347 = vunpack.c.l.b16 %v3287
        %v3348 = vunpack.c.h.b16 %v3287
        %v3349 = vunpack.c.l.b16 %v3288
        %v3350 = vunpack.c.h.b16 %v3288
        %v3351 = vpack.c.b16 %v3321, %v3319
        %v3352 = vpack.c.b16 %v3322, %v3320
        %v3353 = vpack.c.b16 %v3325, %v3323
        %v3354 = vpack.c.b16 %v3326, %v3324
        %v3355 = vpack.c.b16 %v3329, %v3327
        %v3356 = vpack.c.b16 %v3330, %v3328
        %v3357 = vpack.c.b16 %v3333, %v3331
        %v3358 = vpack.c.b16 %v3334, %v3332
        %v3359 = vpack.c.b16 %v3337, %v3335
        %v3360 = vpack.c.b16 %v3338, %v3336
        %v3361 = vpack.c.b16 %v3341, %v3339
        %v3362 = vpack.c.b16 %v3342, %v3340
        %v3363 = vpack.c.b16 %v3345, %v3343
        %v3364 = vpack.c.b16 %v3346, %v3344
        %v3365 = vpack.c.b16 %v3349, %v3347
        %v3366 = vpack.c.b16 %v3350, %v3348
        %3383 = vmatpush.bf16.msra.mxu0 %v3365
        %3384 = vmatpush.bf16.msra.mxu0 %v3363
        %3385 = vmatpush.bf16.msra.mxu0 %v3361
        %3386 = vmatpush.bf16.msra.mxu0 %v3359
        %3387 = vmatpush.bf16.msra.mxu0 %v3357
        %3388 = vmatpush.bf16.msra.mxu0 %v3355
        %3389 = vmatpush.bf16.msra.mxu0 %v3353
        %3390 = vmatpush.bf16.msra.mxu0 %v3351
        %3391 = vmatmul.bf16.gmra.mxu0 %v3289
        %v3392 = vpop.f32.mrf.mxu0
        %v3393 = vadd.f32 %v3299, %v3392
        %v3394 = vpop.f32.mrf.mxu0
        %v3395 = vadd.f32 %v3299, %v3394
        %3396 = vmatmul.bf16.gmra.mxu0 %v3290
        %v3397 = vpop.f32.mrf.mxu0
        %v3398 = vadd.f32 %v3299, %v3397
        %v3399 = vpop.f32.mrf.mxu0
        %v3400 = vadd.f32 %v3299, %v3399
        %3401 = vmatmul.bf16.gmra.mxu0 %v3291
        %v3402 = vpop.f32.mrf.mxu0
        %v3403 = vadd.f32 %v3299, %v3402
        %v3404 = vpop.f32.mrf.mxu0
        %v3405 = vadd.f32 %v3299, %v3404
        %3406 = vmatmul.bf16.gmra.mxu0 %v3292
        %v3407 = vpop.f32.mrf.mxu0
        %v3408 = vadd.f32 %v3299, %v3407
        %v3409 = vpop.f32.mrf.mxu0
        %v3410 = vadd.f32 %v3299, %v3409
        %3411 = vmatmul.bf16.gmra.mxu0 %v3293
        %v3412 = vpop.f32.mrf.mxu0
        %v3413 = vadd.f32 %v3299, %v3412
        %v3414 = vpop.f32.mrf.mxu0
        %v3415 = vadd.f32 %v3299, %v3414
        %3416 = vmatmul.bf16.gmra.mxu0 %v3294
        %v3417 = vpop.f32.mrf.mxu0
        %v3418 = vadd.f32 %v3299, %v3417
        %v3419 = vpop.f32.mrf.mxu0
        %v3420 = vadd.f32 %v3299, %v3419
        %3421 = vmatmul.bf16.gmra.mxu0 %v3295
        %v3422 = vpop.f32.mrf.mxu0
        %v3423 = vadd.f32 %v3299, %v3422
        %v3424 = vpop.f32.mrf.mxu0
        %v3425 = vadd.f32 %v3299, %v3424
        %3426 = vmatmul.bf16.gmra.mxu0 %v3296
        %v3427 = vpop.f32.mrf.mxu0
        %v3428 = vadd.f32 %v3299, %v3427
        %v3429 = vpop.f32.mrf.mxu0
        %v3430 = vadd.f32 %v3299, %v3429
        %3431 = vdwg.mxu0
        %3432 = vmatpush.bf16.msra.mxu0 %v3366
        %3433 = vmatpush.bf16.msra.mxu0 %v3364
        %3434 = vmatpush.bf16.msra.mxu0 %v3362
        %3435 = vmatpush.bf16.msra.mxu0 %v3360
        %3436 = vmatpush.bf16.msra.mxu0 %v3358
        %3437 = vmatpush.bf16.msra.mxu0 %v3356
        %3438 = vmatpush.bf16.msra.mxu0 %v3354
        %3439 = vmatpush.bf16.msra.mxu0 %v3352
        %3440 = vmatmul.bf16.gmra.mxu0 %v3289
        %v3441 = vpop.f32.mrf.mxu0
        %v3442 = vadd.f32 %v3300, %v3441
        %v3443 = vpop.f32.mrf.mxu0
        %v3444 = vadd.f32 %v3300, %v3443
        %3445 = vmatmul.bf16.gmra.mxu0 %v3290
        %v3446 = vpop.f32.mrf.mxu0
        %v3447 = vadd.f32 %v3300, %v3446
        %v3448 = vpop.f32.mrf.mxu0
        %v3449 = vadd.f32 %v3300, %v3448
        %3450 = vmatmul.bf16.gmra.mxu0 %v3291
        %v3451 = vpop.f32.mrf.mxu0
        %v3452 = vadd.f32 %v3300, %v3451
        %v3453 = vpop.f32.mrf.mxu0
        %v3454 = vadd.f32 %v3300, %v3453
        %3455 = vmatmul.bf16.gmra.mxu0 %v3292
        %v3456 = vpop.f32.mrf.mxu0
        %v3457 = vadd.f32 %v3300, %v3456
        %v3458 = vpop.f32.mrf.mxu0
        %v3459 = vadd.f32 %v3300, %v3458
        %3460 = vmatmul.bf16.gmra.mxu0 %v3293
        %v3461 = vpop.f32.mrf.mxu0
        %v3462 = vadd.f32 %v3300, %v3461
        %v3463 = vpop.f32.mrf.mxu0
        %v3464 = vadd.f32 %v3300, %v3463
        %3465 = vmatmul.bf16.gmra.mxu0 %v3294
        %v3466 = vpop.f32.mrf.mxu0
        %v3467 = vadd.f32 %v3300, %v3466
        %v3468 = vpop.f32.mrf.mxu0
        %v3469 = vadd.f32 %v3300, %v3468
        %3470 = vmatmul.bf16.gmra.mxu0 %v3295
        %v3471 = vpop.f32.mrf.mxu0
        %v3472 = vadd.f32 %v3300, %v3471
        %v3473 = vpop.f32.mrf.mxu0
        %v3474 = vadd.f32 %v3300, %v3473
        %3475 = vmatmul.bf16.gmra.mxu0 %v3296
        %v3476 = vpop.f32.mrf.mxu0
        %v3477 = vadd.f32 %v3300, %v3476
        %v3478 = vpop.f32.mrf.mxu0
        %v3479 = vadd.f32 %v3300, %v3478
        %3480 = vdwg.mxu0
        %v3481 = vmul.f32 %v3393, 0.5
        %v3482 = vmul.f32 %v3442, 0.5
        %v3483 = vmul.f32 %v3395, 0.5
        %v3484 = vmul.f32 %v3444, 0.5
        %v3485 = vmul.f32 %v3398, 0.5
        %v3486 = vmul.f32 %v3447, 0.5
        %v3487 = vmul.f32 %v3400, 0.5
        %v3488 = vmul.f32 %v3449, 0.5
        %v3489 = vmul.f32 %v3403, 0.5
        %v3490 = vmul.f32 %v3452, 0.5
        %v3491 = vmul.f32 %v3405, 0.5
        %v3492 = vmul.f32 %v3454, 0.5
        %v3493 = vmul.f32 %v3408, 0.5
        %v3494 = vmul.f32 %v3457, 0.5
        %v3495 = vmul.f32 %v3410, 0.5
        %v3496 = vmul.f32 %v3459, 0.5
        %v3497 = vmul.f32 %v3413, 0.5
        %v3498 = vmul.f32 %v3462, 0.5
        %v3499 = vmul.f32 %v3415, 0.5
        %v3500 = vmul.f32 %v3464, 0.5
        %v3501 = vmul.f32 %v3418, 0.5
        %v3502 = vmul.f32 %v3467, 0.5
        %v3503 = vmul.f32 %v3420, 0.5
        %v3504 = vmul.f32 %v3469, 0.5
        %v3505 = vmul.f32 %v3423, 0.5
        %v3506 = vmul.f32 %v3472, 0.5
        %v3507 = vmul.f32 %v3425, 0.5
        %v3508 = vmul.f32 %v3474, 0.5
        %v3509 = vmul.f32 %v3428, 0.5
        %v3510 = vmul.f32 %v3477, 0.5
        %v3511 = vmul.f32 %v3430, 0.5
        %v3512 = vmul.f32 %v3479, 0.5
        %v3513 = vmul.f32 %v3393, 0.044715
        %v3514 = vmul.f32 %v3442, 0.044715
        %v3515 = vmul.f32 %v3395, 0.044715
        %v3516 = vmul.f32 %v3444, 0.044715
        %v3517 = vmul.f32 %v3398, 0.044715
        %v3518 = vmul.f32 %v3447, 0.044715
        %v3519 = vmul.f32 %v3400, 0.044715
        %v3520 = vmul.f32 %v3449, 0.044715
        %v3521 = vmul.f32 %v3403, 0.044715
        %v3522 = vmul.f32 %v3452, 0.044715
        %v3523 = vmul.f32 %v3405, 0.044715
        %v3524 = vmul.f32 %v3454, 0.044715
        %v3525 = vmul.f32 %v3408, 0.044715
        %v3526 = vmul.f32 %v3457, 0.044715
        %v3527 = vmul.f32 %v3410, 0.044715
        %v3528 = vmul.f32 %v3459, 0.044715
        %v3529 = vmul.f32 %v3413, 0.044715
        %v3530 = vmul.f32 %v3462, 0.044715
        %v3531 = vmul.f32 %v3415, 0.044715
        %v3532 = vmul.f32 %v3464, 0.044715
        %v3533 = vmul.f32 %v3418, 0.044715
        %v3534 = vmul.f32 %v3467, 0.044715
        %v3535 = vmul.f32 %v3420, 0.044715
        %v3536 = vmul.f32 %v3469, 0.044715
        %v3537 = vmul.f32 %v3423, 0.044715
        %v3538 = vmul.f32 %v3472, 0.044715
        %v3539 = vmul.f32 %v3425, 0.044715
        %v3540 = vmul.f32 %v3474, 0.044715
        %v3541 = vmul.f32 %v3428, 0.044715
        %v3542 = vmul.f32 %v3477, 0.044715
        %v3543 = vmul.f32 %v3430, 0.044715
        %v3544 = vmul.f32 %v3479, 0.044715
        %v3545 = vmul.f32 %v3513, %v3393
        %v3546 = vmul.f32 %v3514, %v3442
        %v3547 = vmul.f32 %v3515, %v3395
        %v3548 = vmul.f32 %v3516, %v3444
        %v3549 = vmul.f32 %v3517, %v3398
        %v3550 = vmul.f32 %v3518, %v3447
        %v3551 = vmul.f32 %v3519, %v3400
        %v3552 = vmul.f32 %v3520, %v3449
        %v3553 = vmul.f32 %v3521, %v3403
        %v3554 = vmul.f32 %v3522, %v3452
        %v3555 = vmul.f32 %v3523, %v3405
        %v3556 = vmul.f32 %v3524, %v3454
        %v3557 = vmul.f32 %v3525, %v3408
        %v3558 = vmul.f32 %v3526, %v3457
        %v3559 = vmul.f32 %v3527, %v3410
        %v3560 = vmul.f32 %v3528, %v3459
        %v3561 = vmul.f32 %v3529, %v3413
        %v3562 = vmul.f32 %v3530, %v3462
        %v3563 = vmul.f32 %v3531, %v3415
        %v3564 = vmul.f32 %v3532, %v3464
        %v3565 = vmul.f32 %v3533, %v3418
        %v3566 = vmul.f32 %v3534, %v3467
        %v3567 = vmul.f32 %v3535, %v3420
        %v3568 = vmul.f32 %v3536, %v3469
        %v3569 = vmul.f32 %v3537, %v3423
        %v3570 = vmul.f32 %v3538, %v3472
        %v3571 = vmul.f32 %v3539, %v3425
        %v3572 = vmul.f32 %v3540, %v3474
        %v3573 = vmul.f32 %v3541, %v3428
        %v3574 = vmul.f32 %v3542, %v3477
        %v3575 = vmul.f32 %v3543, %v3430
        %v3576 = vmul.f32 %v3544, %v3479
        %v3577 = vmul.f32 %v3545, %v3393
        %v3578 = vmul.f32 %v3546, %v3442
        %v3579 = vmul.f32 %v3547, %v3395
        %v3580 = vmul.f32 %v3548, %v3444
        %v3581 = vmul.f32 %v3549, %v3398
        %v3582 = vmul.f32 %v3550, %v3447
        %v3583 = vmul.f32 %v3551, %v3400
        %v3584 = vmul.f32 %v3552, %v3449
        %v3585 = vmul.f32 %v3553, %v3403
        %v3586 = vmul.f32 %v3554, %v3452
        %v3587 = vmul.f32 %v3555, %v3405
        %v3588 = vmul.f32 %v3556, %v3454
        %v3589 = vmul.f32 %v3557, %v3408
        %v3590 = vmul.f32 %v3558, %v3457
        %v3591 = vmul.f32 %v3559, %v3410
        %v3592 = vmul.f32 %v3560, %v3459
        %v3593 = vmul.f32 %v3561, %v3413
        %v3594 = vmul.f32 %v3562, %v3462
        %v3595 = vmul.f32 %v3563, %v3415
        %v3596 = vmul.f32 %v3564, %v3464
        %v3597 = vmul.f32 %v3565, %v3418
        %v3598 = vmul.f32 %v3566, %v3467
        %v3599 = vmul.f32 %v3567, %v3420
        %v3600 = vmul.f32 %v3568, %v3469
        %v3601 = vmul.f32 %v3569, %v3423
        %v3602 = vmul.f32 %v3570, %v3472
        %v3603 = vmul.f32 %v3571, %v3425
        %v3604 = vmul.f32 %v3572, %v3474
        %v3605 = vmul.f32 %v3573, %v3428
        %v3606 = vmul.f32 %v3574, %v3477
        %v3607 = vmul.f32 %v3575, %v3430
        %v3608 = vmul.f32 %v3576, %v3479
        %v3609 = vadd.f32 %v3393, %v3577
        %v3610 = vadd.f32 %v3442, %v3578
        %v3611 = vadd.f32 %v3395, %v3579
        %v3612 = vadd.f32 %v3444, %v3580
        %v3613 = vadd.f32 %v3398, %v3581
        %v3614 = vadd.f32 %v3447, %v3582
        %v3615 = vadd.f32 %v3400, %v3583
        %v3616 = vadd.f32 %v3449, %v3584
        %v3617 = vadd.f32 %v3403, %v3585
        %v3618 = vadd.f32 %v3452, %v3586
        %v3619 = vadd.f32 %v3405, %v3587
        %v3620 = vadd.f32 %v3454, %v3588
        %v3621 = vadd.f32 %v3408, %v3589
        %v3622 = vadd.f32 %v3457, %v3590
        %v3623 = vadd.f32 %v3410, %v3591
        %v3624 = vadd.f32 %v3459, %v3592
        %v3625 = vadd.f32 %v3413, %v3593
        %v3626 = vadd.f32 %v3462, %v3594
        %v3627 = vadd.f32 %v3415, %v3595
        %v3628 = vadd.f32 %v3464, %v3596
        %v3629 = vadd.f32 %v3418, %v3597
        %v3630 = vadd.f32 %v3467, %v3598
        %v3631 = vadd.f32 %v3420, %v3599
        %v3632 = vadd.f32 %v3469, %v3600
        %v3633 = vadd.f32 %v3423, %v3601
        %v3634 = vadd.f32 %v3472, %v3602
        %v3635 = vadd.f32 %v3425, %v3603
        %v3636 = vadd.f32 %v3474, %v3604
        %v3637 = vadd.f32 %v3428, %v3605
        %v3638 = vadd.f32 %v3477, %v3606
        %v3639 = vadd.f32 %v3430, %v3607
        %v3640 = vadd.f32 %v3479, %v3608
        %v3641 = vmul.f32 %v3609, 0.7978846
        %v3642 = vmul.f32 %v3610, 0.7978846
        %v3643 = vmul.f32 %v3611, 0.7978846
        %v3644 = vmul.f32 %v3612, 0.7978846
        %v3645 = vmul.f32 %v3613, 0.7978846
        %v3646 = vmul.f32 %v3614, 0.7978846
        %v3647 = vmul.f32 %v3615, 0.7978846
        %v3648 = vmul.f32 %v3616, 0.7978846
        %v3649 = vmul.f32 %v3617, 0.7978846
        %v3650 = vmul.f32 %v3618, 0.7978846
        %v3651 = vmul.f32 %v3619, 0.7978846
        %v3652 = vmul.f32 %v3620, 0.7978846
        %v3653 = vmul.f32 %v3621, 0.7978846
        %v3654 = vmul.f32 %v3622, 0.7978846
        %v3655 = vmul.f32 %v3623, 0.7978846
        %v3656 = vmul.f32 %v3624, 0.7978846
        %v3657 = vmul.f32 %v3625, 0.7978846
        %v3658 = vmul.f32 %v3626, 0.7978846
        %v3659 = vmul.f32 %v3627, 0.7978846
        %v3660 = vmul.f32 %v3628, 0.7978846
        %v3661 = vmul.f32 %v3629, 0.7978846
        %v3662 = vmul.f32 %v3630, 0.7978846
        %v3663 = vmul.f32 %v3631, 0.7978846
        %v3664 = vmul.f32 %v3632, 0.7978846
        %v3665 = vmul.f32 %v3633, 0.7978846
        %v3666 = vmul.f32 %v3634, 0.7978846
        %v3667 = vmul.f32 %v3635, 0.7978846
        %v3668 = vmul.f32 %v3636, 0.7978846
        %v3669 = vmul.f32 %v3637, 0.7978846
        %v3670 = vmul.f32 %v3638, 0.7978846
        %v3671 = vmul.f32 %v3639, 0.7978846
        %v3672 = vmul.f32 %v3640, 0.7978846
        %v3673 = vtanh.pop %v3641
        %v3674 = vtanh.pop %v3642
        %v3675 = vtanh.pop %v3643
        %v3676 = vtanh.pop %v3644
        %v3677 = vtanh.pop %v3645
        %v3678 = vtanh.pop %v3646
        %v3679 = vtanh.pop %v3647
        %v3680 = vtanh.pop %v3648
        %v3681 = vtanh.pop %v3649
        %v3682 = vtanh.pop %v3650
        %v3683 = vtanh.pop %v3651
        %v3684 = vtanh.pop %v3652
        %v3685 = vtanh.pop %v3653
        %v3686 = vtanh.pop %v3654
        %v3687 = vtanh.pop %v3655
        %v3688 = vtanh.pop %v3656
        %v3689 = vtanh.pop %v3657
        %v3690 = vtanh.pop %v3658
        %v3691 = vtanh.pop %v3659
        %v3692 = vtanh.pop %v3660
        %v3693 = vtanh.pop %v3661
        %v3694 = vtanh.pop %v3662
        %v3695 = vtanh.pop %v3663
        %v3696 = vtanh.pop %v3664
        %v3697 = vtanh.pop %v3665
        %v3698 = vtanh.pop %v3666
        %v3699 = vtanh.pop %v3667
        %v3700 = vtanh.pop %v3668
        %v3701 = vtanh.pop %v3669
        %v3702 = vtanh.pop %v3670
        %v3703 = vtanh.pop %v3671
        %v3704 = vtanh.pop %v3672
        %v3705 = vadd.f32 %v3673, 1.0
        %v3706 = vadd.f32 %v3674, 1.0
        %v3707 = vadd.f32 %v3675, 1.0
        %v3708 = vadd.f32 %v3676, 1.0
        %v3709 = vadd.f32 %v3677, 1.0
        %v3710 = vadd.f32 %v3678, 1.0
        %v3711 = vadd.f32 %v3679, 1.0
        %v3712 = vadd.f32 %v3680, 1.0
        %v3713 = vadd.f32 %v3681, 1.0
        %v3714 = vadd.f32 %v3682, 1.0
        %v3715 = vadd.f32 %v3683, 1.0
        %v3716 = vadd.f32 %v3684, 1.0
        %v3717 = vadd.f32 %v3685, 1.0
        %v3718 = vadd.f32 %v3686, 1.0
        %v3719 = vadd.f32 %v3687, 1.0
        %v3720 = vadd.f32 %v3688, 1.0
        %v3721 = vadd.f32 %v3689, 1.0
        %v3722 = vadd.f32 %v3690, 1.0
        %v3723 = vadd.f32 %v3691, 1.0
        %v3724 = vadd.f32 %v3692, 1.0
        %v3725 = vadd.f32 %v3693, 1.0
        %v3726 = vadd.f32 %v3694, 1.0
        %v3727 = vadd.f32 %v3695, 1.0
        %v3728 = vadd.f32 %v3696, 1.0
        %v3729 = vadd.f32 %v3697, 1.0
        %v3730 = vadd.f32 %v3698, 1.0
        %v3731 = vadd.f32 %v3699, 1.0
        %v3732 = vadd.f32 %v3700, 1.0
        %v3733 = vadd.f32 %v3701, 1.0
        %v3734 = vadd.f32 %v3702, 1.0
        %v3735 = vadd.f32 %v3703, 1.0
        %v3736 = vadd.f32 %v3704, 1.0
        %v3737 = vmul.f32 %v3481, %v3705
        %v3738 = vmul.f32 %v3482, %v3706
        %v3739 = vmul.f32 %v3483, %v3707
        %v3740 = vmul.f32 %v3484, %v3708
        %v3741 = vmul.f32 %v3485, %v3709
        %v3742 = vmul.f32 %v3486, %v3710
        %v3743 = vmul.f32 %v3487, %v3711
        %v3744 = vmul.f32 %v3488, %v3712
        %v3745 = vmul.f32 %v3489, %v3713
        %v3746 = vmul.f32 %v3490, %v3714
        %v3747 = vmul.f32 %v3491, %v3715
        %v3748 = vmul.f32 %v3492, %v3716
        %v3749 = vmul.f32 %v3493, %v3717
        %v3750 = vmul.f32 %v3494, %v3718
        %v3751 = vmul.f32 %v3495, %v3719
        %v3752 = vmul.f32 %v3496, %v3720
        %v3753 = vmul.f32 %v3497, %v3721
        %v3754 = vmul.f32 %v3498, %v3722
        %v3755 = vmul.f32 %v3499, %v3723
        %v3756 = vmul.f32 %v3500, %v3724
        %v3757 = vmul.f32 %v3501, %v3725
        %v3758 = vmul.f32 %v3502, %v3726
        %v3759 = vmul.f32 %v3503, %v3727
        %v3760 = vmul.f32 %v3504, %v3728
        %v3761 = vmul.f32 %v3505, %v3729
        %v3762 = vmul.f32 %v3506, %v3730
        %v3763 = vmul.f32 %v3507, %v3731
        %v3764 = vmul.f32 %v3508, %v3732
        %v3765 = vmul.f32 %v3509, %v3733
        %v3766 = vmul.f32 %v3510, %v3734
        %v3767 = vmul.f32 %v3511, %v3735
        %v3768 = vmul.f32 %v3512, %v3736
        %v3769 = vld [vmem:[%s786] sm:$0xf]
        %v3770 = vld [vmem:[%s786 + $0x4] sm:$0xf]
        %v3771 = vld [vmem:[%s786 + $0x8] sm:$0xf]
        %v3772 = vld [vmem:[%s786 + $0xc] sm:$0xf]
        %v3773 = vld [vmem:[%s786 + $0x10] sm:$0xf]
        %v3774 = vld [vmem:[%s786 + $0x14] sm:$0xf]
        %v3775 = vld [vmem:[%s786 + $0x18] sm:$0xf]
        %v3776 = vld [vmem:[%s786 + $0x1c] sm:$0xf]
        %v3777 = vld [vmem:[%s786 + $0x20] sm:$0xf]
        %v3778 = vld [vmem:[%s786 + $0x24] sm:$0xf]
        %v3779 = vld [vmem:[%s786 + $0x28] sm:$0xf]
        %v3780 = vld [vmem:[%s786 + $0x2c] sm:$0xf]
        %v3781 = vld [vmem:[%s786 + $0x30] sm:$0xf]
        %v3782 = vld [vmem:[%s786 + $0x34] sm:$0xf]
        %v3783 = vld [vmem:[%s786 + $0x38] sm:$0xf]
        %v3784 = vld [vmem:[%s786 + $0x3c] sm:$0xf]
        %v3785 = vld [vmem:[%s786 + $0x40] sm:$0xf]
        %v3786 = vld [vmem:[%s786 + $0x44] sm:$0xf]
        %v3787 = vld [vmem:[%s786 + $0x48] sm:$0xf]
        %v3788 = vld [vmem:[%s786 + $0x4c] sm:$0xf]
        %v3789 = vld [vmem:[%s786 + $0x50] sm:$0xf]
        %v3790 = vld [vmem:[%s786 + $0x54] sm:$0xf]
        %v3791 = vld [vmem:[%s786 + $0x58] sm:$0xf]
        %v3792 = vld [vmem:[%s786 + $0x5c] sm:$0xf]
        %v3793 = vld [vmem:[%s786 + $0x60] sm:$0xf]
        %v3794 = vld [vmem:[%s786 + $0x64] sm:$0xf]
        %v3795 = vld [vmem:[%s786 + $0x68] sm:$0xf]
        %v3796 = vld [vmem:[%s786 + $0x6c] sm:$0xf]
        %v3797 = vld [vmem:[%s786 + $0x70] sm:$0xf]
        %v3798 = vld [vmem:[%s786 + $0x74] sm:$0xf]
        %v3799 = vld [vmem:[%s786 + $0x78] sm:$0xf]
        %v3800 = vld [vmem:[%s786 + $0x7c] sm:$0xf]
        %v3801 = vpack.c.bf16 %v3739, %v3737
        %v3802 = vpack.c.bf16 %v3740, %v3738
        %v3803 = vpack.c.bf16 %v3743, %v3741
        %v3804 = vpack.c.bf16 %v3744, %v3742
        %v3805 = vpack.c.bf16 %v3747, %v3745
        %v3806 = vpack.c.bf16 %v3748, %v3746
        %v3807 = vpack.c.bf16 %v3751, %v3749
        %v3808 = vpack.c.bf16 %v3752, %v3750
        %v3809 = vpack.c.bf16 %v3755, %v3753
        %v3810 = vpack.c.bf16 %v3756, %v3754
        %v3811 = vpack.c.bf16 %v3759, %v3757
        %v3812 = vpack.c.bf16 %v3760, %v3758
        %v3813 = vpack.c.bf16 %v3763, %v3761
        %v3814 = vpack.c.bf16 %v3764, %v3762
        %v3815 = vpack.c.bf16 %v3767, %v3765
        %v3816 = vpack.c.bf16 %v3768, %v3766
        %v3817 = vld [vmem:[%s789] sm:$0x1]
        %v3819 = vperm.slane %v3817, 0
        %v3853 = vunpack.c.l.b16 %v3769
        %v3854 = vunpack.c.l.b16 %v3770
        %v3855 = vunpack.c.l.b16 %v3771
        %v3856 = vunpack.c.l.b16 %v3772
        %v3857 = vunpack.c.l.b16 %v3773
        %v3858 = vunpack.c.l.b16 %v3774
        %v3859 = vunpack.c.l.b16 %v3775
        %v3860 = vunpack.c.l.b16 %v3776
        %v3861 = vunpack.c.l.b16 %v3777
        %v3862 = vunpack.c.l.b16 %v3778
        %v3863 = vunpack.c.l.b16 %v3779
        %v3864 = vunpack.c.l.b16 %v3780
        %v3865 = vunpack.c.l.b16 %v3781
        %v3866 = vunpack.c.l.b16 %v3782
        %v3867 = vunpack.c.l.b16 %v3783
        %v3868 = vunpack.c.l.b16 %v3784
        %v3869 = vunpack.c.l.b16 %v3785
        %v3870 = vunpack.c.l.b16 %v3786
        %v3871 = vunpack.c.l.b16 %v3787
        %v3872 = vunpack.c.l.b16 %v3788
        %v3873 = vunpack.c.l.b16 %v3789
        %v3874 = vunpack.c.l.b16 %v3790
        %v3875 = vunpack.c.l.b16 %v3791
        %v3876 = vunpack.c.l.b16 %v3792
        %v3877 = vunpack.c.l.b16 %v3793
        %v3878 = vunpack.c.l.b16 %v3794
        %v3879 = vunpack.c.l.b16 %v3795
        %v3880 = vunpack.c.l.b16 %v3796
        %v3881 = vunpack.c.l.b16 %v3797
        %v3882 = vunpack.c.l.b16 %v3798
        %v3883 = vunpack.c.l.b16 %v3799
        %v3884 = vunpack.c.l.b16 %v3800
        %v3885 = vpack.c.b16 %v3854, %v3853
        %v3886 = vpack.c.b16 %v3856, %v3855
        %v3887 = vpack.c.b16 %v3858, %v3857
        %v3888 = vpack.c.b16 %v3860, %v3859
        %v3889 = vpack.c.b16 %v3862, %v3861
        %v3890 = vpack.c.b16 %v3864, %v3863
        %v3891 = vpack.c.b16 %v3866, %v3865
        %v3892 = vpack.c.b16 %v3868, %v3867
        %v3893 = vpack.c.b16 %v3870, %v3869
        %v3894 = vpack.c.b16 %v3872, %v3871
        %v3895 = vpack.c.b16 %v3874, %v3873
        %v3896 = vpack.c.b16 %v3876, %v3875
        %v3897 = vpack.c.b16 %v3878, %v3877
        %v3898 = vpack.c.b16 %v3880, %v3879
        %v3899 = vpack.c.b16 %v3882, %v3881
        %v3900 = vpack.c.b16 %v3884, %v3883
        %3917 = vmatpush.bf16.msra.mxu0 %v3892
        %3918 = vmatpush.bf16.msra.mxu0 %v3891
        %3919 = vmatpush.bf16.msra.mxu0 %v3890
        %3920 = vmatpush.bf16.msra.mxu0 %v3889
        %3921 = vmatpush.bf16.msra.mxu0 %v3888
        %3922 = vmatpush.bf16.msra.mxu0 %v3887
        %3923 = vmatpush.bf16.msra.mxu0 %v3886
        %3924 = vmatpush.bf16.msra.mxu0 %v3885
        %3925 = vmatmul.bf16.gmra.mxu0 %v3801
        %v3926 = vpop.f32.mrf.mxu0
        %v3927 = vadd.f32 %v3819, %v3926
        %v3928 = vpop.f32.mrf.mxu0
        %v3929 = vadd.f32 %v3819, %v3928
        %3930 = vmatmul.bf16.gmra.mxu0 %v3803
        %v3931 = vpop.f32.mrf.mxu0
        %v3932 = vadd.f32 %v3819, %v3931
        %v3933 = vpop.f32.mrf.mxu0
        %v3934 = vadd.f32 %v3819, %v3933
        %3935 = vmatmul.bf16.gmra.mxu0 %v3805
        %v3936 = vpop.f32.mrf.mxu0
        %v3937 = vadd.f32 %v3819, %v3936
        %v3938 = vpop.f32.mrf.mxu0
        %v3939 = vadd.f32 %v3819, %v3938
        %3940 = vmatmul.bf16.gmra.mxu0 %v3807
        %v3941 = vpop.f32.mrf.mxu0
        %v3942 = vadd.f32 %v3819, %v3941
        %v3943 = vpop.f32.mrf.mxu0
        %v3944 = vadd.f32 %v3819, %v3943
        %3945 = vmatmul.bf16.gmra.mxu0 %v3809
        %v3946 = vpop.f32.mrf.mxu0
        %v3947 = vadd.f32 %v3819, %v3946
        %v3948 = vpop.f32.mrf.mxu0
        %v3949 = vadd.f32 %v3819, %v3948
        %3950 = vmatmul.bf16.gmra.mxu0 %v3811
        %v3951 = vpop.f32.mrf.mxu0
        %v3952 = vadd.f32 %v3819, %v3951
        %v3953 = vpop.f32.mrf.mxu0
        %v3954 = vadd.f32 %v3819, %v3953
        %3955 = vmatmul.bf16.gmra.mxu0 %v3813
        %v3956 = vpop.f32.mrf.mxu0
        %v3957 = vadd.f32 %v3819, %v3956
        %v3958 = vpop.f32.mrf.mxu0
        %v3959 = vadd.f32 %v3819, %v3958
        %3960 = vmatmul.bf16.gmra.mxu0 %v3815
        %v3961 = vpop.f32.mrf.mxu0
        %v3962 = vadd.f32 %v3819, %v3961
        %v3963 = vpop.f32.mrf.mxu0
        %v3964 = vadd.f32 %v3819, %v3963
        %3965 = vdwg.mxu0
        %3966 = vmatpush.bf16.msra.mxu0 %v3900
        %3967 = vmatpush.bf16.msra.mxu0 %v3899
        %3968 = vmatpush.bf16.msra.mxu0 %v3898
        %3969 = vmatpush.bf16.msra.mxu0 %v3897
        %3970 = vmatpush.bf16.msra.mxu0 %v3896
        %3971 = vmatpush.bf16.msra.mxu0 %v3895
        %3972 = vmatpush.bf16.msra.mxu0 %v3894
        %3973 = vmatpush.bf16.msra.mxu0 %v3893
        %3974 = vmatmul.bf16.gmra.mxu0 %v3802
        %v3975 = vpop.f32.mrf.mxu0
        %v3976 = vadd.f32 %v3927, %v3975
        %v3977 = vpop.f32.mrf.mxu0
        %v3978 = vadd.f32 %v3929, %v3977
        %3979 = vmatmul.bf16.gmra.mxu0 %v3804
        %v3980 = vpop.f32.mrf.mxu0
        %v3981 = vadd.f32 %v3932, %v3980
        %v3982 = vpop.f32.mrf.mxu0
        %v3983 = vadd.f32 %v3934, %v3982
        %3984 = vmatmul.bf16.gmra.mxu0 %v3806
        %v3985 = vpop.f32.mrf.mxu0
        %v3986 = vadd.f32 %v3937, %v3985
        %v3987 = vpop.f32.mrf.mxu0
        %v3988 = vadd.f32 %v3939, %v3987
        %3989 = vmatmul.bf16.gmra.mxu0 %v3808
        %v3990 = vpop.f32.mrf.mxu0
        %v3991 = vadd.f32 %v3942, %v3990
        %v3992 = vpop.f32.mrf.mxu0
        %v3993 = vadd.f32 %v3944, %v3992
        %3994 = vmatmul.bf16.gmra.mxu0 %v3810
        %v3995 = vpop.f32.mrf.mxu0
        %v3996 = vadd.f32 %v3947, %v3995
        %v3997 = vpop.f32.mrf.mxu0
        %v3998 = vadd.f32 %v3949, %v3997
        %3999 = vmatmul.bf16.gmra.mxu0 %v3812
        %v4000 = vpop.f32.mrf.mxu0
        %v4001 = vadd.f32 %v3952, %v4000
        %v4002 = vpop.f32.mrf.mxu0
        %v4003 = vadd.f32 %v3954, %v4002
        %4004 = vmatmul.bf16.gmra.mxu0 %v3814
        %v4005 = vpop.f32.mrf.mxu0
        %v4006 = vadd.f32 %v3957, %v4005
        %v4007 = vpop.f32.mrf.mxu0
        %v4008 = vadd.f32 %v3959, %v4007
        %4009 = vmatmul.bf16.gmra.mxu0 %v3816
        %v4010 = vpop.f32.mrf.mxu0
        %v4011 = vadd.f32 %v3962, %v4010
        %v4012 = vpop.f32.mrf.mxu0
        %v4013 = vadd.f32 %v3964, %v4012
        %4014 = vdwg.mxu0
        %v4015 = vadd.f32 %v3976, %v3257
        %v4016 = vadd.f32 %v3978, %v3258
        %v4017 = vadd.f32 %v3981, %v3259
        %v4018 = vadd.f32 %v3983, %v3260
        %v4019 = vadd.f32 %v3986, %v3261
        %v4020 = vadd.f32 %v3988, %v3262
        %v4021 = vadd.f32 %v3991, %v3263
        %v4022 = vadd.f32 %v3993, %v3264
        %v4023 = vadd.f32 %v3996, %v3265
        %v4024 = vadd.f32 %v3998, %v3266
        %v4025 = vadd.f32 %v4001, %v3267
        %v4026 = vadd.f32 %v4003, %v3268
        %v4027 = vadd.f32 %v4006, %v3269
        %v4028 = vadd.f32 %v4008, %v3270
        %v4029 = vadd.f32 %v4011, %v3271
        %v4030 = vadd.f32 %v4013, %v3272
        %v4031 = vld [vmem:[%s792] sm:$0x1]
        %v4032 = vld [vmem:[%s795] sm:$0x1]
        %4033 = vadd.xlane.f32.xlu0 %v4015
        %v4034 = vpop.xlane.xlu0 %4033
        %4035 = vadd.xlane.f32.xlu0 %v4016
        %v4036 = vpop.xlane.xlu0 %4035
        %4037 = vadd.xlane.f32.xlu0 %v4017
        %v4038 = vpop.xlane.xlu0 %4037
        %4039 = vadd.xlane.f32.xlu0 %v4018
        %v4040 = vpop.xlane.xlu0 %4039
        %4041 = vadd.xlane.f32.xlu0 %v4019
        %v4042 = vpop.xlane.xlu0 %4041
        %4043 = vadd.xlane.f32.xlu0 %v4020
        %v4044 = vpop.xlane.xlu0 %4043
        %4045 = vadd.xlane.f32.xlu0 %v4021
        %v4046 = vpop.xlane.xlu0 %4045
        %4047 = vadd.xlane.f32.xlu0 %v4022
        %v4048 = vpop.xlane.xlu0 %4047
        %4049 = vadd.xlane.f32.xlu0 %v4023
        %v4050 = vpop.xlane.xlu0 %4049
        %4051 = vadd.xlane.f32.xlu0 %v4024
        %v4052 = vpop.xlane.xlu0 %4051
        %4053 = vadd.xlane.f32.xlu0 %v4025
        %v4054 = vpop.xlane.xlu0 %4053
        %4055 = vadd.xlane.f32.xlu0 %v4026
        %v4056 = vpop.xlane.xlu0 %4055
        %4057 = vadd.xlane.f32.xlu0 %v4027
        %v4058 = vpop.xlane.xlu0 %4057
        %4059 = vadd.xlane.f32.xlu0 %v4028
        %v4060 = vpop.xlane.xlu0 %4059
        %4061 = vadd.xlane.f32.xlu0 %v4029
        %v4062 = vpop.xlane.xlu0 %4061
        %4063 = vadd.xlane.f32.xlu0 %v4030
        %v4064 = vpop.xlane.xlu0 %4063
        %v4065 = vmul.f32 %v4034, %v2946
        %v4066 = vmul.f32 %v4036, %v2946
        %v4067 = vmul.f32 %v4038, %v2946
        %v4068 = vmul.f32 %v4040, %v2946
        %v4069 = vmul.f32 %v4042, %v2946
        %v4070 = vmul.f32 %v4044, %v2946
        %v4071 = vmul.f32 %v4046, %v2946
        %v4072 = vmul.f32 %v4048, %v2946
        %v4073 = vmul.f32 %v4050, %v2946
        %v4074 = vmul.f32 %v4052, %v2946
        %v4075 = vmul.f32 %v4054, %v2946
        %v4076 = vmul.f32 %v4056, %v2946
        %v4077 = vmul.f32 %v4058, %v2946
        %v4078 = vmul.f32 %v4060, %v2946
        %v4079 = vmul.f32 %v4062, %v2946
        %v4080 = vmul.f32 %v4064, %v2946
        %v4081 = vsub.f32 %v4015, %v4065
        %v4082 = vsub.f32 %v4016, %v4066
        %v4083 = vsub.f32 %v4017, %v4067
        %v4084 = vsub.f32 %v4018, %v4068
        %v4085 = vsub.f32 %v4019, %v4069
        %v4086 = vsub.f32 %v4020, %v4070
        %v4087 = vsub.f32 %v4021, %v4071
        %v4088 = vsub.f32 %v4022, %v4072
        %v4089 = vsub.f32 %v4023, %v4073
        %v4090 = vsub.f32 %v4024, %v4074
        %v4091 = vsub.f32 %v4025, %v4075
        %v4092 = vsub.f32 %v4026, %v4076
        %v4093 = vsub.f32 %v4027, %v4077
        %v4094 = vsub.f32 %v4028, %v4078
        %v4095 = vsub.f32 %v4029, %v4079
        %v4096 = vsub.f32 %v4030, %v4080
        %v4097 = vmul.f32 %v4081, %v4081
        %v4098 = vmul.f32 %v4082, %v4082
        %v4099 = vmul.f32 %v4083, %v4083
        %v4100 = vmul.f32 %v4084, %v4084
        %v4101 = vmul.f32 %v4085, %v4085
        %v4102 = vmul.f32 %v4086, %v4086
        %v4103 = vmul.f32 %v4087, %v4087
        %v4104 = vmul.f32 %v4088, %v4088
        %v4105 = vmul.f32 %v4089, %v4089
        %v4106 = vmul.f32 %v4090, %v4090
        %v4107 = vmul.f32 %v4091, %v4091
        %v4108 = vmul.f32 %v4092, %v4092
        %v4109 = vmul.f32 %v4093, %v4093
        %v4110 = vmul.f32 %v4094, %v4094
        %v4111 = vmul.f32 %v4095, %v4095
        %v4112 = vmul.f32 %v4096, %v4096
        %4113 = vadd.xlane.f32.xlu0 %v4097
        %v4114 = vpop.xlane.xlu0 %4113
        %4115 = vadd.xlane.f32.xlu0 %v4098
        %v4116 = vpop.xlane.xlu0 %4115
        %4117 = vadd.xlane.f32.xlu0 %v4099
        %v4118 = vpop.xlane.xlu0 %4117
        %4119 = vadd.xlane.f32.xlu0 %v4100
        %v4120 = vpop.xlane.xlu0 %4119
        %4121 = vadd.xlane.f32.xlu0 %v4101
        %v4122 = vpop.xlane.xlu0 %4121
        %4123 = vadd.xlane.f32.xlu0 %v4102
        %v4124 = vpop.xlane.xlu0 %4123
        %4125 = vadd.xlane.f32.xlu0 %v4103
        %v4126 = vpop.xlane.xlu0 %4125
        %4127 = vadd.xlane.f32.xlu0 %v4104
        %v4128 = vpop.xlane.xlu0 %4127
        %4129 = vadd.xlane.f32.xlu0 %v4105
        %v4130 = vpop.xlane.xlu0 %4129
        %4131 = vadd.xlane.f32.xlu0 %v4106
        %v4132 = vpop.xlane.xlu0 %4131
        %4133 = vadd.xlane.f32.xlu0 %v4107
        %v4134 = vpop.xlane.xlu0 %4133
        %4135 = vadd.xlane.f32.xlu0 %v4108
        %v4136 = vpop.xlane.xlu0 %4135
        %4137 = vadd.xlane.f32.xlu0 %v4109
        %v4138 = vpop.xlane.xlu0 %4137
        %4139 = vadd.xlane.f32.xlu0 %v4110
        %v4140 = vpop.xlane.xlu0 %4139
        %4141 = vadd.xlane.f32.xlu0 %v4111
        %v4142 = vpop.xlane.xlu0 %4141
        %4143 = vadd.xlane.f32.xlu0 %v4112
        %v4144 = vpop.xlane.xlu0 %4143
        %v4145 = vmul.f32 %v4114, %v2946
        %v4146 = vmul.f32 %v4116, %v2946
        %v4147 = vmul.f32 %v4118, %v2946
        %v4148 = vmul.f32 %v4120, %v2946
        %v4149 = vmul.f32 %v4122, %v2946
        %v4150 = vmul.f32 %v4124, %v2946
        %v4151 = vmul.f32 %v4126, %v2946
        %v4152 = vmul.f32 %v4128, %v2946
        %v4153 = vmul.f32 %v4130, %v2946
        %v4154 = vmul.f32 %v4132, %v2946
        %v4155 = vmul.f32 %v4134, %v2946
        %v4156 = vmul.f32 %v4136, %v2946
        %v4157 = vmul.f32 %v4138, %v2946
        %v4158 = vmul.f32 %v4140, %v2946
        %v4159 = vmul.f32 %v4142, %v2946
        %v4160 = vmul.f32 %v4144, %v2946
        %v4161 = vadd.f32 %v4145, 1e-12
        %v4162 = vadd.f32 %v4146, 1e-12
        %v4163 = vadd.f32 %v4147, 1e-12
        %v4164 = vadd.f32 %v4148, 1e-12
        %v4165 = vadd.f32 %v4149, 1e-12
        %v4166 = vadd.f32 %v4150, 1e-12
        %v4167 = vadd.f32 %v4151, 1e-12
        %v4168 = vadd.f32 %v4152, 1e-12
        %v4169 = vadd.f32 %v4153, 1e-12
        %v4170 = vadd.f32 %v4154, 1e-12
        %v4171 = vadd.f32 %v4155, 1e-12
        %v4172 = vadd.f32 %v4156, 1e-12
        %v4173 = vadd.f32 %v4157, 1e-12
        %v4174 = vadd.f32 %v4158, 1e-12
        %v4175 = vadd.f32 %v4159, 1e-12
        %v4176 = vadd.f32 %v4160, 1e-12
        %v4177 = vrsqrt.pop %v4161
        %v4178 = vmul.f32 %v4177, %v4161
        %v4179 = vmul.f32 %v4178, %v4177
        %v4180 = vmul.f32 0.5, %v4179
        %v4181 = vsub.f32 1.5, %v4180
        %v4182 = vmul.f32 %v4177, %v4181
        %vm4183 = vweird.f32 %v4161
        %vm4184 = vweird.f32 %v4177
        %vm4185 = vmor %vm4183, %vm4184
        %v4186 = vsel %vm4185, %v4177, %v4182
        %v4187 = vrsqrt.pop %v4162
        %v4188 = vmul.f32 %v4187, %v4162
        %v4189 = vmul.f32 %v4188, %v4187
        %v4190 = vmul.f32 0.5, %v4189
        %v4191 = vsub.f32 1.5, %v4190
        %v4192 = vmul.f32 %v4187, %v4191
        %vm4193 = vweird.f32 %v4162
        %vm4194 = vweird.f32 %v4187
        %vm4195 = vmor %vm4193, %vm4194
        %v4196 = vsel %vm4195, %v4187, %v4192
        %v4197 = vrsqrt.pop %v4163
        %v4198 = vmul.f32 %v4197, %v4163
        %v4199 = vmul.f32 %v4198, %v4197
        %v4200 = vmul.f32 0.5, %v4199
        %v4201 = vsub.f32 1.5, %v4200
        %v4202 = vmul.f32 %v4197, %v4201
        %vm4203 = vweird.f32 %v4163
        %vm4204 = vweird.f32 %v4197
        %vm4205 = vmor %vm4203, %vm4204
        %v4206 = vsel %vm4205, %v4197, %v4202
        %v4207 = vrsqrt.pop %v4164
        %v4208 = vmul.f32 %v4207, %v4164
        %v4209 = vmul.f32 %v4208, %v4207
        %v4210 = vmul.f32 0.5, %v4209
        %v4211 = vsub.f32 1.5, %v4210
        %v4212 = vmul.f32 %v4207, %v4211
        %vm4213 = vweird.f32 %v4164
        %vm4214 = vweird.f32 %v4207
        %vm4215 = vmor %vm4213, %vm4214
        %v4216 = vsel %vm4215, %v4207, %v4212
        %v4217 = vrsqrt.pop %v4165
        %v4218 = vmul.f32 %v4217, %v4165
        %v4219 = vmul.f32 %v4218, %v4217
        %v4220 = vmul.f32 0.5, %v4219
        %v4221 = vsub.f32 1.5, %v4220
        %v4222 = vmul.f32 %v4217, %v4221
        %vm4223 = vweird.f32 %v4165
        %vm4224 = vweird.f32 %v4217
        %vm4225 = vmor %vm4223, %vm4224
        %v4226 = vsel %vm4225, %v4217, %v4222
        %v4227 = vrsqrt.pop %v4166
        %v4228 = vmul.f32 %v4227, %v4166
        %v4229 = vmul.f32 %v4228, %v4227
        %v4230 = vmul.f32 0.5, %v4229
        %v4231 = vsub.f32 1.5, %v4230
        %v4232 = vmul.f32 %v4227, %v4231
        %vm4233 = vweird.f32 %v4166
        %vm4234 = vweird.f32 %v4227
        %vm4235 = vmor %vm4233, %vm4234
        %v4236 = vsel %vm4235, %v4227, %v4232
        %v4237 = vrsqrt.pop %v4167
        %v4238 = vmul.f32 %v4237, %v4167
        %v4239 = vmul.f32 %v4238, %v4237
        %v4240 = vmul.f32 0.5, %v4239
        %v4241 = vsub.f32 1.5, %v4240
        %v4242 = vmul.f32 %v4237, %v4241
        %vm4243 = vweird.f32 %v4167
        %vm4244 = vweird.f32 %v4237
        %vm4245 = vmor %vm4243, %vm4244
        %v4246 = vsel %vm4245, %v4237, %v4242
        %v4247 = vrsqrt.pop %v4168
        %v4248 = vmul.f32 %v4247, %v4168
        %v4249 = vmul.f32 %v4248, %v4247
        %v4250 = vmul.f32 0.5, %v4249
        %v4251 = vsub.f32 1.5, %v4250
        %v4252 = vmul.f32 %v4247, %v4251
        %vm4253 = vweird.f32 %v4168
        %vm4254 = vweird.f32 %v4247
        %vm4255 = vmor %vm4253, %vm4254
        %v4256 = vsel %vm4255, %v4247, %v4252
        %v4257 = vrsqrt.pop %v4169
        %v4258 = vmul.f32 %v4257, %v4169
        %v4259 = vmul.f32 %v4258, %v4257
        %v4260 = vmul.f32 0.5, %v4259
        %v4261 = vsub.f32 1.5, %v4260
        %v4262 = vmul.f32 %v4257, %v4261
        %vm4263 = vweird.f32 %v4169
        %vm4264 = vweird.f32 %v4257
        %vm4265 = vmor %vm4263, %vm4264
        %v4266 = vsel %vm4265, %v4257, %v4262
        %v4267 = vrsqrt.pop %v4170
        %v4268 = vmul.f32 %v4267, %v4170
        %v4269 = vmul.f32 %v4268, %v4267
        %v4270 = vmul.f32 0.5, %v4269
        %v4271 = vsub.f32 1.5, %v4270
        %v4272 = vmul.f32 %v4267, %v4271
        %vm4273 = vweird.f32 %v4170
        %vm4274 = vweird.f32 %v4267
        %vm4275 = vmor %vm4273, %vm4274
        %v4276 = vsel %vm4275, %v4267, %v4272
        %v4277 = vrsqrt.pop %v4171
        %v4278 = vmul.f32 %v4277, %v4171
        %v4279 = vmul.f32 %v4278, %v4277
        %v4280 = vmul.f32 0.5, %v4279
        %v4281 = vsub.f32 1.5, %v4280
        %v4282 = vmul.f32 %v4277, %v4281
        %vm4283 = vweird.f32 %v4171
        %vm4284 = vweird.f32 %v4277
        %vm4285 = vmor %vm4283, %vm4284
        %v4286 = vsel %vm4285, %v4277, %v4282
        %v4287 = vrsqrt.pop %v4172
        %v4288 = vmul.f32 %v4287, %v4172
        %v4289 = vmul.f32 %v4288, %v4287
        %v4290 = vmul.f32 0.5, %v4289
        %v4291 = vsub.f32 1.5, %v4290
        %v4292 = vmul.f32 %v4287, %v4291
        %vm4293 = vweird.f32 %v4172
        %vm4294 = vweird.f32 %v4287
        %vm4295 = vmor %vm4293, %vm4294
        %v4296 = vsel %vm4295, %v4287, %v4292
        %v4297 = vrsqrt.pop %v4173
        %v4298 = vmul.f32 %v4297, %v4173
        %v4299 = vmul.f32 %v4298, %v4297
        %v4300 = vmul.f32 0.5, %v4299
        %v4301 = vsub.f32 1.5, %v4300
        %v4302 = vmul.f32 %v4297, %v4301
        %vm4303 = vweird.f32 %v4173
        %vm4304 = vweird.f32 %v4297
        %vm4305 = vmor %vm4303, %vm4304
        %v4306 = vsel %vm4305, %v4297, %v4302
        %v4307 = vrsqrt.pop %v4174
        %v4308 = vmul.f32 %v4307, %v4174
        %v4309 = vmul.f32 %v4308, %v4307
        %v4310 = vmul.f32 0.5, %v4309
        %v4311 = vsub.f32 1.5, %v4310
        %v4312 = vmul.f32 %v4307, %v4311
        %vm4313 = vweird.f32 %v4174
        %vm4314 = vweird.f32 %v4307
        %vm4315 = vmor %vm4313, %vm4314
        %v4316 = vsel %vm4315, %v4307, %v4312
        %v4317 = vrsqrt.pop %v4175
        %v4318 = vmul.f32 %v4317, %v4175
        %v4319 = vmul.f32 %v4318, %v4317
        %v4320 = vmul.f32 0.5, %v4319
        %v4321 = vsub.f32 1.5, %v4320
        %v4322 = vmul.f32 %v4317, %v4321
        %vm4323 = vweird.f32 %v4175
        %vm4324 = vweird.f32 %v4317
        %vm4325 = vmor %vm4323, %vm4324
        %v4326 = vsel %vm4325, %v4317, %v4322
        %v4327 = vrsqrt.pop %v4176
        %v4328 = vmul.f32 %v4327, %v4176
        %v4329 = vmul.f32 %v4328, %v4327
        %v4330 = vmul.f32 0.5, %v4329
        %v4331 = vsub.f32 1.5, %v4330
        %v4332 = vmul.f32 %v4327, %v4331
        %vm4333 = vweird.f32 %v4176
        %vm4334 = vweird.f32 %v4327
        %vm4335 = vmor %vm4333, %vm4334
        %v4336 = vsel %vm4335, %v4327, %v4332
        %v4337 = vmul.f32 %v4081, %v4186
        %v4338 = vmul.f32 %v4082, %v4196
        %v4339 = vmul.f32 %v4083, %v4206
        %v4340 = vmul.f32 %v4084, %v4216
        %v4341 = vmul.f32 %v4085, %v4226
        %v4342 = vmul.f32 %v4086, %v4236
        %v4343 = vmul.f32 %v4087, %v4246
        %v4344 = vmul.f32 %v4088, %v4256
        %v4345 = vmul.f32 %v4089, %v4266
        %v4346 = vmul.f32 %v4090, %v4276
        %v4347 = vmul.f32 %v4091, %v4286
        %v4348 = vmul.f32 %v4092, %v4296
        %v4349 = vmul.f32 %v4093, %v4306
        %v4350 = vmul.f32 %v4094, %v4316
        %v4351 = vmul.f32 %v4095, %v4326
        %v4352 = vmul.f32 %v4096, %v4336
        %v4354 = vperm.slane %v4031, 0
        %v4356 = vmul.f32 %v4337, %v4354
        %v4357 = vmul.f32 %v4338, %v4354
        %v4358 = vmul.f32 %v4339, %v4354
        %v4359 = vmul.f32 %v4340, %v4354
        %v4360 = vmul.f32 %v4341, %v4354
        %v4361 = vmul.f32 %v4342, %v4354
        %v4362 = vmul.f32 %v4343, %v4354
        %v4363 = vmul.f32 %v4344, %v4354
        %v4364 = vmul.f32 %v4345, %v4354
        %v4365 = vmul.f32 %v4346, %v4354
        %v4366 = vmul.f32 %v4347, %v4354
        %v4367 = vmul.f32 %v4348, %v4354
        %v4368 = vmul.f32 %v4349, %v4354
        %v4369 = vmul.f32 %v4350, %v4354
        %v4370 = vmul.f32 %v4351, %v4354
        %v4371 = vmul.f32 %v4352, %v4354
        %v4373 = vperm.slane %v4032, 0
        %v4375 = vadd.f32 %v4356, %v4373
        %v4376 = vadd.f32 %v4357, %v4373
        %v4377 = vadd.f32 %v4358, %v4373
        %v4378 = vadd.f32 %v4359, %v4373
        %v4379 = vadd.f32 %v4360, %v4373
        %v4380 = vadd.f32 %v4361, %v4373
        %v4381 = vadd.f32 %v4362, %v4373
        %v4382 = vadd.f32 %v4363, %v4373
        %v4383 = vadd.f32 %v4364, %v4373
        %v4384 = vadd.f32 %v4365, %v4373
        %v4385 = vadd.f32 %v4366, %v4373
        %v4386 = vadd.f32 %v4367, %v4373
        %v4387 = vadd.f32 %v4368, %v4373
        %v4388 = vadd.f32 %v4369, %v4373
        %v4389 = vadd.f32 %v4370, %v4373
        %v4390 = vadd.f32 %v4371, %v4373
        %p4391 = scmp.lt.s32.totalorder %s35, 1
        // Predicated region
        $region97: #{finbert_forward.1} parent=91 // pred_check
          %p4392 = pneg %p4391
        $region98: #{finbert_forward.1} parent=91 // pred_check_branch
          %4394 = sbr.rel (%p4392) target = $region100
        $region99: #{finbert_forward.1} parent=91 // pred_region
          %4395 = vst [vmem:[#allocation2] sm:$0xff] %v4375
          %4396 = vst [vmem:[#allocation2 + $0x8] sm:$0xff] %v4376
          %4397 = vst [vmem:[#allocation2 + $0x10] sm:$0xff] %v4377
          %4398 = vst [vmem:[#allocation2 + $0x18] sm:$0xff] %v4378
          %4399 = vst [vmem:[#allocation2 + $0x20] sm:$0xff] %v4379
          %4400 = vst [vmem:[#allocation2 + $0x28] sm:$0xff] %v4380
          %4401 = vst [vmem:[#allocation2 + $0x30] sm:$0xff] %v4381
          %4402 = vst [vmem:[#allocation2 + $0x38] sm:$0xff] %v4382
          %4403 = vst [vmem:[#allocation2 + $0x40] sm:$0xff] %v4383
          %4404 = vst [vmem:[#allocation2 + $0x48] sm:$0xff] %v4384
          %4405 = vst [vmem:[#allocation2 + $0x50] sm:$0xff] %v4385
          %4406 = vst [vmem:[#allocation2 + $0x58] sm:$0xff] %v4386
          %4407 = vst [vmem:[#allocation2 + $0x60] sm:$0xff] %v4387
          %4408 = vst [vmem:[#allocation2 + $0x68] sm:$0xff] %v4388
          %4409 = vst [vmem:[#allocation2 + $0x70] sm:$0xff] %v4389
          %4410 = vst [vmem:[#allocation2 + $0x78] sm:$0xff] %v4390
        $region100: #{finbert_forward.1} parent=91 // pred_fallthru
          _
        %p4411 = scmp.eq.s32.totalorder %s35, 1
        // Predicated region
        $region101: #{finbert_forward.1} parent=91 // pred_check
          %p4412 = pneg %p4411
        $region102: #{finbert_forward.1} parent=91 // pred_check_branch
          %4414 = sbr.rel (%p4412) target = $region104
        $region103: #{finbert_forward.1} parent=91 // pred_region
          %v4415 = vld [vmem:[%s749] sm:$0x3]
          %v4416 = vperm.slane %v4415, 0
          %v4417 = vlaneseq
          %v4418 = vshrl.u32 %v4417, 7
          %4420 = vset.pattern.permute.xlu0 %v4418
          %4421 = vperm.xlu0 %4420, %v4416
          %v4422 = vpop.permute.xlu0 %4421
          %v4423 = vlaneseq
          %v4424 = vshrl.u32 %v4423, 7
          %v4425 = vadd.s32 %v4424, 8
          %4426 = vset.pattern.permute.xlu0 %v4425
          %4427 = vperm.xlu0 %4426, %v4416
          %v4428 = vpop.permute.xlu0 %4427
          %v4429 = vlaneseq
          %v4430 = vshrl.u32 %v4429, 7
          %v4431 = vadd.s32 %v4430, 16
          %4432 = vset.pattern.permute.xlu0 %v4431
          %4433 = vperm.xlu0 %4432, %v4416
          %v4434 = vpop.permute.xlu0 %4433
          %v4435 = vlaneseq
          %v4436 = vshrl.u32 %v4435, 7
          %v4437 = vadd.s32 %v4436, 24
          %4438 = vset.pattern.permute.xlu0 %v4437
          %4439 = vperm.xlu0 %4438, %v4416
          %v4440 = vpop.permute.xlu0 %4439
          %v4441 = vlaneseq
          %v4442 = vshrl.u32 %v4441, 7
          %v4443 = vadd.s32 %v4442, 32
          %4444 = vset.pattern.permute.xlu0 %v4443
          %4445 = vperm.xlu0 %4444, %v4416
          %v4446 = vpop.permute.xlu0 %4445
          %v4447 = vlaneseq
          %v4448 = vshrl.u32 %v4447, 7
          %v4449 = vadd.s32 %v4448, 40
          %4450 = vset.pattern.permute.xlu0 %v4449
          %4451 = vperm.xlu0 %4450, %v4416
          %v4452 = vpop.permute.xlu0 %4451
          %v4453 = vlaneseq
          %v4454 = vshrl.u32 %v4453, 7
          %v4455 = vadd.s32 %v4454, 48
          %4456 = vset.pattern.permute.xlu0 %v4455
          %4457 = vperm.xlu0 %4456, %v4416
          %v4458 = vpop.permute.xlu0 %4457
          %v4459 = vlaneseq
          %v4460 = vshrl.u32 %v4459, 7
          %v4461 = vadd.s32 %v4460, 56
          %4462 = vset.pattern.permute.xlu0 %v4461
          %4463 = vperm.xlu0 %4462, %v4416
          %v4464 = vpop.permute.xlu0 %4463
          %v4465 = vperm.slane %v4415, 1
          %v4466 = vlaneseq
          %v4467 = vshrl.u32 %v4466, 7
          %4469 = vset.pattern.permute.xlu0 %v4467
          %4470 = vperm.xlu0 %4469, %v4465
          %v4471 = vpop.permute.xlu0 %4470
          %v4472 = vlaneseq
          %v4473 = vshrl.u32 %v4472, 7
          %v4474 = vadd.s32 %v4473, 8
          %4475 = vset.pattern.permute.xlu0 %v4474
          %4476 = vperm.xlu0 %4475, %v4465
          %v4477 = vpop.permute.xlu0 %4476
          %v4478 = vlaneseq
          %v4479 = vshrl.u32 %v4478, 7
          %v4480 = vadd.s32 %v4479, 16
          %4481 = vset.pattern.permute.xlu0 %v4480
          %4482 = vperm.xlu0 %4481, %v4465
          %v4483 = vpop.permute.xlu0 %4482
          %v4484 = vlaneseq
          %v4485 = vshrl.u32 %v4484, 7
          %v4486 = vadd.s32 %v4485, 24
          %4487 = vset.pattern.permute.xlu0 %v4486
          %4488 = vperm.xlu0 %4487, %v4465
          %v4489 = vpop.permute.xlu0 %4488
          %v4490 = vlaneseq
          %v4491 = vshrl.u32 %v4490, 7
          %v4492 = vadd.s32 %v4491, 32
          %4493 = vset.pattern.permute.xlu0 %v4492
          %4494 = vperm.xlu0 %4493, %v4465
          %v4495 = vpop.permute.xlu0 %4494
          %v4496 = vlaneseq
          %v4497 = vshrl.u32 %v4496, 7
          %v4498 = vadd.s32 %v4497, 40
          %4499 = vset.pattern.permute.xlu0 %v4498
          %4500 = vperm.xlu0 %4499, %v4465
          %v4501 = vpop.permute.xlu0 %4500
          %v4502 = vlaneseq
          %v4503 = vshrl.u32 %v4502, 7
          %v4504 = vadd.s32 %v4503, 48
          %4505 = vset.pattern.permute.xlu0 %v4504
          %4506 = vperm.xlu0 %4505, %v4465
          %v4507 = vpop.permute.xlu0 %4506
          %v4508 = vlaneseq
          %v4509 = vshrl.u32 %v4508, 7
          %v4510 = vadd.s32 %v4509, 56
          %4511 = vset.pattern.permute.xlu0 %v4510
          %4512 = vperm.xlu0 %4511, %v4465
          %v4513 = vpop.permute.xlu0 %4512
          %v4514 = vmul.f32 %v4375, %v4422
          %v4515 = vmul.f32 %v4376, %v4428
          %v4516 = vmul.f32 %v4377, %v4434
          %v4517 = vmul.f32 %v4378, %v4440
          %v4518 = vmul.f32 %v4379, %v4446
          %v4519 = vmul.f32 %v4380, %v4452
          %v4520 = vmul.f32 %v4381, %v4458
          %v4521 = vmul.f32 %v4382, %v4464
          %v4522 = vmul.f32 %v4383, %v4471
          %v4523 = vmul.f32 %v4384, %v4477
          %v4524 = vmul.f32 %v4385, %v4483
          %v4525 = vmul.f32 %v4386, %v4489
          %v4526 = vmul.f32 %v4387, %v4495
          %v4527 = vmul.f32 %v4388, %v4501
          %v4528 = vmul.f32 %v4389, %v4507
          %v4529 = vmul.f32 %v4390, %v4513
          %v4530 = vadd.f32 %v4514, %v4515
          %v4531 = vadd.f32 %v4530, %v4516
          %v4532 = vadd.f32 %v4531, %v4517
          %v4533 = vadd.f32 %v4532, %v4518
          %v4534 = vadd.f32 %v4533, %v4519
          %v4535 = vadd.f32 %v4534, %v4520
          %v4536 = vadd.f32 %v4535, %v4521
          %v4537 = vrot.slane %v4536, 4
          %v4538 = vadd.f32 %v4536, %v4537
          %v4539 = vrot.slane %v4538, 2
          %v4540 = vadd.f32 %v4538, %v4539
          %v4541 = vrot.slane %v4540, 1
          %v4542 = vadd.f32 %v4540, %v4541
          %v4543 = vadd.f32 %v4522, %v4523
          %v4544 = vadd.f32 %v4543, %v4524
          %v4545 = vadd.f32 %v4544, %v4525
          %v4546 = vadd.f32 %v4545, %v4526
          %v4547 = vadd.f32 %v4546, %v4527
          %v4548 = vadd.f32 %v4547, %v4528
          %v4549 = vadd.f32 %v4548, %v4529
          %v4550 = vrot.slane %v4549, 4
          %v4551 = vadd.f32 %v4549, %v4550
          %v4552 = vrot.slane %v4551, 2
          %v4553 = vadd.f32 %v4551, %v4552
          %v4554 = vrot.slane %v4553, 1
          %v4555 = vadd.f32 %v4553, %v4554
          %vm4556 = vcmask 517120
          %v4557 = vsel %vm4556, %v4415, 0.0
          %4558 = vadd.xlane.f32.xlu0 %v4557
          %v4559 = vpop.xlane.xlu0 %4558
          %v4560 = vmax.f32 %v4559, 1.0
          %v4561 = vrcp.pop %v4560
          %v4563 = vrot.slane %v4561, 1
          %v4566 = vmul.f32 %v4542, %v4561
          %v4567 = vmul.f32 %v4555, %v4563
          %v4568 = vld [vmem:[%s16] sm:$0xff]
          %v4569 = vld [vmem:[%s16 + $0x8] sm:$0xff]
          %v4570 = vld [vmem:[%s16 + $0x10] sm:$0xff]
          %v4571 = vld [vmem:[%s16 + $0x18] sm:$0xff]
          %v4572 = vld [vmem:[%s16 + $0x20] sm:$0xff]
          %v4573 = vld [vmem:[%s16 + $0x28] sm:$0xff]
          %v4574 = vld [vmem:[%s16 + $0x30] sm:$0xff]
          %v4575 = vld [vmem:[%s16 + $0x38] sm:$0xff]
          %v4576 = vld [vmem:[%s16 + $0x40] sm:$0xff]
          %v4577 = vld [vmem:[%s16 + $0x48] sm:$0xff]
          %v4578 = vld [vmem:[%s16 + $0x50] sm:$0xff]
          %v4579 = vld [vmem:[%s16 + $0x58] sm:$0xff]
          %v4580 = vld [vmem:[%s16 + $0x60] sm:$0xff]
          %v4581 = vld [vmem:[%s16 + $0x68] sm:$0xff]
          %v4582 = vld [vmem:[%s16 + $0x70] sm:$0xff]
          %v4583 = vld [vmem:[%s16 + $0x78] sm:$0xff]
          %v4584 = vld [vmem:[%s17] sm:$0x1]
          %v4586 = vperm.slane %v4584, 0
          %v4590 = vrot.slane %v4567, 7
          %vm4591 = vcmask 1041409
          %v4592 = vsel %vm4591, %v4590, %v4566
          %4594 = vmatpush.msra.mxu0 %v4583
          %4595 = vmatpush.msra.mxu0 %v4582
          %4596 = vmatpush.msra.mxu0 %v4581
          %4597 = vmatpush.msra.mxu0 %v4580
          %4598 = vmatpush.msra.mxu0 %v4579
          %4599 = vmatpush.msra.mxu0 %v4578
          %4600 = vmatpush.msra.mxu0 %v4577
          %4601 = vmatpush.msra.mxu0 %v4576
          %4602 = vmatpush.msra.mxu0 %v4575
          %4603 = vmatpush.msra.mxu0 %v4574
          %4604 = vmatpush.msra.mxu0 %v4573
          %4605 = vmatpush.msra.mxu0 %v4572
          %4606 = vmatpush.msra.mxu0 %v4571
          %4607 = vmatpush.msra.mxu0 %v4570
          %4608 = vmatpush.msra.mxu0 %v4569
          %4609 = vmatpush.msra.mxu0 %v4568
          %4610 = vmatmul.f32.gmra.mxu0 %v4592
          %v4611 = vpop.f32.mrf.mxu0
          %v4612 = vadd.f32 %v4586, %v4611
          %4613 = vdwg.mxu0
          %4614 = vst [vmem:[#allocation3] sm:$0x3] %v4612
        $region104: #{finbert_forward.1} parent=91 // pred_fallthru
          _
        // Predicated region
        $region105: #{finbert_forward.1} parent=91 // pred_check
          %p4615 = pneg %p508
        $region106: #{finbert_forward.1} parent=91 // pred_check_branch
          %4617 = sbr.rel (%p4615) target = $region108
        $region107: #{finbert_forward.1} parent=91 // pred_region
          %4619 = vsyncadd [#allocation4], 0
          %s4620 = smul.addr %s34, 2
          %s4621 = scalar_lea.hbm %s18, %s4620
          %s4623 = sshll.u32 [#allocation3], 4
          %s4624 = int_to_ptr.vmem [resolvable:$true] %s4623
          %s4625 = sshll.u32 %s4621, 4
          %s4626 = int_to_ptr.hbm [resolvable:$true] %s4625
          %4628 = dma.vmem_to_hbm [thread:$0]  %s4624, 32, %s4626, [#allocation4]
        $region108: #{finbert_forward.1} parent=91 // pred_fallthru
          _
        // Predicated region
        $region109: #{finbert_forward.1} parent=91 // pred_check
          %p4629 = pneg %p508
        $region110: #{finbert_forward.1} parent=91 // pred_check_branch
          %4631 = sbr.rel (%p4629) target = $region112
        $region111: #{finbert_forward.1} parent=91 // pred_region
          %4633 = dma.done [#allocation4], 32
        $region112: #{finbert_forward.1} parent=91 // pred_fallthru
          _
      $region92: #{finbert_forward.1} parent=5 // pred_fallthru
        _
      %p4634 = scmp.le.s32.totalorder 2, %s25
      // Predicated region
      $region113: #{finbert_forward.1} parent=5 // pred_check
        %p4635 = pneg %p4634
      $region114: #{finbert_forward.1} parent=5 // pred_check_branch
        %4637 = sbr.rel (%p4635) target = $region116
      $region115: #{finbert_forward.1} parent=5 // pred_region
        %s4638 = ssub.s32 %s25, 2
      $region116: #{finbert_forward.1} parent=5 // pred_fallthru
        _
    $region6: #{finbert_forward.1} parent=1 // loop_footer
      %s29 = sadd.s32 1, %s25
    $region7: #{finbert_forward.1} parent=1 // loop_footer_branch
      %24 = sbr.rel target = $region3
    $region8: #{finbert_forward.1} parent=1 // loop_exit
      _
    %4639 = vsyncpa [#allocation4], 1
    %s4640 = scalar_lea.sflag [#allocation4], 1
    %4641 = vsyncpa %s4640, 1

</llo_original>
